<compile_context>
chip_gen: v7x
topology: tpu7x:2x2x1
jax: 0.10.0
libtpu: 0.0.40
codegen_flags: <defaults>
</compile_context>

<pallas_src>
import functools

import jax
import jax.numpy as jnp
from jax.experimental import pallas as pl
from jax.experimental.pallas import tpu as pltpu

_LANE = 128
_SUBLANE = 8


# ----------------------------------------------------------------------------
# Single fused kernel: num_layers x LSTM  ->  Linear  ->  Softmax(dim=0)
# One grid step processes one independent batch tile of Bt rows.
# ----------------------------------------------------------------------------
def _fused_rnn_kernel(num_layers, Hp, T, Bt, *refs):
    x_ref = refs[0]                                   # (T*Bt, I)
    layer_refs = refs[1:1 + 3 * num_layers]           # (w_ih, w_hh, b) / layer
    fc_w_ref = refs[1 + 3 * num_layers]               # (Hp, Cp)
    fc_b_ref = refs[2 + 3 * num_layers]               # (1, Cp)
    out_ref = refs[3 + 3 * num_layers]                # (T, Bt, Cp)
    seq_scr = refs[4 + 3 * num_layers]                # VMEM (T*Bt, Hp)
    xg_scr = refs[5 + 3 * num_layers]                 # VMEM (T*Bt, 4*Hp)

    for layer in range(num_layers):
        w_ih_ref = layer_refs[3 * layer + 0]
        w_hh_ref = layer_refs[3 * layer + 1]
        b_ref = layer_refs[3 * layer + 2]

        # Input projection (+ fused bias) for the WHOLE sequence in one matmul.
        inp = x_ref[...] if layer == 0 else seq_scr[...]
        xg_scr[...] = (
            jnp.dot(inp, w_ih_ref[...], preferred_element_type=jnp.float32)
            + b_ref[...])

        # Recurrent part: only h @ W_hh stays inside the time loop.
        w_hh = w_hh_ref[...]

        def lstm_step(rows, h, c):
            gates = xg_scr[rows, :] + jnp.dot(
                h, w_hh, preferred_element_type=jnp.float32)
            # Host-side gate layout: [i | f | o | g], each a full Hp lane tile.
            sig = jax.nn.sigmoid(gates[:, :3 * Hp])     # one EUP dispatch
            i_g = sig[:, 0 * Hp:1 * Hp]
            f_g = sig[:, 1 * Hp:2 * Hp]
            o_g = sig[:, 2 * Hp:3 * Hp]
            g_g = jnp.tanh(gates[:, 3 * Hp:4 * Hp])     # one tanh dispatch
            c_new = f_g * c + i_g * g_g
            h_new = o_g * jnp.tanh(c_new)
            seq_scr[rows, :] = h_new                    # next layer's input
            return h_new, c_new

        h0 = jnp.zeros((Bt, Hp), jnp.float32)
        c0 = jnp.zeros((Bt, Hp), jnp.float32)
        if T <= 16:
            # Small static trip count -> fully unrolled, static slab slices.
            h, c = h0, c0
            for t in range(T):
                h, c = lstm_step(slice(t * Bt, (t + 1) * Bt), h, c)
        else:
            # Long sequences: bounded live ranges, pipelined steady state.
            def body(t, carry):
                h, c = carry
                off = pl.multiple_of(t * Bt, Bt)
                return lstm_step(pl.ds(off, Bt), h, c)
            jax.lax.fori_loop(0, T, body, (h0, c0), unroll=2)

    # Final Linear over the whole (T*Bt, Hp) slab, then softmax over the
    # sequence axis (dim=0 -- PyTorch's legacy implicit dim for 3-D input).
    Cp = fc_w_ref.shape[1]
    logits = (jnp.dot(seq_scr[...], fc_w_ref[...],
                      preferred_element_type=jnp.float32) + fc_b_ref[...])
    logits = logits.reshape(T, Bt, Cp)
    m = jnp.max(logits, axis=0, keepdims=True)
    e = jnp.exp(logits - m)
    inv = pl.reciprocal(jnp.sum(e, axis=0, keepdims=True), approx=True)
    out_ref[...] = e * inv


# ----------------------------------------------------------------------------
# Host-side weight packing helpers
# ----------------------------------------------------------------------------
def _pack_gates_cols(w, H, Hp):
    """Reorder PyTorch gate blocks [i,f,g,o] -> [i,f,o,g] along the last axis,
    zero-padding each gate block from H to Hp lanes."""
    i_b, f_b, g_b, o_b = (w[..., k * H:(k + 1) * H] for k in range(4))
    pad = [(0, 0)] * (w.ndim - 1) + [(0, Hp - H)]
    return jnp.concatenate([jnp.pad(b, pad) for b in (i_b, f_b, o_b, g_b)],
                           axis=-1)


def _pad_rows(w, rows_p):
    return jnp.pad(w, ((0, rows_p - w.shape[0]), (0, 0)))


def _round_up(x, m):
    return ((x + m - 1) // m) * m


# ----------------------------------------------------------------------------
# Wrapper
# ----------------------------------------------------------------------------
def rnn_forward(params, x):
    T, B, I = x.shape
    H = params["lstm"][0][1].shape[0]
    C = params["fc_w"].shape[1]
    num_layers = len(params["lstm"])

    Hp = max(_LANE, _round_up(H, _LANE))       # per-gate lane padding
    Cp = max(_LANE, _round_up(C, _LANE))       # lane-dense output

    # Batch tiling: pad to sublane multiple, tile into independent row tiles.
    Bt = min(max(_SUBLANE, _round_up(B, _SUBLANE)), 64)
    Bp = _round_up(B, Bt)
    nBt = Bp // Bt

    xp = jnp.pad(x, ((0, 0), (0, Bp - B), (0, 0))) if Bp != B else x
    # Per-batch-tile time-major slab: (nBt, T*Bt, I), row index = t*Bt + b_loc.
    x_tiles = (xp.reshape(T, nBt, Bt, I)
               .transpose(1, 0, 2, 3)
               .reshape(nBt, T * Bt, I))

    kernel_inputs = [x_tiles]
    for li, (w_ih, w_hh, b) in enumerate(params["lstm"]):
        w_ih_p = _pack_gates_cols(w_ih, H, Hp)
        if li > 0:
            w_ih_p = _pad_rows(w_ih_p, Hp)     # previous layer outputs Hp cols
        w_hh_p = _pad_rows(_pack_gates_cols(w_hh, H, Hp), Hp)
        b_p = _pack_gates_cols(b, H, Hp)
        kernel_inputs += [w_ih_p, w_hh_p, b_p]
    fc_w_p = jnp.pad(params["fc_w"], ((0, Hp - H), (0, Cp - C)))
    fc_b_p = jnp.pad(params["fc_b"], ((0, 0), (0, Cp - C)))
    kernel_inputs += [fc_w_p, fc_b_p]

    def _resident_spec(a):
        nd = a.ndim
        return pl.BlockSpec(a.shape, lambda i, _nd=nd: (0,) * _nd)

    in_specs = [pl.BlockSpec((None, T * Bt, I), lambda i: (i, 0, 0))]
    in_specs += [_resident_spec(a) for a in kernel_inputs[1:]]
    out_specs = pl.BlockSpec((None, T, Bt, Cp), lambda i: (i, 0, 0, 0))

    # VMEM budget: resident weights + double-buffered x/out blocks + scratch.
    weight_bytes = sum(int(a.size) * a.dtype.itemsize for a in kernel_inputs[1:])
    block_bytes = 2 * (T * Bt * I * 4) + 2 * (T * Bt * Cp * 4)
    scratch_bytes = T * Bt * (Hp + 4 * Hp) * 4
    vmem_limit = int(1.25 * (weight_bytes + block_bytes + scratch_bytes)) + (4 << 20)
    vmem_limit = max(32 << 20, min(vmem_limit, 64 << 20))

    out = pl.pallas_call(
        functools.partial(_fused_rnn_kernel, num_layers, Hp, T, Bt),
        out_shape=jax.ShapeDtypeStruct((nBt, T, Bt, Cp), jnp.float32),
        grid=(nBt,),
        in_specs=in_specs,
        out_specs=out_specs,
        scratch_shapes=[
            pltpu.VMEM((T * Bt, Hp), jnp.float32),      # inter-layer hidden slab
            pltpu.VMEM((T * Bt, 4 * Hp), jnp.float32),  # precomputed input gates
        ],
        compiler_params=pltpu.CompilerParams(
            dimension_semantics=("parallel",),
            vmem_limit_bytes=vmem_limit),
    )(*kernel_inputs)

    # (nBt, T, Bt, Cp) -> (T, Bp, Cp) -> slice off batch / class padding.
    out = out.transpose(1, 0, 2, 3).reshape(T, Bp, Cp)
    return out[:, :B, :C]


# ----------------------------------------------------------------------------
# Parameter init (PyTorch-style uniform(-1/sqrt(H), 1/sqrt(H)), deterministic)
# ----------------------------------------------------------------------------
def init_params(key, input_size, hidden_size, num_layers, num_classes):
    k = 1.0 / jnp.sqrt(jnp.float32(hidden_size))
    params = {"lstm": []}
    for layer in range(num_layers):
        in_sz = input_size if layer == 0 else hidden_size
        key, k1, k2, k3, k4 = jax.random.split(key, 5)
        w_ih = jax.random.uniform(k1, (in_sz, 4 * hidden_size),
                                  jnp.float32, -k, k)
        w_hh = jax.random.uniform(k2, (hidden_size, 4 * hidden_size),
                                  jnp.float32, -k, k)
        b_ih = jax.random.uniform(k3, (4 * hidden_size,), jnp.float32, -k, k)
        b_hh = jax.random.uniform(k4, (4 * hidden_size,), jnp.float32, -k, k)
        params["lstm"].append(
            (w_ih, w_hh, (b_ih + b_hh).reshape(1, 4 * hidden_size)))
    key, k5, k6 = jax.random.split(key, 3)
    kf = 1.0 / jnp.sqrt(jnp.float32(hidden_size))
    params["fc_w"] = jax.random.uniform(k5, (hidden_size, num_classes),
                                        jnp.float32, -kf, kf)
    params["fc_b"] = jax.random.uniform(k6, (1, num_classes),
                                        jnp.float32, -kf, kf)
    return params


# ----------------------------------------------------------------------------
# Pure-JAX reference (sanity check) -- uses the raw, un-padded PyTorch layout.
# ----------------------------------------------------------------------------
def rnn_reference(params, x):
    def layer_ref(x, w_ih, w_hh, b):
        T, B, _ = x.shape
        H = w_hh.shape[0]

        def step(carry, x_t):
            h, c = carry
            gates = x_t @ w_ih + h @ w_hh + b
            i_g = jax.nn.sigmoid(gates[:, 0 * H:1 * H])
            f_g = jax.nn.sigmoid(gates[:, 1 * H:2 * H])
            g_g = jnp.tanh(gates[:, 2 * H:3 * H])
            o_g = jax.nn.sigmoid(gates[:, 3 * H:4 * H])
            c_new = f_g * c + i_g * g_g
            h_new = o_g * jnp.tanh(c_new)
            return (h_new, c_new), h_new

        init = (jnp.zeros((B, H), jnp.float32), jnp.zeros((B, H), jnp.float32))
        _, out = jax.lax.scan(step, init, x)
        return out

    h = x
    for (w_ih, w_hh, b) in params["lstm"]:
        h = layer_ref(h, w_ih, w_hh, b)
    logits = h @ params["fc_w"] + params["fc_b"]
    return jax.nn.softmax(logits, axis=0)   # legacy implicit dim=0 for 3-D


if __name__ == "__main__":
    seq_len, batch, input_size = 8, 2, 16
    hidden_size, num_layers, num_classes = 32, 2, 11

    key = jax.random.PRNGKey(0)
    key, kx = jax.random.split(key)
    x = jax.random.normal(kx, (seq_len, batch, input_size), jnp.float32)
    params = init_params(key, input_size, hidden_size, num_layers, num_classes)

    out = jax.block_until_ready(rnn_forward(params, x))
    ref = jax.block_until_ready(rnn_reference(params, x))

    assert out.shape == (seq_len, batch, num_classes)
    assert jnp.allclose(out, ref, rtol=1e-3, atol=1e-3), "mismatch vs reference"
    print("KERNEL_OK")
</pallas_src>

<mosaic_0001>
module attributes {stable_mosaic.version = 11 : i64} {
  func.func @_fused_rnn_kernel(%arg0: i32, %arg1: memref<1x64x16xf32, #tpu.memory_space<vmem>>, %arg2: memref<16x512xf32, #tpu.memory_space<vmem>>, %arg3: memref<128x512xf32, #tpu.memory_space<vmem>>, %arg4: memref<1x512xf32, #tpu.memory_space<vmem>>, %arg5: memref<128x512xf32, #tpu.memory_space<vmem>>, %arg6: memref<128x512xf32, #tpu.memory_space<vmem>>, %arg7: memref<1x512xf32, #tpu.memory_space<vmem>>, %arg8: memref<128x128xf32, #tpu.memory_space<vmem>>, %arg9: memref<1x128xf32, #tpu.memory_space<vmem>>, %arg10: memref<1x8x8x128xf32, #tpu.memory_space<vmem>>, %arg11: memref<64x128xf32, #tpu.memory_space<vmem>>, %arg12: memref<64x512xf32, #tpu.memory_space<vmem>>) attributes {dimension_semantics = [#tpu.dimension_semantics<parallel>], iteration_bounds = array<i64: 1>, scalar_prefetch = 0 : i64, scratch_operands = 2 : i64, tpu.core_type = #tpu.core_type<tc>, window_params = [{transform_indices = @transform_0, window_bounds = array<i64: 1, 64, 16>}, {pipeline_mode = #tpu.pipeline_mode<synchronous>, transform_indices = @transform_1, window_bounds = array<i64: 16, 512>}, {pipeline_mode = #tpu.pipeline_mode<synchronous>, transform_indices = @transform_2, window_bounds = array<i64: 128, 512>}, {pipeline_mode = #tpu.pipeline_mode<synchronous>, transform_indices = @transform_3, window_bounds = array<i64: 1, 512>}, {pipeline_mode = #tpu.pipeline_mode<synchronous>, transform_indices = @transform_4, window_bounds = array<i64: 128, 512>}, {pipeline_mode = #tpu.pipeline_mode<synchronous>, transform_indices = @transform_5, window_bounds = array<i64: 128, 512>}, {pipeline_mode = #tpu.pipeline_mode<synchronous>, transform_indices = @transform_6, window_bounds = array<i64: 1, 512>}, {pipeline_mode = #tpu.pipeline_mode<synchronous>, transform_indices = @transform_7, window_bounds = array<i64: 128, 128>}, {pipeline_mode = #tpu.pipeline_mode<synchronous>, transform_indices = @transform_8, window_bounds = array<i64: 1, 128>}, {transform_indices = @transform_9, window_bounds = array<i64: 1, 8, 8, 128>}]} {
    %c0 = arith.constant 0 : index
    %c0_0 = arith.constant 0 : index
    %c0_1 = arith.constant 0 : index
    %0 = vector.load %arg1[%c0, %c0_0, %c0_1] : memref<1x64x16xf32, #tpu.memory_space<vmem>>, vector<1x64x16xf32>
    %1 = vector.shape_cast %0 : vector<1x64x16xf32> to vector<64x16xf32>
    %c0_2 = arith.constant 0 : index
    %c0_3 = arith.constant 0 : index
    %2 = vector.load %arg2[%c0_2, %c0_3] : memref<16x512xf32, #tpu.memory_space<vmem>>, vector<16x512xf32>
    %cst = arith.constant dense<0.000000e+00> : vector<64x512xf32>
    %3 = tpu.matmul %1, %2, %cst {dimension_numbers = #tpu.dot_dimension_numbers<[1], [0], [0], [1], [0, 0, 1, 1], [], []>} : vector<64x16xf32>, vector<16x512xf32>, vector<64x512xf32> -> vector<64x512xf32>
    %c0_4 = arith.constant 0 : index
    %c0_5 = arith.constant 0 : index
    %4 = vector.load %arg4[%c0_4, %c0_5] : memref<1x512xf32, #tpu.memory_space<vmem>>, vector<1x512xf32>
    %5 = vector.broadcast %4 : vector<1x512xf32> to vector<64x512xf32>
    %6 = arith.addf %3, %5 : vector<64x512xf32>
    %c0_6 = arith.constant 0 : index
    %c0_7 = arith.constant 0 : index
    %7 = vector.load %arg12[%c0_6, %c0_7] : memref<64x512xf32, #tpu.memory_space<vmem>>, vector<64x512xf32>
    tpu.vector_store %arg12[%c0_6, %c0_7], %6 {strides = array<i32>} : memref<64x512xf32, #tpu.memory_space<vmem>>, vector<64x512xf32>,
    %c0_8 = arith.constant 0 : index
    %c0_9 = arith.constant 0 : index
    %8 = vector.load %arg3[%c0_8, %c0_9] : memref<128x512xf32, #tpu.memory_space<vmem>>, vector<128x512xf32>
    %cst_10 = arith.constant 0.000000e+00 : f32
    %9 = vector.broadcast %cst_10 : f32 to vector<8x128xf32>
    %cst_11 = arith.constant 0.000000e+00 : f32
    %10 = vector.broadcast %cst_11 : f32 to vector<8x128xf32>
    %c0_12 = arith.constant 0 : index
    %c0_13 = arith.constant 0 : index
    %11 = vector.load %arg12[%c0_12, %c0_13] : memref<64x512xf32, #tpu.memory_space<vmem>>, vector<8x512xf32>
    %cst_14 = arith.constant dense<0.000000e+00> : vector<8x512xf32>
    %12 = tpu.matmul %9, %8, %cst_14 {dimension_numbers = #tpu.dot_dimension_numbers<[1], [0], [0], [1], [0, 0, 1, 1], [], []>} : vector<8x128xf32>, vector<128x512xf32>, vector<8x512xf32> -> vector<8x512xf32>
    %13 = arith.addf %11, %12 : vector<8x512xf32>
    %14 = vector.extract_strided_slice %13 {offsets = [0, 0], sizes = [8, 384], strides = [1, 1]} : vector<8x512xf32> to vector<8x384xf32>
    %15 = arith.negf %14 : vector<8x384xf32>
    %16 = math.exp %15 : vector<8x384xf32>
    %cst_15 = arith.constant 1.000000e+00 : f32
    %17 = vector.broadcast %cst_15 : f32 to vector<8x384xf32>
    %18 = arith.addf %17, %16 : vector<8x384xf32>
    %19 = arith.divf %17, %18 : vector<8x384xf32>
    %20 = vector.extract_strided_slice %19 {offsets = [0, 0], sizes = [8, 128], strides = [1, 1]} : vector<8x384xf32> to vector<8x128xf32>
    %21 = vector.extract_strided_slice %19 {offsets = [0, 128], sizes = [8, 128], strides = [1, 1]} : vector<8x384xf32> to vector<8x128xf32>
    %22 = vector.extract_strided_slice %19 {offsets = [0, 256], sizes = [8, 128], strides = [1, 1]} : vector<8x384xf32> to vector<8x128xf32>
    %23 = vector.extract_strided_slice %13 {offsets = [0, 384], sizes = [8, 128], strides = [1, 1]} : vector<8x512xf32> to vector<8x128xf32>
    %24 = math.tanh %23 : vector<8x128xf32>
    %25 = arith.mulf %21, %10 : vector<8x128xf32>
    %26 = arith.mulf %20, %24 : vector<8x128xf32>
    %27 = arith.addf %25, %26 : vector<8x128xf32>
    %28 = math.tanh %27 : vector<8x128xf32>
    %29 = arith.mulf %22, %28 : vector<8x128xf32>
    %c0_16 = arith.constant 0 : index
    %c0_17 = arith.constant 0 : index
    %30 = vector.load %arg11[%c0_16, %c0_17] : memref<64x128xf32, #tpu.memory_space<vmem>>, vector<8x128xf32>
    tpu.vector_store %arg11[%c0_16, %c0_17], %29 {strides = array<i32>} : memref<64x128xf32, #tpu.memory_space<vmem>>, vector<8x128xf32>,
    %c8 = arith.constant 8 : index
    %c0_18 = arith.constant 0 : index
    %31 = vector.load %arg12[%c8, %c0_18] : memref<64x512xf32, #tpu.memory_space<vmem>>, vector<8x512xf32>
    %cst_19 = arith.constant dense<0.000000e+00> : vector<8x512xf32>
    %32 = tpu.matmul %29, %8, %cst_19 {dimension_numbers = #tpu.dot_dimension_numbers<[1], [0], [0], [1], [0, 0, 1, 1], [], []>} : vector<8x128xf32>, vector<128x512xf32>, vector<8x512xf32> -> vector<8x512xf32>
    %33 = arith.addf %31, %32 : vector<8x512xf32>
    %34 = vector.extract_strided_slice %33 {offsets = [0, 0], sizes = [8, 384], strides = [1, 1]} : vector<8x512xf32> to vector<8x384xf32>
    %35 = arith.negf %34 : vector<8x384xf32>
    %36 = math.exp %35 : vector<8x384xf32>
    %cst_20 = arith.constant 1.000000e+00 : f32
    %37 = vector.broadcast %cst_20 : f32 to vector<8x384xf32>
    %38 = arith.addf %37, %36 : vector<8x384xf32>
    %39 = arith.divf %37, %38 : vector<8x384xf32>
    %40 = vector.extract_strided_slice %39 {offsets = [0, 0], sizes = [8, 128], strides = [1, 1]} : vector<8x384xf32> to vector<8x128xf32>
    %41 = vector.extract_strided_slice %39 {offsets = [0, 128], sizes = [8, 128], strides = [1, 1]} : vector<8x384xf32> to vector<8x128xf32>
    %42 = vector.extract_strided_slice %39 {offsets = [0, 256], sizes = [8, 128], strides = [1, 1]} : vector<8x384xf32> to vector<8x128xf32>
    %43 = vector.extract_strided_slice %33 {offsets = [0, 384], sizes = [8, 128], strides = [1, 1]} : vector<8x512xf32> to vector<8x128xf32>
    %44 = math.tanh %43 : vector<8x128xf32>
    %45 = arith.mulf %41, %27 : vector<8x128xf32>
    %46 = arith.mulf %40, %44 : vector<8x128xf32>
    %47 = arith.addf %45, %46 : vector<8x128xf32>
    %48 = math.tanh %47 : vector<8x128xf32>
    %49 = arith.mulf %42, %48 : vector<8x128xf32>
    %c8_21 = arith.constant 8 : index
    %c0_22 = arith.constant 0 : index
    %50 = vector.load %arg11[%c8_21, %c0_22] : memref<64x128xf32, #tpu.memory_space<vmem>>, vector<8x128xf32>
    tpu.vector_store %arg11[%c8_21, %c0_22], %49 {strides = array<i32>} : memref<64x128xf32, #tpu.memory_space<vmem>>, vector<8x128xf32>,
    %c16 = arith.constant 16 : index
    %c0_23 = arith.constant 0 : index
    %51 = vector.load %arg12[%c16, %c0_23] : memref<64x512xf32, #tpu.memory_space<vmem>>, vector<8x512xf32>
    %cst_24 = arith.constant dense<0.000000e+00> : vector<8x512xf32>
    %52 = tpu.matmul %49, %8, %cst_24 {dimension_numbers = #tpu.dot_dimension_numbers<[1], [0], [0], [1], [0, 0, 1, 1], [], []>} : vector<8x128xf32>, vector<128x512xf32>, vector<8x512xf32> -> vector<8x512xf32>
    %53 = arith.addf %51, %52 : vector<8x512xf32>
    %54 = vector.extract_strided_slice %53 {offsets = [0, 0], sizes = [8, 384], strides = [1, 1]} : vector<8x512xf32> to vector<8x384xf32>
    %55 = arith.negf %54 : vector<8x384xf32>
    %56 = math.exp %55 : vector<8x384xf32>
    %cst_25 = arith.constant 1.000000e+00 : f32
    %57 = vector.broadcast %cst_25 : f32 to vector<8x384xf32>
    %58 = arith.addf %57, %56 : vector<8x384xf32>
    %59 = arith.divf %57, %58 : vector<8x384xf32>
    %60 = vector.extract_strided_slice %59 {offsets = [0, 0], sizes = [8, 128], strides = [1, 1]} : vector<8x384xf32> to vector<8x128xf32>
    %61 = vector.extract_strided_slice %59 {offsets = [0, 128], sizes = [8, 128], strides = [1, 1]} : vector<8x384xf32> to vector<8x128xf32>
    %62 = vector.extract_strided_slice %59 {offsets = [0, 256], sizes = [8, 128], strides = [1, 1]} : vector<8x384xf32> to vector<8x128xf32>
    %63 = vector.extract_strided_slice %53 {offsets = [0, 384], sizes = [8, 128], strides = [1, 1]} : vector<8x512xf32> to vector<8x128xf32>
    %64 = math.tanh %63 : vector<8x128xf32>
    %65 = arith.mulf %61, %47 : vector<8x128xf32>
    %66 = arith.mulf %60, %64 : vector<8x128xf32>
    %67 = arith.addf %65, %66 : vector<8x128xf32>
    %68 = math.tanh %67 : vector<8x128xf32>
    %69 = arith.mulf %62, %68 : vector<8x128xf32>
    %c16_26 = arith.constant 16 : index
    %c0_27 = arith.constant 0 : index
    %70 = vector.load %arg11[%c16_26, %c0_27] : memref<64x128xf32, #tpu.memory_space<vmem>>, vector<8x128xf32>
    tpu.vector_store %arg11[%c16_26, %c0_27], %69 {strides = array<i32>} : memref<64x128xf32, #tpu.memory_space<vmem>>, vector<8x128xf32>,
    %c24 = arith.constant 24 : index
    %c0_28 = arith.constant 0 : index
    %71 = vector.load %arg12[%c24, %c0_28] : memref<64x512xf32, #tpu.memory_space<vmem>>, vector<8x512xf32>
    %cst_29 = arith.constant dense<0.000000e+00> : vector<8x512xf32>
    %72 = tpu.matmul %69, %8, %cst_29 {dimension_numbers = #tpu.dot_dimension_numbers<[1], [0], [0], [1], [0, 0, 1, 1], [], []>} : vector<8x128xf32>, vector<128x512xf32>, vector<8x512xf32> -> vector<8x512xf32>
    %73 = arith.addf %71, %72 : vector<8x512xf32>
    %74 = vector.extract_strided_slice %73 {offsets = [0, 0], sizes = [8, 384], strides = [1, 1]} : vector<8x512xf32> to vector<8x384xf32>
    %75 = arith.negf %74 : vector<8x384xf32>
    %76 = math.exp %75 : vector<8x384xf32>
    %cst_30 = arith.constant 1.000000e+00 : f32
    %77 = vector.broadcast %cst_30 : f32 to vector<8x384xf32>
    %78 = arith.addf %77, %76 : vector<8x384xf32>
    %79 = arith.divf %77, %78 : vector<8x384xf32>
    %80 = vector.extract_strided_slice %79 {offsets = [0, 0], sizes = [8, 128], strides = [1, 1]} : vector<8x384xf32> to vector<8x128xf32>
    %81 = vector.extract_strided_slice %79 {offsets = [0, 128], sizes = [8, 128], strides = [1, 1]} : vector<8x384xf32> to vector<8x128xf32>
    %82 = vector.extract_strided_slice %79 {offsets = [0, 256], sizes = [8, 128], strides = [1, 1]} : vector<8x384xf32> to vector<8x128xf32>
    %83 = vector.extract_strided_slice %73 {offsets = [0, 384], sizes = [8, 128], strides = [1, 1]} : vector<8x512xf32> to vector<8x128xf32>
    %84 = math.tanh %83 : vector<8x128xf32>
    %85 = arith.mulf %81, %67 : vector<8x128xf32>
    %86 = arith.mulf %80, %84 : vector<8x128xf32>
    %87 = arith.addf %85, %86 : vector<8x128xf32>
    %88 = math.tanh %87 : vector<8x128xf32>
    %89 = arith.mulf %82, %88 : vector<8x128xf32>
    %c24_31 = arith.constant 24 : index
    %c0_32 = arith.constant 0 : index
    %90 = vector.load %arg11[%c24_31, %c0_32] : memref<64x128xf32, #tpu.memory_space<vmem>>, vector<8x128xf32>
    tpu.vector_store %arg11[%c24_31, %c0_32], %89 {strides = array<i32>} : memref<64x128xf32, #tpu.memory_space<vmem>>, vector<8x128xf32>,
    %c32 = arith.constant 32 : index
    %c0_33 = arith.constant 0 : index
    %91 = vector.load %arg12[%c32, %c0_33] : memref<64x512xf32, #tpu.memory_space<vmem>>, vector<8x512xf32>
    %cst_34 = arith.constant dense<0.000000e+00> : vector<8x512xf32>
    %92 = tpu.matmul %89, %8, %cst_34 {dimension_numbers = #tpu.dot_dimension_numbers<[1], [0], [0], [1], [0, 0, 1, 1], [], []>} : vector<8x128xf32>, vector<128x512xf32>, vector<8x512xf32> -> vector<8x512xf32>
    %93 = arith.addf %91, %92 : vector<8x512xf32>
    %94 = vector.extract_strided_slice %93 {offsets = [0, 0], sizes = [8, 384], strides = [1, 1]} : vector<8x512xf32> to vector<8x384xf32>
    %95 = arith.negf %94 : vector<8x384xf32>
    %96 = math.exp %95 : vector<8x384xf32>
    %cst_35 = arith.constant 1.000000e+00 : f32
    %97 = vector.broadcast %cst_35 : f32 to vector<8x384xf32>
    %98 = arith.addf %97, %96 : vector<8x384xf32>
    %99 = arith.divf %97, %98 : vector<8x384xf32>
    %100 = vector.extract_strided_slice %99 {offsets = [0, 0], sizes = [8, 128], strides = [1, 1]} : vector<8x384xf32> to vector<8x128xf32>
    %101 = vector.extract_strided_slice %99 {offsets = [0, 128], sizes = [8, 128], strides = [1, 1]} : vector<8x384xf32> to vector<8x128xf32>
    %102 = vector.extract_strided_slice %99 {offsets = [0, 256], sizes = [8, 128], strides = [1, 1]} : vector<8x384xf32> to vector<8x128xf32>
    %103 = vector.extract_strided_slice %93 {offsets = [0, 384], sizes = [8, 128], strides = [1, 1]} : vector<8x512xf32> to vector<8x128xf32>
    %104 = math.tanh %103 : vector<8x128xf32>
    %105 = arith.mulf %101, %87 : vector<8x128xf32>
    %106 = arith.mulf %100, %104 : vector<8x128xf32>
    %107 = arith.addf %105, %106 : vector<8x128xf32>
    %108 = math.tanh %107 : vector<8x128xf32>
    %109 = arith.mulf %102, %108 : vector<8x128xf32>
    %c32_36 = arith.constant 32 : index
    %c0_37 = arith.constant 0 : index
    %110 = vector.load %arg11[%c32_36, %c0_37] : memref<64x128xf32, #tpu.memory_space<vmem>>, vector<8x128xf32>
    tpu.vector_store %arg11[%c32_36, %c0_37], %109 {strides = array<i32>} : memref<64x128xf32, #tpu.memory_space<vmem>>, vector<8x128xf32>,
    %c40 = arith.constant 40 : index
    %c0_38 = arith.constant 0 : index
    %111 = vector.load %arg12[%c40, %c0_38] : memref<64x512xf32, #tpu.memory_space<vmem>>, vector<8x512xf32>
    %cst_39 = arith.constant dense<0.000000e+00> : vector<8x512xf32>
    %112 = tpu.matmul %109, %8, %cst_39 {dimension_numbers = #tpu.dot_dimension_numbers<[1], [0], [0], [1], [0, 0, 1, 1], [], []>} : vector<8x128xf32>, vector<128x512xf32>, vector<8x512xf32> -> vector<8x512xf32>
    %113 = arith.addf %111, %112 : vector<8x512xf32>
    %114 = vector.extract_strided_slice %113 {offsets = [0, 0], sizes = [8, 384], strides = [1, 1]} : vector<8x512xf32> to vector<8x384xf32>
    %115 = arith.negf %114 : vector<8x384xf32>
    %116 = math.exp %115 : vector<8x384xf32>
    %cst_40 = arith.constant 1.000000e+00 : f32
    %117 = vector.broadcast %cst_40 : f32 to vector<8x384xf32>
    %118 = arith.addf %117, %116 : vector<8x384xf32>
    %119 = arith.divf %117, %118 : vector<8x384xf32>
    %120 = vector.extract_strided_slice %119 {offsets = [0, 0], sizes = [8, 128], strides = [1, 1]} : vector<8x384xf32> to vector<8x128xf32>
    %121 = vector.extract_strided_slice %119 {offsets = [0, 128], sizes = [8, 128], strides = [1, 1]} : vector<8x384xf32> to vector<8x128xf32>
    %122 = vector.extract_strided_slice %119 {offsets = [0, 256], sizes = [8, 128], strides = [1, 1]} : vector<8x384xf32> to vector<8x128xf32>
    %123 = vector.extract_strided_slice %113 {offsets = [0, 384], sizes = [8, 128], strides = [1, 1]} : vector<8x512xf32> to vector<8x128xf32>
    %124 = math.tanh %123 : vector<8x128xf32>
    %125 = arith.mulf %121, %107 : vector<8x128xf32>
    %126 = arith.mulf %120, %124 : vector<8x128xf32>
    %127 = arith.addf %125, %126 : vector<8x128xf32>
    %128 = math.tanh %127 : vector<8x128xf32>
    %129 = arith.mulf %122, %128 : vector<8x128xf32>
    %c40_41 = arith.constant 40 : index
    %c0_42 = arith.constant 0 : index
    %130 = vector.load %arg11[%c40_41, %c0_42] : memref<64x128xf32, #tpu.memory_space<vmem>>, vector<8x128xf32>
    tpu.vector_store %arg11[%c40_41, %c0_42], %129 {strides = array<i32>} : memref<64x128xf32, #tpu.memory_space<vmem>>, vector<8x128xf32>,
    %c48 = arith.constant 48 : index
    %c0_43 = arith.constant 0 : index
    %131 = vector.load %arg12[%c48, %c0_43] : memref<64x512xf32, #tpu.memory_space<vmem>>, vector<8x512xf32>
    %cst_44 = arith.constant dense<0.000000e+00> : vector<8x512xf32>
    %132 = tpu.matmul %129, %8, %cst_44 {dimension_numbers = #tpu.dot_dimension_numbers<[1], [0], [0], [1], [0, 0, 1, 1], [], []>} : vector<8x128xf32>, vector<128x512xf32>, vector<8x512xf32> -> vector<8x512xf32>
    %133 = arith.addf %131, %132 : vector<8x512xf32>
    %134 = vector.extract_strided_slice %133 {offsets = [0, 0], sizes = [8, 384], strides = [1, 1]} : vector<8x512xf32> to vector<8x384xf32>
    %135 = arith.negf %134 : vector<8x384xf32>
    %136 = math.exp %135 : vector<8x384xf32>
    %cst_45 = arith.constant 1.000000e+00 : f32
    %137 = vector.broadcast %cst_45 : f32 to vector<8x384xf32>
    %138 = arith.addf %137, %136 : vector<8x384xf32>
    %139 = arith.divf %137, %138 : vector<8x384xf32>
    %140 = vector.extract_strided_slice %139 {offsets = [0, 0], sizes = [8, 128], strides = [1, 1]} : vector<8x384xf32> to vector<8x128xf32>
    %141 = vector.extract_strided_slice %139 {offsets = [0, 128], sizes = [8, 128], strides = [1, 1]} : vector<8x384xf32> to vector<8x128xf32>
    %142 = vector.extract_strided_slice %139 {offsets = [0, 256], sizes = [8, 128], strides = [1, 1]} : vector<8x384xf32> to vector<8x128xf32>
    %143 = vector.extract_strided_slice %133 {offsets = [0, 384], sizes = [8, 128], strides = [1, 1]} : vector<8x512xf32> to vector<8x128xf32>
    %144 = math.tanh %143 : vector<8x128xf32>
    %145 = arith.mulf %141, %127 : vector<8x128xf32>
    %146 = arith.mulf %140, %144 : vector<8x128xf32>
    %147 = arith.addf %145, %146 : vector<8x128xf32>
    %148 = math.tanh %147 : vector<8x128xf32>
    %149 = arith.mulf %142, %148 : vector<8x128xf32>
    %c48_46 = arith.constant 48 : index
    %c0_47 = arith.constant 0 : index
    %150 = vector.load %arg11[%c48_46, %c0_47] : memref<64x128xf32, #tpu.memory_space<vmem>>, vector<8x128xf32>
    tpu.vector_store %arg11[%c48_46, %c0_47], %149 {strides = array<i32>} : memref<64x128xf32, #tpu.memory_space<vmem>>, vector<8x128xf32>,
    %c56 = arith.constant 56 : index
    %c0_48 = arith.constant 0 : index
    %151 = vector.load %arg12[%c56, %c0_48] : memref<64x512xf32, #tpu.memory_space<vmem>>, vector<8x512xf32>
    %cst_49 = arith.constant dense<0.000000e+00> : vector<8x512xf32>
    %152 = tpu.matmul %149, %8, %cst_49 {dimension_numbers = #tpu.dot_dimension_numbers<[1], [0], [0], [1], [0, 0, 1, 1], [], []>} : vector<8x128xf32>, vector<128x512xf32>, vector<8x512xf32> -> vector<8x512xf32>
    %153 = arith.addf %151, %152 : vector<8x512xf32>
    %154 = vector.extract_strided_slice %153 {offsets = [0, 0], sizes = [8, 384], strides = [1, 1]} : vector<8x512xf32> to vector<8x384xf32>
    %155 = arith.negf %154 : vector<8x384xf32>
    %156 = math.exp %155 : vector<8x384xf32>
    %cst_50 = arith.constant 1.000000e+00 : f32
    %157 = vector.broadcast %cst_50 : f32 to vector<8x384xf32>
    %158 = arith.addf %157, %156 : vector<8x384xf32>
    %159 = arith.divf %157, %158 : vector<8x384xf32>
    %160 = vector.extract_strided_slice %159 {offsets = [0, 0], sizes = [8, 128], strides = [1, 1]} : vector<8x384xf32> to vector<8x128xf32>
    %161 = vector.extract_strided_slice %159 {offsets = [0, 128], sizes = [8, 128], strides = [1, 1]} : vector<8x384xf32> to vector<8x128xf32>
    %162 = vector.extract_strided_slice %159 {offsets = [0, 256], sizes = [8, 128], strides = [1, 1]} : vector<8x384xf32> to vector<8x128xf32>
    %163 = vector.extract_strided_slice %153 {offsets = [0, 384], sizes = [8, 128], strides = [1, 1]} : vector<8x512xf32> to vector<8x128xf32>
    %164 = math.tanh %163 : vector<8x128xf32>
    %165 = arith.mulf %161, %147 : vector<8x128xf32>
    %166 = arith.mulf %160, %164 : vector<8x128xf32>
    %167 = arith.addf %165, %166 : vector<8x128xf32>
    %168 = math.tanh %167 : vector<8x128xf32>
    %169 = arith.mulf %162, %168 : vector<8x128xf32>
    %c56_51 = arith.constant 56 : index
    %c0_52 = arith.constant 0 : index
    %170 = vector.load %arg11[%c56_51, %c0_52] : memref<64x128xf32, #tpu.memory_space<vmem>>, vector<8x128xf32>
    tpu.vector_store %arg11[%c56_51, %c0_52], %169 {strides = array<i32>} : memref<64x128xf32, #tpu.memory_space<vmem>>, vector<8x128xf32>,
    %c0_53 = arith.constant 0 : index
    %c0_54 = arith.constant 0 : index
    %171 = vector.load %arg11[%c0_53, %c0_54] : memref<64x128xf32, #tpu.memory_space<vmem>>, vector<64x128xf32>
    %c0_55 = arith.constant 0 : index
    %c0_56 = arith.constant 0 : index
    %172 = vector.load %arg5[%c0_55, %c0_56] : memref<128x512xf32, #tpu.memory_space<vmem>>, vector<128x512xf32>
    %cst_57 = arith.constant dense<0.000000e+00> : vector<64x512xf32>
    %173 = tpu.matmul %171, %172, %cst_57 {dimension_numbers = #tpu.dot_dimension_numbers<[1], [0], [0], [1], [0, 0, 1, 1], [], []>} : vector<64x128xf32>, vector<128x512xf32>, vector<64x512xf32> -> vector<64x512xf32>
    %c0_58 = arith.constant 0 : index
    %c0_59 = arith.constant 0 : index
    %174 = vector.load %arg7[%c0_58, %c0_59] : memref<1x512xf32, #tpu.memory_space<vmem>>, vector<1x512xf32>
    %175 = vector.broadcast %174 : vector<1x512xf32> to vector<64x512xf32>
    %176 = arith.addf %173, %175 : vector<64x512xf32>
    %c0_60 = arith.constant 0 : index
    %c0_61 = arith.constant 0 : index
    %177 = vector.load %arg12[%c0_60, %c0_61] : memref<64x512xf32, #tpu.memory_space<vmem>>, vector<64x512xf32>
    tpu.vector_store %arg12[%c0_60, %c0_61], %176 {strides = array<i32>} : memref<64x512xf32, #tpu.memory_space<vmem>>, vector<64x512xf32>,
    %c0_62 = arith.constant 0 : index
    %c0_63 = arith.constant 0 : index
    %178 = vector.load %arg6[%c0_62, %c0_63] : memref<128x512xf32, #tpu.memory_space<vmem>>, vector<128x512xf32>
    %cst_64 = arith.constant 0.000000e+00 : f32
    %179 = vector.broadcast %cst_64 : f32 to vector<8x128xf32>
    %cst_65 = arith.constant 0.000000e+00 : f32
    %180 = vector.broadcast %cst_65 : f32 to vector<8x128xf32>
    %c0_66 = arith.constant 0 : index
    %c0_67 = arith.constant 0 : index
    %181 = vector.load %arg12[%c0_66, %c0_67] : memref<64x512xf32, #tpu.memory_space<vmem>>, vector<8x512xf32>
    %cst_68 = arith.constant dense<0.000000e+00> : vector<8x512xf32>
    %182 = tpu.matmul %179, %178, %cst_68 {dimension_numbers = #tpu.dot_dimension_numbers<[1], [0], [0], [1], [0, 0, 1, 1], [], []>} : vector<8x128xf32>, vector<128x512xf32>, vector<8x512xf32> -> vector<8x512xf32>
    %183 = arith.addf %181, %182 : vector<8x512xf32>
    %184 = vector.extract_strided_slice %183 {offsets = [0, 0], sizes = [8, 384], strides = [1, 1]} : vector<8x512xf32> to vector<8x384xf32>
    %185 = arith.negf %184 : vector<8x384xf32>
    %186 = math.exp %185 : vector<8x384xf32>
    %cst_69 = arith.constant 1.000000e+00 : f32
    %187 = vector.broadcast %cst_69 : f32 to vector<8x384xf32>
    %188 = arith.addf %187, %186 : vector<8x384xf32>
    %189 = arith.divf %187, %188 : vector<8x384xf32>
    %190 = vector.extract_strided_slice %189 {offsets = [0, 0], sizes = [8, 128], strides = [1, 1]} : vector<8x384xf32> to vector<8x128xf32>
    %191 = vector.extract_strided_slice %189 {offsets = [0, 128], sizes = [8, 128], strides = [1, 1]} : vector<8x384xf32> to vector<8x128xf32>
    %192 = vector.extract_strided_slice %189 {offsets = [0, 256], sizes = [8, 128], strides = [1, 1]} : vector<8x384xf32> to vector<8x128xf32>
    %193 = vector.extract_strided_slice %183 {offsets = [0, 384], sizes = [8, 128], strides = [1, 1]} : vector<8x512xf32> to vector<8x128xf32>
    %194 = math.tanh %193 : vector<8x128xf32>
    %195 = arith.mulf %191, %180 : vector<8x128xf32>
    %196 = arith.mulf %190, %194 : vector<8x128xf32>
    %197 = arith.addf %195, %196 : vector<8x128xf32>
    %198 = math.tanh %197 : vector<8x128xf32>
    %199 = arith.mulf %192, %198 : vector<8x128xf32>
    %c0_70 = arith.constant 0 : index
    %c0_71 = arith.constant 0 : index
    %200 = vector.load %arg11[%c0_70, %c0_71] : memref<64x128xf32, #tpu.memory_space<vmem>>, vector<8x128xf32>
    tpu.vector_store %arg11[%c0_70, %c0_71], %199 {strides = array<i32>} : memref<64x128xf32, #tpu.memory_space<vmem>>, vector<8x128xf32>,
    %c8_72 = arith.constant 8 : index
    %c0_73 = arith.constant 0 : index
    %201 = vector.load %arg12[%c8_72, %c0_73] : memref<64x512xf32, #tpu.memory_space<vmem>>, vector<8x512xf32>
    %cst_74 = arith.constant dense<0.000000e+00> : vector<8x512xf32>
    %202 = tpu.matmul %199, %178, %cst_74 {dimension_numbers = #tpu.dot_dimension_numbers<[1], [0], [0], [1], [0, 0, 1, 1], [], []>} : vector<8x128xf32>, vector<128x512xf32>, vector<8x512xf32> -> vector<8x512xf32>
    %203 = arith.addf %201, %202 : vector<8x512xf32>
    %204 = vector.extract_strided_slice %203 {offsets = [0, 0], sizes = [8, 384], strides = [1, 1]} : vector<8x512xf32> to vector<8x384xf32>
    %205 = arith.negf %204 : vector<8x384xf32>
    %206 = math.exp %205 : vector<8x384xf32>
    %cst_75 = arith.constant 1.000000e+00 : f32
    %207 = vector.broadcast %cst_75 : f32 to vector<8x384xf32>
    %208 = arith.addf %207, %206 : vector<8x384xf32>
    %209 = arith.divf %207, %208 : vector<8x384xf32>
    %210 = vector.extract_strided_slice %209 {offsets = [0, 0], sizes = [8, 128], strides = [1, 1]} : vector<8x384xf32> to vector<8x128xf32>
    %211 = vector.extract_strided_slice %209 {offsets = [0, 128], sizes = [8, 128], strides = [1, 1]} : vector<8x384xf32> to vector<8x128xf32>
    %212 = vector.extract_strided_slice %209 {offsets = [0, 256], sizes = [8, 128], strides = [1, 1]} : vector<8x384xf32> to vector<8x128xf32>
    %213 = vector.extract_strided_slice %203 {offsets = [0, 384], sizes = [8, 128], strides = [1, 1]} : vector<8x512xf32> to vector<8x128xf32>
    %214 = math.tanh %213 : vector<8x128xf32>
    %215 = arith.mulf %211, %197 : vector<8x128xf32>
    %216 = arith.mulf %210, %214 : vector<8x128xf32>
    %217 = arith.addf %215, %216 : vector<8x128xf32>
    %218 = math.tanh %217 : vector<8x128xf32>
    %219 = arith.mulf %212, %218 : vector<8x128xf32>
    %c8_76 = arith.constant 8 : index
    %c0_77 = arith.constant 0 : index
    %220 = vector.load %arg11[%c8_76, %c0_77] : memref<64x128xf32, #tpu.memory_space<vmem>>, vector<8x128xf32>
    tpu.vector_store %arg11[%c8_76, %c0_77], %219 {strides = array<i32>} : memref<64x128xf32, #tpu.memory_space<vmem>>, vector<8x128xf32>,
    %c16_78 = arith.constant 16 : index
    %c0_79 = arith.constant 0 : index
    %221 = vector.load %arg12[%c16_78, %c0_79] : memref<64x512xf32, #tpu.memory_space<vmem>>, vector<8x512xf32>
    %cst_80 = arith.constant dense<0.000000e+00> : vector<8x512xf32>
    %222 = tpu.matmul %219, %178, %cst_80 {dimension_numbers = #tpu.dot_dimension_numbers<[1], [0], [0], [1], [0, 0, 1, 1], [], []>} : vector<8x128xf32>, vector<128x512xf32>, vector<8x512xf32> -> vector<8x512xf32>
    %223 = arith.addf %221, %222 : vector<8x512xf32>
    %224 = vector.extract_strided_slice %223 {offsets = [0, 0], sizes = [8, 384], strides = [1, 1]} : vector<8x512xf32> to vector<8x384xf32>
    %225 = arith.negf %224 : vector<8x384xf32>
    %226 = math.exp %225 : vector<8x384xf32>
    %cst_81 = arith.constant 1.000000e+00 : f32
    %227 = vector.broadcast %cst_81 : f32 to vector<8x384xf32>
    %228 = arith.addf %227, %226 : vector<8x384xf32>
    %229 = arith.divf %227, %228 : vector<8x384xf32>
    %230 = vector.extract_strided_slice %229 {offsets = [0, 0], sizes = [8, 128], strides = [1, 1]} : vector<8x384xf32> to vector<8x128xf32>
    %231 = vector.extract_strided_slice %229 {offsets = [0, 128], sizes = [8, 128], strides = [1, 1]} : vector<8x384xf32> to vector<8x128xf32>
    %232 = vector.extract_strided_slice %229 {offsets = [0, 256], sizes = [8, 128], strides = [1, 1]} : vector<8x384xf32> to vector<8x128xf32>
    %233 = vector.extract_strided_slice %223 {offsets = [0, 384], sizes = [8, 128], strides = [1, 1]} : vector<8x512xf32> to vector<8x128xf32>
    %234 = math.tanh %233 : vector<8x128xf32>
    %235 = arith.mulf %231, %217 : vector<8x128xf32>
    %236 = arith.mulf %230, %234 : vector<8x128xf32>
    %237 = arith.addf %235, %236 : vector<8x128xf32>
    %238 = math.tanh %237 : vector<8x128xf32>
    %239 = arith.mulf %232, %238 : vector<8x128xf32>
    %c16_82 = arith.constant 16 : index
    %c0_83 = arith.constant 0 : index
    %240 = vector.load %arg11[%c16_82, %c0_83] : memref<64x128xf32, #tpu.memory_space<vmem>>, vector<8x128xf32>
    tpu.vector_store %arg11[%c16_82, %c0_83], %239 {strides = array<i32>} : memref<64x128xf32, #tpu.memory_space<vmem>>, vector<8x128xf32>,
    %c24_84 = arith.constant 24 : index
    %c0_85 = arith.constant 0 : index
    %241 = vector.load %arg12[%c24_84, %c0_85] : memref<64x512xf32, #tpu.memory_space<vmem>>, vector<8x512xf32>
    %cst_86 = arith.constant dense<0.000000e+00> : vector<8x512xf32>
    %242 = tpu.matmul %239, %178, %cst_86 {dimension_numbers = #tpu.dot_dimension_numbers<[1], [0], [0], [1], [0, 0, 1, 1], [], []>} : vector<8x128xf32>, vector<128x512xf32>, vector<8x512xf32> -> vector<8x512xf32>
    %243 = arith.addf %241, %242 : vector<8x512xf32>
    %244 = vector.extract_strided_slice %243 {offsets = [0, 0], sizes = [8, 384], strides = [1, 1]} : vector<8x512xf32> to vector<8x384xf32>
    %245 = arith.negf %244 : vector<8x384xf32>
    %246 = math.exp %245 : vector<8x384xf32>
    %cst_87 = arith.constant 1.000000e+00 : f32
    %247 = vector.broadcast %cst_87 : f32 to vector<8x384xf32>
    %248 = arith.addf %247, %246 : vector<8x384xf32>
    %249 = arith.divf %247, %248 : vector<8x384xf32>
    %250 = vector.extract_strided_slice %249 {offsets = [0, 0], sizes = [8, 128], strides = [1, 1]} : vector<8x384xf32> to vector<8x128xf32>
    %251 = vector.extract_strided_slice %249 {offsets = [0, 128], sizes = [8, 128], strides = [1, 1]} : vector<8x384xf32> to vector<8x128xf32>
    %252 = vector.extract_strided_slice %249 {offsets = [0, 256], sizes = [8, 128], strides = [1, 1]} : vector<8x384xf32> to vector<8x128xf32>
    %253 = vector.extract_strided_slice %243 {offsets = [0, 384], sizes = [8, 128], strides = [1, 1]} : vector<8x512xf32> to vector<8x128xf32>
    %254 = math.tanh %253 : vector<8x128xf32>
    %255 = arith.mulf %251, %237 : vector<8x128xf32>
    %256 = arith.mulf %250, %254 : vector<8x128xf32>
    %257 = arith.addf %255, %256 : vector<8x128xf32>
    %258 = math.tanh %257 : vector<8x128xf32>
    %259 = arith.mulf %252, %258 : vector<8x128xf32>
    %c24_88 = arith.constant 24 : index
    %c0_89 = arith.constant 0 : index
    %260 = vector.load %arg11[%c24_88, %c0_89] : memref<64x128xf32, #tpu.memory_space<vmem>>, vector<8x128xf32>
    tpu.vector_store %arg11[%c24_88, %c0_89], %259 {strides = array<i32>} : memref<64x128xf32, #tpu.memory_space<vmem>>, vector<8x128xf32>,
    %c32_90 = arith.constant 32 : index
    %c0_91 = arith.constant 0 : index
    %261 = vector.load %arg12[%c32_90, %c0_91] : memref<64x512xf32, #tpu.memory_space<vmem>>, vector<8x512xf32>
    %cst_92 = arith.constant dense<0.000000e+00> : vector<8x512xf32>
    %262 = tpu.matmul %259, %178, %cst_92 {dimension_numbers = #tpu.dot_dimension_numbers<[1], [0], [0], [1], [0, 0, 1, 1], [], []>} : vector<8x128xf32>, vector<128x512xf32>, vector<8x512xf32> -> vector<8x512xf32>
    %263 = arith.addf %261, %262 : vector<8x512xf32>
    %264 = vector.extract_strided_slice %263 {offsets = [0, 0], sizes = [8, 384], strides = [1, 1]} : vector<8x512xf32> to vector<8x384xf32>
    %265 = arith.negf %264 : vector<8x384xf32>
    %266 = math.exp %265 : vector<8x384xf32>
    %cst_93 = arith.constant 1.000000e+00 : f32
    %267 = vector.broadcast %cst_93 : f32 to vector<8x384xf32>
    %268 = arith.addf %267, %266 : vector<8x384xf32>
    %269 = arith.divf %267, %268 : vector<8x384xf32>
    %270 = vector.extract_strided_slice %269 {offsets = [0, 0], sizes = [8, 128], strides = [1, 1]} : vector<8x384xf32> to vector<8x128xf32>
    %271 = vector.extract_strided_slice %269 {offsets = [0, 128], sizes = [8, 128], strides = [1, 1]} : vector<8x384xf32> to vector<8x128xf32>
    %272 = vector.extract_strided_slice %269 {offsets = [0, 256], sizes = [8, 128], strides = [1, 1]} : vector<8x384xf32> to vector<8x128xf32>
    %273 = vector.extract_strided_slice %263 {offsets = [0, 384], sizes = [8, 128], strides = [1, 1]} : vector<8x512xf32> to vector<8x128xf32>
    %274 = math.tanh %273 : vector<8x128xf32>
    %275 = arith.mulf %271, %257 : vector<8x128xf32>
    %276 = arith.mulf %270, %274 : vector<8x128xf32>
    %277 = arith.addf %275, %276 : vector<8x128xf32>
    %278 = math.tanh %277 : vector<8x128xf32>
    %279 = arith.mulf %272, %278 : vector<8x128xf32>
    %c32_94 = arith.constant 32 : index
    %c0_95 = arith.constant 0 : index
    %280 = vector.load %arg11[%c32_94, %c0_95] : memref<64x128xf32, #tpu.memory_space<vmem>>, vector<8x128xf32>
    tpu.vector_store %arg11[%c32_94, %c0_95], %279 {strides = array<i32>} : memref<64x128xf32, #tpu.memory_space<vmem>>, vector<8x128xf32>,
    %c40_96 = arith.constant 40 : index
    %c0_97 = arith.constant 0 : index
    %281 = vector.load %arg12[%c40_96, %c0_97] : memref<64x512xf32, #tpu.memory_space<vmem>>, vector<8x512xf32>
    %cst_98 = arith.constant dense<0.000000e+00> : vector<8x512xf32>
    %282 = tpu.matmul %279, %178, %cst_98 {dimension_numbers = #tpu.dot_dimension_numbers<[1], [0], [0], [1], [0, 0, 1, 1], [], []>} : vector<8x128xf32>, vector<128x512xf32>, vector<8x512xf32> -> vector<8x512xf32>
    %283 = arith.addf %281, %282 : vector<8x512xf32>
    %284 = vector.extract_strided_slice %283 {offsets = [0, 0], sizes = [8, 384], strides = [1, 1]} : vector<8x512xf32> to vector<8x384xf32>
    %285 = arith.negf %284 : vector<8x384xf32>
    %286 = math.exp %285 : vector<8x384xf32>
    %cst_99 = arith.constant 1.000000e+00 : f32
    %287 = vector.broadcast %cst_99 : f32 to vector<8x384xf32>
    %288 = arith.addf %287, %286 : vector<8x384xf32>
    %289 = arith.divf %287, %288 : vector<8x384xf32>
    %290 = vector.extract_strided_slice %289 {offsets = [0, 0], sizes = [8, 128], strides = [1, 1]} : vector<8x384xf32> to vector<8x128xf32>
    %291 = vector.extract_strided_slice %289 {offsets = [0, 128], sizes = [8, 128], strides = [1, 1]} : vector<8x384xf32> to vector<8x128xf32>
    %292 = vector.extract_strided_slice %289 {offsets = [0, 256], sizes = [8, 128], strides = [1, 1]} : vector<8x384xf32> to vector<8x128xf32>
    %293 = vector.extract_strided_slice %283 {offsets = [0, 384], sizes = [8, 128], strides = [1, 1]} : vector<8x512xf32> to vector<8x128xf32>
    %294 = math.tanh %293 : vector<8x128xf32>
    %295 = arith.mulf %291, %277 : vector<8x128xf32>
    %296 = arith.mulf %290, %294 : vector<8x128xf32>
    %297 = arith.addf %295, %296 : vector<8x128xf32>
    %298 = math.tanh %297 : vector<8x128xf32>
    %299 = arith.mulf %292, %298 : vector<8x128xf32>
    %c40_100 = arith.constant 40 : index
    %c0_101 = arith.constant 0 : index
    %300 = vector.load %arg11[%c40_100, %c0_101] : memref<64x128xf32, #tpu.memory_space<vmem>>, vector<8x128xf32>
    tpu.vector_store %arg11[%c40_100, %c0_101], %299 {strides = array<i32>} : memref<64x128xf32, #tpu.memory_space<vmem>>, vector<8x128xf32>,
    %c48_102 = arith.constant 48 : index
    %c0_103 = arith.constant 0 : index
    %301 = vector.load %arg12[%c48_102, %c0_103] : memref<64x512xf32, #tpu.memory_space<vmem>>, vector<8x512xf32>
    %cst_104 = arith.constant dense<0.000000e+00> : vector<8x512xf32>
    %302 = tpu.matmul %299, %178, %cst_104 {dimension_numbers = #tpu.dot_dimension_numbers<[1], [0], [0], [1], [0, 0, 1, 1], [], []>} : vector<8x128xf32>, vector<128x512xf32>, vector<8x512xf32> -> vector<8x512xf32>
    %303 = arith.addf %301, %302 : vector<8x512xf32>
    %304 = vector.extract_strided_slice %303 {offsets = [0, 0], sizes = [8, 384], strides = [1, 1]} : vector<8x512xf32> to vector<8x384xf32>
    %305 = arith.negf %304 : vector<8x384xf32>
    %306 = math.exp %305 : vector<8x384xf32>
    %cst_105 = arith.constant 1.000000e+00 : f32
    %307 = vector.broadcast %cst_105 : f32 to vector<8x384xf32>
    %308 = arith.addf %307, %306 : vector<8x384xf32>
    %309 = arith.divf %307, %308 : vector<8x384xf32>
    %310 = vector.extract_strided_slice %309 {offsets = [0, 0], sizes = [8, 128], strides = [1, 1]} : vector<8x384xf32> to vector<8x128xf32>
    %311 = vector.extract_strided_slice %309 {offsets = [0, 128], sizes = [8, 128], strides = [1, 1]} : vector<8x384xf32> to vector<8x128xf32>
    %312 = vector.extract_strided_slice %309 {offsets = [0, 256], sizes = [8, 128], strides = [1, 1]} : vector<8x384xf32> to vector<8x128xf32>
    %313 = vector.extract_strided_slice %303 {offsets = [0, 384], sizes = [8, 128], strides = [1, 1]} : vector<8x512xf32> to vector<8x128xf32>
    %314 = math.tanh %313 : vector<8x128xf32>
    %315 = arith.mulf %311, %297 : vector<8x128xf32>
    %316 = arith.mulf %310, %314 : vector<8x128xf32>
    %317 = arith.addf %315, %316 : vector<8x128xf32>
    %318 = math.tanh %317 : vector<8x128xf32>
    %319 = arith.mulf %312, %318 : vector<8x128xf32>
    %c48_106 = arith.constant 48 : index
    %c0_107 = arith.constant 0 : index
    %320 = vector.load %arg11[%c48_106, %c0_107] : memref<64x128xf32, #tpu.memory_space<vmem>>, vector<8x128xf32>
    tpu.vector_store %arg11[%c48_106, %c0_107], %319 {strides = array<i32>} : memref<64x128xf32, #tpu.memory_space<vmem>>, vector<8x128xf32>,
    %c56_108 = arith.constant 56 : index
    %c0_109 = arith.constant 0 : index
    %321 = vector.load %arg12[%c56_108, %c0_109] : memref<64x512xf32, #tpu.memory_space<vmem>>, vector<8x512xf32>
    %cst_110 = arith.constant dense<0.000000e+00> : vector<8x512xf32>
    %322 = tpu.matmul %319, %178, %cst_110 {dimension_numbers = #tpu.dot_dimension_numbers<[1], [0], [0], [1], [0, 0, 1, 1], [], []>} : vector<8x128xf32>, vector<128x512xf32>, vector<8x512xf32> -> vector<8x512xf32>
    %323 = arith.addf %321, %322 : vector<8x512xf32>
    %324 = vector.extract_strided_slice %323 {offsets = [0, 0], sizes = [8, 384], strides = [1, 1]} : vector<8x512xf32> to vector<8x384xf32>
    %325 = arith.negf %324 : vector<8x384xf32>
    %326 = math.exp %325 : vector<8x384xf32>
    %cst_111 = arith.constant 1.000000e+00 : f32
    %327 = vector.broadcast %cst_111 : f32 to vector<8x384xf32>
    %328 = arith.addf %327, %326 : vector<8x384xf32>
    %329 = arith.divf %327, %328 : vector<8x384xf32>
    %330 = vector.extract_strided_slice %329 {offsets = [0, 0], sizes = [8, 128], strides = [1, 1]} : vector<8x384xf32> to vector<8x128xf32>
    %331 = vector.extract_strided_slice %329 {offsets = [0, 128], sizes = [8, 128], strides = [1, 1]} : vector<8x384xf32> to vector<8x128xf32>
    %332 = vector.extract_strided_slice %329 {offsets = [0, 256], sizes = [8, 128], strides = [1, 1]} : vector<8x384xf32> to vector<8x128xf32>
    %333 = vector.extract_strided_slice %323 {offsets = [0, 384], sizes = [8, 128], strides = [1, 1]} : vector<8x512xf32> to vector<8x128xf32>
    %334 = math.tanh %333 : vector<8x128xf32>
    %335 = arith.mulf %331, %317 : vector<8x128xf32>
    %336 = arith.mulf %330, %334 : vector<8x128xf32>
    %337 = arith.addf %335, %336 : vector<8x128xf32>
    %338 = math.tanh %337 : vector<8x128xf32>
    %339 = arith.mulf %332, %338 : vector<8x128xf32>
    %c56_112 = arith.constant 56 : index
    %c0_113 = arith.constant 0 : index
    %340 = vector.load %arg11[%c56_112, %c0_113] : memref<64x128xf32, #tpu.memory_space<vmem>>, vector<8x128xf32>
    tpu.vector_store %arg11[%c56_112, %c0_113], %339 {strides = array<i32>} : memref<64x128xf32, #tpu.memory_space<vmem>>, vector<8x128xf32>,
    %c0_114 = arith.constant 0 : index
    %c0_115 = arith.constant 0 : index
    %341 = vector.load %arg11[%c0_114, %c0_115] : memref<64x128xf32, #tpu.memory_space<vmem>>, vector<64x128xf32>
    %c0_116 = arith.constant 0 : index
    %c0_117 = arith.constant 0 : index
    %342 = vector.load %arg8[%c0_116, %c0_117] : memref<128x128xf32, #tpu.memory_space<vmem>>, vector<128x128xf32>
    %cst_118 = arith.constant dense<0.000000e+00> : vector<64x128xf32>
    %343 = tpu.matmul %341, %342, %cst_118 {dimension_numbers = #tpu.dot_dimension_numbers<[1], [0], [0], [1], [0, 0, 1, 1], [], []>} : vector<64x128xf32>, vector<128x128xf32>, vector<64x128xf32> -> vector<64x128xf32>
    %c0_119 = arith.constant 0 : index
    %c0_120 = arith.constant 0 : index
    %344 = vector.load %arg9[%c0_119, %c0_120] : memref<1x128xf32, #tpu.memory_space<vmem>>, vector<1x128xf32>
    %345 = vector.broadcast %344 : vector<1x128xf32> to vector<64x128xf32>
    %346 = arith.addf %343, %345 : vector<64x128xf32>
    %347 = vector.shape_cast %346 : vector<64x128xf32> to vector<8x8x128xf32>
    %cst_121 = arith.constant dense<0xFF800000> : vector<8x128xf32>
    %348 = vector.multi_reduction <maximumf>, %347, %cst_121 [0] : vector<8x8x128xf32> to vector<8x128xf32>
    %349 = vector.shape_cast %348 : vector<8x128xf32> to vector<1x8x128xf32>
    %350 = vector.broadcast %349 : vector<1x8x128xf32> to vector<8x8x128xf32>
    %351 = arith.subf %347, %350 : vector<8x8x128xf32>
    %352 = math.exp %351 : vector<8x8x128xf32>
    %cst_122 = arith.constant dense<0.000000e+00> : vector<8x128xf32>
    %353 = vector.multi_reduction <add>, %352, %cst_122 [0] : vector<8x8x128xf32> to vector<8x128xf32>
    %354 = vector.shape_cast %353 : vector<8x128xf32> to vector<1x8x128xf32>
    %355 = tpu.reciprocal %354 {approx = true} : vector<1x8x128xf32> -> vector<1x8x128xf32>
    %356 = vector.broadcast %355 : vector<1x8x128xf32> to vector<8x8x128xf32>
    %357 = arith.mulf %352, %356 : vector<8x8x128xf32>
    %c0_123 = arith.constant 0 : index
    %c0_124 = arith.constant 0 : index
    %c0_125 = arith.constant 0 : index
    %c0_126 = arith.constant 0 : index
    %358 = vector.load %arg10[%c0_123, %c0_124, %c0_125, %c0_126] : memref<1x8x8x128xf32, #tpu.memory_space<vmem>>, vector<1x8x8x128xf32>
    %359 = vector.shape_cast %358 : vector<1x8x8x128xf32> to vector<8x8x128xf32>
    %360 = vector.shape_cast %357 : vector<8x8x128xf32> to vector<1x8x8x128xf32>
    tpu.vector_store %arg10[%c0_123, %c0_124, %c0_125, %c0_126], %360 {strides = array<i32>} : memref<1x8x8x128xf32, #tpu.memory_space<vmem>>, vector<1x8x8x128xf32>,
    return
  }
  func.func @transform_0(%arg0: i32) -> (i32, i32, i32) {
    %c0_i32 = arith.constant 0 : i32
    %c0_i32_0 = arith.constant 0 : i32
    %c0_i32_1 = arith.constant 0 : i32
    return %arg0, %c0_i32, %c0_i32_0 : i32, i32, i32
  }
  func.func @transform_1(%arg0: i32) -> (i32, i32) {
    %c0_i32 = arith.constant 0 : i32
    %c0_i32_0 = arith.constant 0 : i32
    %c0_i32_1 = arith.constant 0 : i32
    return %c0_i32, %c0_i32_0 : i32, i32
  }
  func.func @transform_2(%arg0: i32) -> (i32, i32) {
    %c0_i32 = arith.constant 0 : i32
    %c0_i32_0 = arith.constant 0 : i32
    %c0_i32_1 = arith.constant 0 : i32
    return %c0_i32, %c0_i32_0 : i32, i32
  }
  func.func @transform_3(%arg0: i32) -> (i32, i32) {
    %c0_i32 = arith.constant 0 : i32
    %c0_i32_0 = arith.constant 0 : i32
    %c0_i32_1 = arith.constant 0 : i32
    return %c0_i32, %c0_i32_0 : i32, i32
  }
  func.func @transform_4(%arg0: i32) -> (i32, i32) {
    %c0_i32 = arith.constant 0 : i32
    %c0_i32_0 = arith.constant 0 : i32
    %c0_i32_1 = arith.constant 0 : i32
    return %c0_i32, %c0_i32_0 : i32, i32
  }
  func.func @transform_5(%arg0: i32) -> (i32, i32) {
    %c0_i32 = arith.constant 0 : i32
    %c0_i32_0 = arith.constant 0 : i32
    %c0_i32_1 = arith.constant 0 : i32
    return %c0_i32, %c0_i32_0 : i32, i32
  }
  func.func @transform_6(%arg0: i32) -> (i32, i32) {
    %c0_i32 = arith.constant 0 : i32
    %c0_i32_0 = arith.constant 0 : i32
    %c0_i32_1 = arith.constant 0 : i32
    return %c0_i32, %c0_i32_0 : i32, i32
  }
  func.func @transform_7(%arg0: i32) -> (i32, i32) {
    %c0_i32 = arith.constant 0 : i32
    %c0_i32_0 = arith.constant 0 : i32
    %c0_i32_1 = arith.constant 0 : i32
    return %c0_i32, %c0_i32_0 : i32, i32
  }
  func.func @transform_8(%arg0: i32) -> (i32, i32) {
    %c0_i32 = arith.constant 0 : i32
    %c0_i32_0 = arith.constant 0 : i32
    %c0_i32_1 = arith.constant 0 : i32
    return %c0_i32, %c0_i32_0 : i32, i32
  }
  func.func @transform_9(%arg0: i32) -> (i32, i32, i32, i32) {
    %c0_i32 = arith.constant 0 : i32
    %c0_i32_0 = arith.constant 0 : i32
    %c0_i32_1 = arith.constant 0 : i32
    %c0_i32_2 = arith.constant 0 : i32
    return %arg0, %c0_i32, %c0_i32_0, %c0_i32_1 : i32, i32, i32, i32
  }
}

</mosaic_0001>

<llo_original>
// kernel: tpu_custom_call.1
$region0: #{tpu_custom_call.1}
  #allocation0 [shape = 'u32[]', space=smem, size = 0x4, offset = 0x4, fixed_abs, tag = 'smem constant byte address 0x4 - core index']
  #allocation1 [shape = 'u32[144,128]{1,0:T(1,128)}', space=vmem, size = 0x12000, scoped, tag = 'internal scratch']
  #allocation2 [shape = 'f32[64,128]{1,0:T(8,128)}', space=vmem, size = 0x8000, scoped, tag = 'scratch operand']
  #allocation3 [shape = 'f32[64,512]{1,0:T(8,128)}', space=vmem, size = 0x20000, scoped, tag = 'scratch operand']
  %s0 = inlined_call_operand.vmem [shape: f32[1,64,16], index: 0, kind: input, shape index: {}]
  %s1 = inlined_call_operand.vmem [shape: f32[16,512], index: 1, kind: input, shape index: {}]
  %s2 = inlined_call_operand.hbm [shape: f32[128,512], index: 2, kind: input, shape index: {}]
  %s3 = inlined_call_operand.vmem [shape: f32[1,512], index: 3, kind: input, shape index: {}]
  %s4 = inlined_call_operand.hbm [shape: f32[128,512], index: 4, kind: input, shape index: {}]
  %s5 = inlined_call_operand.hbm [shape: f32[128,512], index: 5, kind: input, shape index: {}]
  %s6 = inlined_call_operand.vmem [shape: f32[1,512], index: 6, kind: input, shape index: {}]
  %s7 = inlined_call_operand.hbm [shape: f32[128,128], index: 7, kind: input, shape index: {}]
  %s8 = inlined_call_operand.vmem [shape: f32[1,128], index: 8, kind: input, shape index: {}]
  %s9 = inlined_call_operand.hbm [shape: f32[1,8,8,128], index: 9, kind: output, shape index: {}]
  %s10 = sld [smem:[#allocation0]]
  $region62: #{tpu_custom_call.1} parent=0
    _
  %s12 = ssub.s32 1, %s10
  %s13 = scalar_select 0, %s12, %s10
  $region1: #{tpu_custom_call.1} parent=0
    #allocation4 [shape = 'u8[262144]{0}', space=vmem, size = 0x40000, scoped, tag = 'input window, operand 2, single buffered']
    #allocation5 [shape = 's32[1]{0}', space=sflag, size = 0x4, scoped, tag = 'scoped memory for tpu_custom_call.1']
    #allocation6 [shape = 's32[1]{0}', space=sflag, size = 0x4, scoped, tag = 'scoped memory for tpu_custom_call.1']
    #allocation7 [shape = 'u8[262144]{0}', space=vmem, size = 0x40000, scoped, tag = 'input window, operand 4, single buffered']
    #allocation8 [shape = 's32[1]{0}', space=sflag, size = 0x4, scoped, tag = 'scoped memory for tpu_custom_call.1']
    #allocation9 [shape = 'u8[262144]{0}', space=vmem, size = 0x40000, scoped, tag = 'input window, operand 5, single buffered']
    #allocation10 [shape = 'u8[65536]{0}', space=vmem, size = 0x10000, scoped, tag = 'input window, operand 7, single buffered']
    #allocation11 [shape = 's32[1]{0}', space=sflag, size = 0x4, scoped, tag = 'scoped memory for tpu_custom_call.1']
    #allocation12 [shape = 'u8[32768]{0}', space=vmem, size = 0x8000, scoped, tag = 'output window, operand 0, single buffered']
    %14 = vsyncpa [#allocation5], 0
    %15 = vsyncpa [#allocation8], 0
    %16 = vsyncpa [#allocation11], 0
    %17 = vsyncpa [#allocation6], 0
    // Predicated region
    $region2: #{tpu_custom_call.1} parent=1 // pred_check
      _
    $region3: #{tpu_custom_call.1} parent=1 // pred_check_branch
      %19 = sbr.rel (0) target = $region5
    $region4: #{tpu_custom_call.1} parent=1 // pred_region
      _
    $region5: #{tpu_custom_call.1} parent=1 // pred_fallthru
      _
    // Predicated region
    $region6: #{tpu_custom_call.1} parent=1 // pred_check
      _
    $region7: #{tpu_custom_call.1} parent=1 // pred_check_branch
      %21 = sbr.rel (0) target = $region9
    $region8: #{tpu_custom_call.1} parent=1 // pred_region
      _
    $region9: #{tpu_custom_call.1} parent=1 // pred_fallthru
      _
    // Predicated region
    $region10: #{tpu_custom_call.1} parent=1 // pred_check
      _
    $region11: #{tpu_custom_call.1} parent=1 // pred_check_branch
      %23 = sbr.rel (0) target = $region13
    $region12: #{tpu_custom_call.1} parent=1 // pred_region
      %s25 = ssub.s32 8192, 8192
      %26 = vsyncadd [#allocation5], %s25
      %s27 = sshll.u32 [#allocation4], 4
      %s28 = int_to_ptr.vmem [resolvable:$true] %s27
      %33 = dma.hbm_to_vmem [thread:$0]  %s2, 8192, %s28, [#allocation5], 512, 512, 32
    $region13: #{tpu_custom_call.1} parent=1 // pred_fallthru
      _
    // Predicated region
    $region14: #{tpu_custom_call.1} parent=1 // pred_check
      _
    $region15: #{tpu_custom_call.1} parent=1 // pred_check_branch
      %35 = sbr.rel (0) target = $region17
    $region16: #{tpu_custom_call.1} parent=1 // pred_region
      _
    $region17: #{tpu_custom_call.1} parent=1 // pred_fallthru
      _
    // Predicated region
    $region18: #{tpu_custom_call.1} parent=1 // pred_check
      _
    $region19: #{tpu_custom_call.1} parent=1 // pred_check_branch
      %37 = sbr.rel (0) target = $region21
    $region20: #{tpu_custom_call.1} parent=1 // pred_region
      %s39 = ssub.s32 8192, 8192
      %40 = vsyncadd [#allocation8], %s39
      %s41 = sshll.u32 [#allocation7], 4
      %s42 = int_to_ptr.vmem [resolvable:$true] %s41
      %47 = dma.hbm_to_vmem [thread:$0]  %s4, 8192, %s42, [#allocation8], 512, 512, 32
    $region21: #{tpu_custom_call.1} parent=1 // pred_fallthru
      _
    // Predicated region
    $region22: #{tpu_custom_call.1} parent=1 // pred_check
      _
    $region23: #{tpu_custom_call.1} parent=1 // pred_check_branch
      %49 = sbr.rel (0) target = $region25
    $region24: #{tpu_custom_call.1} parent=1 // pred_region
      %s51 = ssub.s32 8192, 8192
      %52 = vsyncadd [#allocation8], %s51
      %s53 = sshll.u32 [#allocation9], 4
      %s54 = int_to_ptr.vmem [resolvable:$true] %s53
      %59 = dma.hbm_to_vmem [thread:$0]  %s5, 8192, %s54, [#allocation8], 512, 512, 32
    $region25: #{tpu_custom_call.1} parent=1 // pred_fallthru
      _
    // Predicated region
    $region26: #{tpu_custom_call.1} parent=1 // pred_check
      _
    $region27: #{tpu_custom_call.1} parent=1 // pred_check_branch
      %61 = sbr.rel (0) target = $region29
    $region28: #{tpu_custom_call.1} parent=1 // pred_region
      _
    $region29: #{tpu_custom_call.1} parent=1 // pred_fallthru
      _
    // Predicated region
    $region30: #{tpu_custom_call.1} parent=1 // pred_check
      _
    $region31: #{tpu_custom_call.1} parent=1 // pred_check_branch
      %63 = sbr.rel (0) target = $region33
    $region32: #{tpu_custom_call.1} parent=1 // pred_region
      %s65 = ssub.s32 2048, 2048
      %66 = vsyncadd [#allocation11], %s65
      %s67 = sshll.u32 [#allocation10], 4
      %s68 = int_to_ptr.vmem [resolvable:$true] %s67
      %73 = dma.hbm_to_vmem [thread:$0]  %s7, 2048, %s68, [#allocation11], 128, 128, 8
    $region33: #{tpu_custom_call.1} parent=1 // pred_fallthru
      _
    // Predicated region
    $region34: #{tpu_custom_call.1} parent=1 // pred_check
      _
    $region35: #{tpu_custom_call.1} parent=1 // pred_check_branch
      %75 = sbr.rel (0) target = $region37
    $region36: #{tpu_custom_call.1} parent=1 // pred_region
      _
    $region37: #{tpu_custom_call.1} parent=1 // pred_fallthru
      _
    // Predicated region
    $region38: #{tpu_custom_call.1} parent=1 // pred_check
      _
    $region39: #{tpu_custom_call.1} parent=1 // pred_check_branch
      %77 = sbr.rel (0) target = $region41
    $region40: #{tpu_custom_call.1} parent=1 // pred_region
      %78 = dma.done [#allocation5], 8192
    $region41: #{tpu_custom_call.1} parent=1 // pred_fallthru
      _
    // Predicated region
    $region42: #{tpu_custom_call.1} parent=1 // pred_check
      _
    $region43: #{tpu_custom_call.1} parent=1 // pred_check_branch
      %80 = sbr.rel (0) target = $region45
    $region44: #{tpu_custom_call.1} parent=1 // pred_region
      %81 = dma.done [#allocation8], 8192
    $region45: #{tpu_custom_call.1} parent=1 // pred_fallthru
      _
    // Predicated region
    $region46: #{tpu_custom_call.1} parent=1 // pred_check
      _
    $region47: #{tpu_custom_call.1} parent=1 // pred_check_branch
      %83 = sbr.rel (0) target = $region49
    $region48: #{tpu_custom_call.1} parent=1 // pred_region
      %84 = dma.done [#allocation8], 8192
    $region49: #{tpu_custom_call.1} parent=1 // pred_fallthru
      _
    // Predicated region
    $region50: #{tpu_custom_call.1} parent=1 // pred_check
      _
    $region51: #{tpu_custom_call.1} parent=1 // pred_check_branch
      %86 = sbr.rel (0) target = $region53
    $region52: #{tpu_custom_call.1} parent=1 // pred_region
      %87 = dma.done [#allocation11], 2048
    $region53: #{tpu_custom_call.1} parent=1 // pred_fallthru
      _
    %v88 = vld [vmem:[%s0] sm:$0xff]
    %v89 = vld [vmem:[%s0 + $0x8] sm:$0xff]
    %v90 = vld [vmem:[%s0 + $0x10] sm:$0xff]
    %v91 = vld [vmem:[%s0 + $0x18] sm:$0xff]
    %v92 = vld [vmem:[%s0 + $0x20] sm:$0xff]
    %v93 = vld [vmem:[%s0 + $0x28] sm:$0xff]
    %v94 = vld [vmem:[%s0 + $0x30] sm:$0xff]
    %v95 = vld [vmem:[%s0 + $0x38] sm:$0xff]
    %v96 = vld [vmem:[%s1] sm:$0xff]
    %v97 = vld [vmem:[%s1 + $0x8] sm:$0xff]
    %v98 = vld [vmem:[%s1 + $0x10] sm:$0xff]
    %v99 = vld [vmem:[%s1 + $0x18] sm:$0xff]
    %v100 = vld [vmem:[%s1 + $0x20] sm:$0xff]
    %v101 = vld [vmem:[%s1 + $0x28] sm:$0xff]
    %v102 = vld [vmem:[%s1 + $0x30] sm:$0xff]
    %v103 = vld [vmem:[%s1 + $0x38] sm:$0xff]
    %v104 = vld [vmem:[%s3] sm:$0xf]
    %v106 = vlaneseq
    %v107 = vshrl.u32 %v106, 7
    %v108 = vsub.s32 0, %v107
    %v109 = vrot.slane %v104, %v108
    %v110 = vlaneseq
    %v111 = vshrl.u32 %v110, 7
    %v112 = vsub.s32 1, %v111
    %v113 = vrot.slane %v104, %v112
    %v114 = vlaneseq
    %v115 = vshrl.u32 %v114, 7
    %v116 = vsub.s32 2, %v115
    %v117 = vrot.slane %v104, %v116
    %v118 = vlaneseq
    %v119 = vshrl.u32 %v118, 7
    %v120 = vsub.s32 3, %v119
    %v121 = vrot.slane %v104, %v120
    %vm126 = vcmask 130048
    %v128 = vsel %vm126, %v88, 0
    %v131 = vsel %vm126, %v89, 0
    %v134 = vsel %vm126, %v90, 0
    %v137 = vsel %vm126, %v91, 0
    %v140 = vsel %vm126, %v92, 0
    %v143 = vsel %vm126, %v93, 0
    %v146 = vsel %vm126, %v94, 0
    %v149 = vsel %vm126, %v95, 0
    %151 = vmatprep.subr.mxu0 %v97
    %152 = vmatpush1.msra.mxu0 %v96
    %153 = vmatprep.subr.mxu0 %v101
    %154 = vmatpush1.msra.mxu0 %v100
    %155 = vmatprep.subr.mxu0 0.0
    %156 = vmatpush1.msra.mxu0 0.0
    %157 = vmatprep.subr.mxu0 0.0
    %158 = vmatpush1.msra.mxu0 0.0
    %159 = vmatprep.subr.mxu0 0.0
    %160 = vmatpush1.msra.mxu0 0.0
    %161 = vmatprep.subr.mxu0 0.0
    %162 = vmatpush1.msra.mxu0 0.0
    %163 = vmatprep.subr.mxu0 0.0
    %164 = vmatpush1.msra.mxu0 0.0
    %165 = vmatprep.subr.mxu0 0.0
    %166 = vmatpush1.msra.mxu0 0.0
    %167 = vmatprep.subr.mxu0 0.0
    %168 = vmatpush1.msra.mxu0 0.0
    %169 = vmatprep.subr.mxu0 0.0
    %170 = vmatpush1.msra.mxu0 0.0
    %171 = vmatprep.subr.mxu0 0.0
    %172 = vmatpush1.msra.mxu0 0.0
    %173 = vmatprep.subr.mxu0 0.0
    %174 = vmatpush1.msra.mxu0 0.0
    %175 = vmatprep.subr.mxu0 0.0
    %176 = vmatpush1.msra.mxu0 0.0
    %177 = vmatprep.subr.mxu0 0.0
    %178 = vmatpush1.msra.mxu0 0.0
    %179 = vmatprep.subr.mxu0 0.0
    %180 = vmatpush1.msra.mxu0 0.0
    %181 = vmatprep.subr.mxu0 0.0
    %182 = vmatpush1.msra.mxu0 0.0
    %183 = vmatprep.subr.mxu0 0.0
    %184 = vmatpush1.msra.mxu0 0.0
    %185 = vmatprep.subr.mxu0 0.0
    %186 = vmatpush1.msra.mxu0 0.0
    %187 = vmatprep.subr.mxu0 0.0
    %188 = vmatpush1.msra.mxu0 0.0
    %189 = vmatprep.subr.mxu0 0.0
    %190 = vmatpush1.msra.mxu0 0.0
    %191 = vmatprep.subr.mxu0 0.0
    %192 = vmatpush1.msra.mxu0 0.0
    %193 = vmatprep.subr.mxu0 0.0
    %194 = vmatpush1.msra.mxu0 0.0
    %195 = vmatprep.subr.mxu0 0.0
    %196 = vmatpush1.msra.mxu0 0.0
    %197 = vmatprep.subr.mxu0 0.0
    %198 = vmatpush1.msra.mxu0 0.0
    %199 = vmatprep.subr.mxu0 0.0
    %200 = vmatpush1.msra.mxu0 0.0
    %201 = vmatprep.subr.mxu0 0.0
    %202 = vmatpush1.msra.mxu0 0.0
    %203 = vmatprep.subr.mxu0 0.0
    %204 = vmatpush1.msra.mxu0 0.0
    %205 = vmatprep.subr.mxu0 0.0
    %206 = vmatpush1.msra.mxu0 0.0
    %207 = vmatprep.subr.mxu0 0.0
    %208 = vmatpush1.msra.mxu0 0.0
    %209 = vmatprep.subr.mxu0 0.0
    %210 = vmatpush1.msra.mxu0 0.0
    %211 = vmatprep.subr.mxu0 0.0
    %212 = vmatpush1.msra.mxu0 0.0
    %213 = vmatprep.subr.mxu0 0.0
    %214 = vmatpush1.msra.mxu0 0.0
    %215 = vmatprep.mubr.f32.mxu0 0.0
    %216 = vmatmul.mubr.f32.gmra.mrb[0].mxu0 %v128
    %v217 = vpop.f32.mrb[0].mxu0
    %v218 = vadd.f32 %v109, %v217
    %v219 = vpop.f32.mrb[0].mxu0
    %v220 = vadd.f32 %v113, %v219
    %221 = vmatprep.mubr.f32.mxu0 0.0
    %222 = vmatmul.mubr.f32.gmra.mrb[0].mxu0 %v131
    %v223 = vpop.f32.mrb[0].mxu0
    %v224 = vadd.f32 %v109, %v223
    %v225 = vpop.f32.mrb[0].mxu0
    %v226 = vadd.f32 %v113, %v225
    %227 = vmatprep.mubr.f32.mxu0 0.0
    %228 = vmatmul.mubr.f32.gmra.mrb[0].mxu0 %v134
    %v229 = vpop.f32.mrb[0].mxu0
    %v230 = vadd.f32 %v109, %v229
    %v231 = vpop.f32.mrb[0].mxu0
    %v232 = vadd.f32 %v113, %v231
    %233 = vmatprep.mubr.f32.mxu0 0.0
    %234 = vmatmul.mubr.f32.gmra.mrb[0].mxu0 %v137
    %v235 = vpop.f32.mrb[0].mxu0
    %v236 = vadd.f32 %v109, %v235
    %v237 = vpop.f32.mrb[0].mxu0
    %v238 = vadd.f32 %v113, %v237
    %239 = vmatprep.mubr.f32.mxu0 0.0
    %240 = vmatmul.mubr.f32.gmra.mrb[0].mxu0 %v140
    %v241 = vpop.f32.mrb[0].mxu0
    %v242 = vadd.f32 %v109, %v241
    %v243 = vpop.f32.mrb[0].mxu0
    %v244 = vadd.f32 %v113, %v243
    %245 = vmatprep.mubr.f32.mxu0 0.0
    %246 = vmatmul.mubr.f32.gmra.mrb[0].mxu0 %v143
    %v247 = vpop.f32.mrb[0].mxu0
    %v248 = vadd.f32 %v109, %v247
    %v249 = vpop.f32.mrb[0].mxu0
    %v250 = vadd.f32 %v113, %v249
    %251 = vmatprep.mubr.f32.mxu0 0.0
    %252 = vmatmul.mubr.f32.gmra.mrb[0].mxu0 %v146
    %v253 = vpop.f32.mrb[0].mxu0
    %v254 = vadd.f32 %v109, %v253
    %v255 = vpop.f32.mrb[0].mxu0
    %v256 = vadd.f32 %v113, %v255
    %257 = vmatprep.mubr.f32.mxu0 0.0
    %258 = vmatmul.mubr.f32.gmra.mrb[0].mxu0 %v149
    %v259 = vpop.f32.mrb[0].mxu0
    %v260 = vadd.f32 %v109, %v259
    %v261 = vpop.f32.mrb[0].mxu0
    %v262 = vadd.f32 %v113, %v261
    %263 = vdwg.mxu0
    %264 = vmatprep.subr.mxu0 %v99
    %265 = vmatpush1.msra.mxu0 %v98
    %266 = vmatprep.subr.mxu0 %v103
    %267 = vmatpush1.msra.mxu0 %v102
    %268 = vmatprep.subr.mxu0 0.0
    %269 = vmatpush1.msra.mxu0 0.0
    %270 = vmatprep.subr.mxu0 0.0
    %271 = vmatpush1.msra.mxu0 0.0
    %272 = vmatprep.subr.mxu0 0.0
    %273 = vmatpush1.msra.mxu0 0.0
    %274 = vmatprep.subr.mxu0 0.0
    %275 = vmatpush1.msra.mxu0 0.0
    %276 = vmatprep.subr.mxu0 0.0
    %277 = vmatpush1.msra.mxu0 0.0
    %278 = vmatprep.subr.mxu0 0.0
    %279 = vmatpush1.msra.mxu0 0.0
    %280 = vmatprep.subr.mxu0 0.0
    %281 = vmatpush1.msra.mxu0 0.0
    %282 = vmatprep.subr.mxu0 0.0
    %283 = vmatpush1.msra.mxu0 0.0
    %284 = vmatprep.subr.mxu0 0.0
    %285 = vmatpush1.msra.mxu0 0.0
    %286 = vmatprep.subr.mxu0 0.0
    %287 = vmatpush1.msra.mxu0 0.0
    %288 = vmatprep.subr.mxu0 0.0
    %289 = vmatpush1.msra.mxu0 0.0
    %290 = vmatprep.subr.mxu0 0.0
    %291 = vmatpush1.msra.mxu0 0.0
    %292 = vmatprep.subr.mxu0 0.0
    %293 = vmatpush1.msra.mxu0 0.0
    %294 = vmatprep.subr.mxu0 0.0
    %295 = vmatpush1.msra.mxu0 0.0
    %296 = vmatprep.subr.mxu0 0.0
    %297 = vmatpush1.msra.mxu0 0.0
    %298 = vmatprep.subr.mxu0 0.0
    %299 = vmatpush1.msra.mxu0 0.0
    %300 = vmatprep.subr.mxu0 0.0
    %301 = vmatpush1.msra.mxu0 0.0
    %302 = vmatprep.subr.mxu0 0.0
    %303 = vmatpush1.msra.mxu0 0.0
    %304 = vmatprep.subr.mxu0 0.0
    %305 = vmatpush1.msra.mxu0 0.0
    %306 = vmatprep.subr.mxu0 0.0
    %307 = vmatpush1.msra.mxu0 0.0
    %308 = vmatprep.subr.mxu0 0.0
    %309 = vmatpush1.msra.mxu0 0.0
    %310 = vmatprep.subr.mxu0 0.0
    %311 = vmatpush1.msra.mxu0 0.0
    %312 = vmatprep.subr.mxu0 0.0
    %313 = vmatpush1.msra.mxu0 0.0
    %314 = vmatprep.subr.mxu0 0.0
    %315 = vmatpush1.msra.mxu0 0.0
    %316 = vmatprep.subr.mxu0 0.0
    %317 = vmatpush1.msra.mxu0 0.0
    %318 = vmatprep.subr.mxu0 0.0
    %319 = vmatpush1.msra.mxu0 0.0
    %320 = vmatprep.subr.mxu0 0.0
    %321 = vmatpush1.msra.mxu0 0.0
    %322 = vmatprep.subr.mxu0 0.0
    %323 = vmatpush1.msra.mxu0 0.0
    %324 = vmatprep.subr.mxu0 0.0
    %325 = vmatpush1.msra.mxu0 0.0
    %326 = vmatprep.subr.mxu0 0.0
    %327 = vmatpush1.msra.mxu0 0.0
    %328 = vmatprep.mubr.f32.mxu0 0.0
    %329 = vmatmul.mubr.f32.gmra.mrb[0].mxu0 %v128
    %v330 = vpop.f32.mrb[0].mxu0
    %v331 = vadd.f32 %v117, %v330
    %v332 = vpop.f32.mrb[0].mxu0
    %v333 = vadd.f32 %v121, %v332
    %334 = vmatprep.mubr.f32.mxu0 0.0
    %335 = vmatmul.mubr.f32.gmra.mrb[0].mxu0 %v131
    %v336 = vpop.f32.mrb[0].mxu0
    %v337 = vadd.f32 %v117, %v336
    %v338 = vpop.f32.mrb[0].mxu0
    %v339 = vadd.f32 %v121, %v338
    %340 = vmatprep.mubr.f32.mxu0 0.0
    %341 = vmatmul.mubr.f32.gmra.mrb[0].mxu0 %v134
    %v342 = vpop.f32.mrb[0].mxu0
    %v343 = vadd.f32 %v117, %v342
    %v344 = vpop.f32.mrb[0].mxu0
    %v345 = vadd.f32 %v121, %v344
    %346 = vmatprep.mubr.f32.mxu0 0.0
    %347 = vmatmul.mubr.f32.gmra.mrb[0].mxu0 %v137
    %v348 = vpop.f32.mrb[0].mxu0
    %v349 = vadd.f32 %v117, %v348
    %v350 = vpop.f32.mrb[0].mxu0
    %v351 = vadd.f32 %v121, %v350
    %352 = vmatprep.mubr.f32.mxu0 0.0
    %353 = vmatmul.mubr.f32.gmra.mrb[0].mxu0 %v140
    %v354 = vpop.f32.mrb[0].mxu0
    %v355 = vadd.f32 %v117, %v354
    %v356 = vpop.f32.mrb[0].mxu0
    %v357 = vadd.f32 %v121, %v356
    %358 = vmatprep.mubr.f32.mxu0 0.0
    %359 = vmatmul.mubr.f32.gmra.mrb[0].mxu0 %v143
    %v360 = vpop.f32.mrb[0].mxu0
    %v361 = vadd.f32 %v117, %v360
    %v362 = vpop.f32.mrb[0].mxu0
    %v363 = vadd.f32 %v121, %v362
    %364 = vmatprep.mubr.f32.mxu0 0.0
    %365 = vmatmul.mubr.f32.gmra.mrb[0].mxu0 %v146
    %v366 = vpop.f32.mrb[0].mxu0
    %v367 = vadd.f32 %v117, %v366
    %v368 = vpop.f32.mrb[0].mxu0
    %v369 = vadd.f32 %v121, %v368
    %370 = vmatprep.mubr.f32.mxu0 0.0
    %371 = vmatmul.mubr.f32.gmra.mrb[0].mxu0 %v149
    %v372 = vpop.f32.mrb[0].mxu0
    %v373 = vadd.f32 %v117, %v372
    %v374 = vpop.f32.mrb[0].mxu0
    %v375 = vadd.f32 %v121, %v374
    %376 = vdwg.mxu0
    %377 = vst [vmem:[#allocation3] sm:$0xff] %v218
    %378 = vst [vmem:[#allocation3 + $0x8] sm:$0xff] %v220
    %379 = vst [vmem:[#allocation3 + $0x10] sm:$0xff] %v331
    %380 = vst [vmem:[#allocation3 + $0x18] sm:$0xff] %v333
    %381 = vst [vmem:[#allocation3 + $0x20] sm:$0xff] %v224
    %382 = vst [vmem:[#allocation3 + $0x28] sm:$0xff] %v226
    %383 = vst [vmem:[#allocation3 + $0x30] sm:$0xff] %v337
    %384 = vst [vmem:[#allocation3 + $0x38] sm:$0xff] %v339
    %385 = vst [vmem:[#allocation3 + $0x40] sm:$0xff] %v230
    %386 = vst [vmem:[#allocation3 + $0x48] sm:$0xff] %v232
    %387 = vst [vmem:[#allocation3 + $0x50] sm:$0xff] %v343
    %388 = vst [vmem:[#allocation3 + $0x58] sm:$0xff] %v345
    %389 = vst [vmem:[#allocation3 + $0x60] sm:$0xff] %v236
    %390 = vst [vmem:[#allocation3 + $0x68] sm:$0xff] %v238
    %391 = vst [vmem:[#allocation3 + $0x70] sm:$0xff] %v349
    %392 = vst [vmem:[#allocation3 + $0x78] sm:$0xff] %v351
    %393 = vst [vmem:[#allocation3 + $0x80] sm:$0xff] %v242
    %394 = vst [vmem:[#allocation3 + $0x88] sm:$0xff] %v244
    %395 = vst [vmem:[#allocation3 + $0x90] sm:$0xff] %v355
    %396 = vst [vmem:[#allocation3 + $0x98] sm:$0xff] %v357
    %397 = vst [vmem:[#allocation3 + $0xa0] sm:$0xff] %v248
    %398 = vst [vmem:[#allocation3 + $0xa8] sm:$0xff] %v250
    %399 = vst [vmem:[#allocation3 + $0xb0] sm:$0xff] %v361
    %400 = vst [vmem:[#allocation3 + $0xb8] sm:$0xff] %v363
    %401 = vst [vmem:[#allocation3 + $0xc0] sm:$0xff] %v254
    %402 = vst [vmem:[#allocation3 + $0xc8] sm:$0xff] %v256
    %403 = vst [vmem:[#allocation3 + $0xd0] sm:$0xff] %v367
    %404 = vst [vmem:[#allocation3 + $0xd8] sm:$0xff] %v369
    %405 = vst [vmem:[#allocation3 + $0xe0] sm:$0xff] %v260
    %406 = vst [vmem:[#allocation3 + $0xe8] sm:$0xff] %v262
    %407 = vst [vmem:[#allocation3 + $0xf0] sm:$0xff] %v373
    %408 = vst [vmem:[#allocation3 + $0xf8] sm:$0xff] %v375
    %v409 = vld [vmem:[#allocation4] sm:$0xff]
    %v410 = vld [vmem:[#allocation4 + $0x8] sm:$0xff]
    %v411 = vld [vmem:[#allocation4 + $0x10] sm:$0xff]
    %v412 = vld [vmem:[#allocation4 + $0x18] sm:$0xff]
    %v413 = vld [vmem:[#allocation4 + $0x20] sm:$0xff]
    %v414 = vld [vmem:[#allocation4 + $0x28] sm:$0xff]
    %v415 = vld [vmem:[#allocation4 + $0x30] sm:$0xff]
    %v416 = vld [vmem:[#allocation4 + $0x38] sm:$0xff]
    %v417 = vld [vmem:[#allocation4 + $0x40] sm:$0xff]
    %v418 = vld [vmem:[#allocation4 + $0x48] sm:$0xff]
    %v419 = vld [vmem:[#allocation4 + $0x50] sm:$0xff]
    %v420 = vld [vmem:[#allocation4 + $0x58] sm:$0xff]
    %v421 = vld [vmem:[#allocation4 + $0x60] sm:$0xff]
    %v422 = vld [vmem:[#allocation4 + $0x68] sm:$0xff]
    %v423 = vld [vmem:[#allocation4 + $0x70] sm:$0xff]
    %v424 = vld [vmem:[#allocation4 + $0x78] sm:$0xff]
    %v425 = vld [vmem:[#allocation4 + $0x80] sm:$0xff]
    %v426 = vld [vmem:[#allocation4 + $0x88] sm:$0xff]
    %v427 = vld [vmem:[#allocation4 + $0x90] sm:$0xff]
    %v428 = vld [vmem:[#allocation4 + $0x98] sm:$0xff]
    %v429 = vld [vmem:[#allocation4 + $0xa0] sm:$0xff]
    %v430 = vld [vmem:[#allocation4 + $0xa8] sm:$0xff]
    %v431 = vld [vmem:[#allocation4 + $0xb0] sm:$0xff]
    %v432 = vld [vmem:[#allocation4 + $0xb8] sm:$0xff]
    %v433 = vld [vmem:[#allocation4 + $0xc0] sm:$0xff]
    %v434 = vld [vmem:[#allocation4 + $0xc8] sm:$0xff]
    %v435 = vld [vmem:[#allocation4 + $0xd0] sm:$0xff]
    %v436 = vld [vmem:[#allocation4 + $0xd8] sm:$0xff]
    %v437 = vld [vmem:[#allocation4 + $0xe0] sm:$0xff]
    %v438 = vld [vmem:[#allocation4 + $0xe8] sm:$0xff]
    %v439 = vld [vmem:[#allocation4 + $0xf0] sm:$0xff]
    %v440 = vld [vmem:[#allocation4 + $0xf8] sm:$0xff]
    %v441 = vld [vmem:[#allocation4 + $0x100] sm:$0xff]
    %v442 = vld [vmem:[#allocation4 + $0x108] sm:$0xff]
    %v443 = vld [vmem:[#allocation4 + $0x110] sm:$0xff]
    %v444 = vld [vmem:[#allocation4 + $0x118] sm:$0xff]
    %v445 = vld [vmem:[#allocation4 + $0x120] sm:$0xff]
    %v446 = vld [vmem:[#allocation4 + $0x128] sm:$0xff]
    %v447 = vld [vmem:[#allocation4 + $0x130] sm:$0xff]
    %v448 = vld [vmem:[#allocation4 + $0x138] sm:$0xff]
    %v449 = vld [vmem:[#allocation4 + $0x140] sm:$0xff]
    %v450 = vld [vmem:[#allocation4 + $0x148] sm:$0xff]
    %v451 = vld [vmem:[#allocation4 + $0x150] sm:$0xff]
    %v452 = vld [vmem:[#allocation4 + $0x158] sm:$0xff]
    %v453 = vld [vmem:[#allocation4 + $0x160] sm:$0xff]
    %v454 = vld [vmem:[#allocation4 + $0x168] sm:$0xff]
    %v455 = vld [vmem:[#allocation4 + $0x170] sm:$0xff]
    %v456 = vld [vmem:[#allocation4 + $0x178] sm:$0xff]
    %v457 = vld [vmem:[#allocation4 + $0x180] sm:$0xff]
    %v458 = vld [vmem:[#allocation4 + $0x188] sm:$0xff]
    %v459 = vld [vmem:[#allocation4 + $0x190] sm:$0xff]
    %v460 = vld [vmem:[#allocation4 + $0x198] sm:$0xff]
    %v461 = vld [vmem:[#allocation4 + $0x1a0] sm:$0xff]
    %v462 = vld [vmem:[#allocation4 + $0x1a8] sm:$0xff]
    %v463 = vld [vmem:[#allocation4 + $0x1b0] sm:$0xff]
    %v464 = vld [vmem:[#allocation4 + $0x1b8] sm:$0xff]
    %v465 = vld [vmem:[#allocation4 + $0x1c0] sm:$0xff]
    %v466 = vld [vmem:[#allocation4 + $0x1c8] sm:$0xff]
    %v467 = vld [vmem:[#allocation4 + $0x1d0] sm:$0xff]
    %v468 = vld [vmem:[#allocation4 + $0x1d8] sm:$0xff]
    %v469 = vld [vmem:[#allocation4 + $0x1e0] sm:$0xff]
    %v470 = vld [vmem:[#allocation4 + $0x1e8] sm:$0xff]
    %v471 = vld [vmem:[#allocation4 + $0x1f0] sm:$0xff]
    %v472 = vld [vmem:[#allocation4 + $0x1f8] sm:$0xff]
    %v473 = vld [vmem:[#allocation3] sm:$0xff]
    %v474 = vld [vmem:[#allocation3 + $0x8] sm:$0xff]
    %v475 = vld [vmem:[#allocation3 + $0x10] sm:$0xff]
    %v476 = vld [vmem:[#allocation3 + $0x18] sm:$0xff]
    %477 = vmatprep.subr.mxu0 %v410
    %478 = vmatpush1.msra.mxu0 %v409
    %479 = vmatprep.subr.mxu0 %v414
    %480 = vmatpush1.msra.mxu0 %v413
    %481 = vmatprep.subr.mxu0 %v418
    %482 = vmatpush1.msra.mxu0 %v417
    %483 = vmatprep.subr.mxu0 %v422
    %484 = vmatpush1.msra.mxu0 %v421
    %485 = vmatprep.subr.mxu0 %v426
    %486 = vmatpush1.msra.mxu0 %v425
    %487 = vmatprep.subr.mxu0 %v430
    %488 = vmatpush1.msra.mxu0 %v429
    %489 = vmatprep.subr.mxu0 %v434
    %490 = vmatpush1.msra.mxu0 %v433
    %491 = vmatprep.subr.mxu0 %v438
    %492 = vmatpush1.msra.mxu0 %v437
    %493 = vmatprep.subr.mxu0 %v442
    %494 = vmatpush1.msra.mxu0 %v441
    %495 = vmatprep.subr.mxu0 %v446
    %496 = vmatpush1.msra.mxu0 %v445
    %497 = vmatprep.subr.mxu0 %v450
    %498 = vmatpush1.msra.mxu0 %v449
    %499 = vmatprep.subr.mxu0 %v454
    %500 = vmatpush1.msra.mxu0 %v453
    %501 = vmatprep.subr.mxu0 %v458
    %502 = vmatpush1.msra.mxu0 %v457
    %503 = vmatprep.subr.mxu0 %v462
    %504 = vmatpush1.msra.mxu0 %v461
    %505 = vmatprep.subr.mxu0 %v466
    %506 = vmatpush1.msra.mxu0 %v465
    %507 = vmatprep.subr.mxu0 %v470
    %508 = vmatpush1.msra.mxu0 %v469
    %509 = vmatprep.subr.mxu0 0.0
    %510 = vmatpush1.msra.mxu0 0.0
    %511 = vmatprep.subr.mxu0 0.0
    %512 = vmatpush1.msra.mxu0 0.0
    %513 = vmatprep.subr.mxu0 0.0
    %514 = vmatpush1.msra.mxu0 0.0
    %515 = vmatprep.subr.mxu0 0.0
    %516 = vmatpush1.msra.mxu0 0.0
    %517 = vmatprep.subr.mxu0 0.0
    %518 = vmatpush1.msra.mxu0 0.0
    %519 = vmatprep.subr.mxu0 0.0
    %520 = vmatpush1.msra.mxu0 0.0
    %521 = vmatprep.subr.mxu0 0.0
    %522 = vmatpush1.msra.mxu0 0.0
    %523 = vmatprep.subr.mxu0 0.0
    %524 = vmatpush1.msra.mxu0 0.0
    %525 = vmatprep.subr.mxu0 0.0
    %526 = vmatpush1.msra.mxu0 0.0
    %527 = vmatprep.subr.mxu0 0.0
    %528 = vmatpush1.msra.mxu0 0.0
    %529 = vmatprep.subr.mxu0 0.0
    %530 = vmatpush1.msra.mxu0 0.0
    %531 = vmatprep.subr.mxu0 0.0
    %532 = vmatpush1.msra.mxu0 0.0
    %533 = vmatprep.subr.mxu0 0.0
    %534 = vmatpush1.msra.mxu0 0.0
    %535 = vmatprep.subr.mxu0 0.0
    %536 = vmatpush1.msra.mxu0 0.0
    %537 = vmatprep.subr.mxu0 0.0
    %538 = vmatpush1.msra.mxu0 0.0
    %539 = vmatprep.subr.mxu0 0.0
    %540 = vmatpush1.msra.mxu0 0.0
    %541 = vmatprep.mubr.f32.mxu0 0.0
    %542 = vmatmul.mubr.f32.gmra.mrb[0].mxu0 0.0
    %v543 = vpop.f32.mrb[0].mxu0
    %v544 = vadd.f32 0.0, %v543
    %v545 = vpop.f32.mrb[0].mxu0
    %v546 = vadd.f32 0.0, %v545
    %547 = vdwg.mxu0
    %548 = vmatprep.subr.mxu0 %v412
    %549 = vmatpush1.msra.mxu0 %v411
    %550 = vmatprep.subr.mxu0 %v416
    %551 = vmatpush1.msra.mxu0 %v415
    %552 = vmatprep.subr.mxu0 %v420
    %553 = vmatpush1.msra.mxu0 %v419
    %554 = vmatprep.subr.mxu0 %v424
    %555 = vmatpush1.msra.mxu0 %v423
    %556 = vmatprep.subr.mxu0 %v428
    %557 = vmatpush1.msra.mxu0 %v427
    %558 = vmatprep.subr.mxu0 %v432
    %559 = vmatpush1.msra.mxu0 %v431
    %560 = vmatprep.subr.mxu0 %v436
    %561 = vmatpush1.msra.mxu0 %v435
    %562 = vmatprep.subr.mxu0 %v440
    %563 = vmatpush1.msra.mxu0 %v439
    %564 = vmatprep.subr.mxu0 %v444
    %565 = vmatpush1.msra.mxu0 %v443
    %566 = vmatprep.subr.mxu0 %v448
    %567 = vmatpush1.msra.mxu0 %v447
    %568 = vmatprep.subr.mxu0 %v452
    %569 = vmatpush1.msra.mxu0 %v451
    %570 = vmatprep.subr.mxu0 %v456
    %571 = vmatpush1.msra.mxu0 %v455
    %572 = vmatprep.subr.mxu0 %v460
    %573 = vmatpush1.msra.mxu0 %v459
    %574 = vmatprep.subr.mxu0 %v464
    %575 = vmatpush1.msra.mxu0 %v463
    %576 = vmatprep.subr.mxu0 %v468
    %577 = vmatpush1.msra.mxu0 %v467
    %578 = vmatprep.subr.mxu0 %v472
    %579 = vmatpush1.msra.mxu0 %v471
    %580 = vmatprep.subr.mxu0 0.0
    %581 = vmatpush1.msra.mxu0 0.0
    %582 = vmatprep.subr.mxu0 0.0
    %583 = vmatpush1.msra.mxu0 0.0
    %584 = vmatprep.subr.mxu0 0.0
    %585 = vmatpush1.msra.mxu0 0.0
    %586 = vmatprep.subr.mxu0 0.0
    %587 = vmatpush1.msra.mxu0 0.0
    %588 = vmatprep.subr.mxu0 0.0
    %589 = vmatpush1.msra.mxu0 0.0
    %590 = vmatprep.subr.mxu0 0.0
    %591 = vmatpush1.msra.mxu0 0.0
    %592 = vmatprep.subr.mxu0 0.0
    %593 = vmatpush1.msra.mxu0 0.0
    %594 = vmatprep.subr.mxu0 0.0
    %595 = vmatpush1.msra.mxu0 0.0
    %596 = vmatprep.subr.mxu0 0.0
    %597 = vmatpush1.msra.mxu0 0.0
    %598 = vmatprep.subr.mxu0 0.0
    %599 = vmatpush1.msra.mxu0 0.0
    %600 = vmatprep.subr.mxu0 0.0
    %601 = vmatpush1.msra.mxu0 0.0
    %602 = vmatprep.subr.mxu0 0.0
    %603 = vmatpush1.msra.mxu0 0.0
    %604 = vmatprep.subr.mxu0 0.0
    %605 = vmatpush1.msra.mxu0 0.0
    %606 = vmatprep.subr.mxu0 0.0
    %607 = vmatpush1.msra.mxu0 0.0
    %608 = vmatprep.subr.mxu0 0.0
    %609 = vmatpush1.msra.mxu0 0.0
    %610 = vmatprep.subr.mxu0 0.0
    %611 = vmatpush1.msra.mxu0 0.0
    %612 = vmatprep.mubr.f32.mxu0 0.0
    %613 = vmatmul.mubr.f32.gmra.mrb[0].mxu0 0.0
    %v614 = vpop.f32.mrb[0].mxu0
    %v615 = vadd.f32 0.0, %v614
    %v616 = vpop.f32.mrb[0].mxu0
    %v617 = vadd.f32 0.0, %v616
    %618 = vdwg.mxu0
    %v619 = vadd.f32 %v473, %v544
    %v620 = vadd.f32 %v474, %v546
    %v621 = vadd.f32 %v475, %v615
    %v622 = vadd.f32 %v476, %v617
    %v623 = vxor.u32 %v619, 2147483648
    %v624 = vxor.u32 %v620, 2147483648
    %v625 = vxor.u32 %v621, 2147483648
    %v626 = vmul.f32 %v623, 1.442695
    %v627 = vpow.pop %v626
    %v628 = vmul.f32 %v624, 1.442695
    %v629 = vpow.pop %v628
    %v630 = vmul.f32 %v625, 1.442695
    %v631 = vpow.pop %v630
    %v632 = vadd.f32 %v627, 1.0
    %v633 = vadd.f32 %v629, 1.0
    %v634 = vadd.f32 %v631, 1.0
    %v635 = vrcp.pop %v632
    %v636 = vmul.f32 1.0, %v635
    %v637 = vrcp.pop %v633
    %v638 = vmul.f32 1.0, %v637
    %v639 = vrcp.pop %v634
    %v640 = vmul.f32 1.0, %v639
    %v641 = vtanh.pop %v622
    %v642 = vmul.f32 %v638, 0.0
    %v643 = vmul.f32 %v636, %v641
    %v644 = vadd.f32 %v642, %v643
    %v645 = vtanh.pop %v644
    %v646 = vmul.f32 %v640, %v645
    %647 = vst [vmem:[#allocation2] sm:$0xff] %v646
    %v648 = vld [vmem:[#allocation3 + $0x20] sm:$0xff]
    %v649 = vld [vmem:[#allocation3 + $0x28] sm:$0xff]
    %v650 = vld [vmem:[#allocation3 + $0x30] sm:$0xff]
    %v651 = vld [vmem:[#allocation3 + $0x38] sm:$0xff]
    %652 = vmatprep.subr.mxu0 %v410
    %653 = vmatpush1.msra.mxu0 %v409
    %654 = vmatprep.subr.mxu0 %v414
    %655 = vmatpush1.msra.mxu0 %v413
    %656 = vmatprep.subr.mxu0 %v418
    %657 = vmatpush1.msra.mxu0 %v417
    %658 = vmatprep.subr.mxu0 %v422
    %659 = vmatpush1.msra.mxu0 %v421
    %660 = vmatprep.subr.mxu0 %v426
    %661 = vmatpush1.msra.mxu0 %v425
    %662 = vmatprep.subr.mxu0 %v430
    %663 = vmatpush1.msra.mxu0 %v429
    %664 = vmatprep.subr.mxu0 %v434
    %665 = vmatpush1.msra.mxu0 %v433
    %666 = vmatprep.subr.mxu0 %v438
    %667 = vmatpush1.msra.mxu0 %v437
    %668 = vmatprep.subr.mxu0 %v442
    %669 = vmatpush1.msra.mxu0 %v441
    %670 = vmatprep.subr.mxu0 %v446
    %671 = vmatpush1.msra.mxu0 %v445
    %672 = vmatprep.subr.mxu0 %v450
    %673 = vmatpush1.msra.mxu0 %v449
    %674 = vmatprep.subr.mxu0 %v454
    %675 = vmatpush1.msra.mxu0 %v453
    %676 = vmatprep.subr.mxu0 %v458
    %677 = vmatpush1.msra.mxu0 %v457
    %678 = vmatprep.subr.mxu0 %v462
    %679 = vmatpush1.msra.mxu0 %v461
    %680 = vmatprep.subr.mxu0 %v466
    %681 = vmatpush1.msra.mxu0 %v465
    %682 = vmatprep.subr.mxu0 %v470
    %683 = vmatpush1.msra.mxu0 %v469
    %684 = vmatprep.subr.mxu0 0.0
    %685 = vmatpush1.msra.mxu0 0.0
    %686 = vmatprep.subr.mxu0 0.0
    %687 = vmatpush1.msra.mxu0 0.0
    %688 = vmatprep.subr.mxu0 0.0
    %689 = vmatpush1.msra.mxu0 0.0
    %690 = vmatprep.subr.mxu0 0.0
    %691 = vmatpush1.msra.mxu0 0.0
    %692 = vmatprep.subr.mxu0 0.0
    %693 = vmatpush1.msra.mxu0 0.0
    %694 = vmatprep.subr.mxu0 0.0
    %695 = vmatpush1.msra.mxu0 0.0
    %696 = vmatprep.subr.mxu0 0.0
    %697 = vmatpush1.msra.mxu0 0.0
    %698 = vmatprep.subr.mxu0 0.0
    %699 = vmatpush1.msra.mxu0 0.0
    %700 = vmatprep.subr.mxu0 0.0
    %701 = vmatpush1.msra.mxu0 0.0
    %702 = vmatprep.subr.mxu0 0.0
    %703 = vmatpush1.msra.mxu0 0.0
    %704 = vmatprep.subr.mxu0 0.0
    %705 = vmatpush1.msra.mxu0 0.0
    %706 = vmatprep.subr.mxu0 0.0
    %707 = vmatpush1.msra.mxu0 0.0
    %708 = vmatprep.subr.mxu0 0.0
    %709 = vmatpush1.msra.mxu0 0.0
    %710 = vmatprep.subr.mxu0 0.0
    %711 = vmatpush1.msra.mxu0 0.0
    %712 = vmatprep.subr.mxu0 0.0
    %713 = vmatpush1.msra.mxu0 0.0
    %714 = vmatprep.subr.mxu0 0.0
    %715 = vmatpush1.msra.mxu0 0.0
    %716 = vmatprep.mubr.f32.mxu0 0.0
    %717 = vmatmul.mubr.f32.gmra.mrb[0].mxu0 %v646
    %v718 = vpop.f32.mrb[0].mxu0
    %v719 = vadd.f32 0.0, %v718
    %v720 = vpop.f32.mrb[0].mxu0
    %v721 = vadd.f32 0.0, %v720
    %722 = vdwg.mxu0
    %723 = vmatprep.subr.mxu0 %v412
    %724 = vmatpush1.msra.mxu0 %v411
    %725 = vmatprep.subr.mxu0 %v416
    %726 = vmatpush1.msra.mxu0 %v415
    %727 = vmatprep.subr.mxu0 %v420
    %728 = vmatpush1.msra.mxu0 %v419
    %729 = vmatprep.subr.mxu0 %v424
    %730 = vmatpush1.msra.mxu0 %v423
    %731 = vmatprep.subr.mxu0 %v428
    %732 = vmatpush1.msra.mxu0 %v427
    %733 = vmatprep.subr.mxu0 %v432
    %734 = vmatpush1.msra.mxu0 %v431
    %735 = vmatprep.subr.mxu0 %v436
    %736 = vmatpush1.msra.mxu0 %v435
    %737 = vmatprep.subr.mxu0 %v440
    %738 = vmatpush1.msra.mxu0 %v439
    %739 = vmatprep.subr.mxu0 %v444
    %740 = vmatpush1.msra.mxu0 %v443
    %741 = vmatprep.subr.mxu0 %v448
    %742 = vmatpush1.msra.mxu0 %v447
    %743 = vmatprep.subr.mxu0 %v452
    %744 = vmatpush1.msra.mxu0 %v451
    %745 = vmatprep.subr.mxu0 %v456
    %746 = vmatpush1.msra.mxu0 %v455
    %747 = vmatprep.subr.mxu0 %v460
    %748 = vmatpush1.msra.mxu0 %v459
    %749 = vmatprep.subr.mxu0 %v464
    %750 = vmatpush1.msra.mxu0 %v463
    %751 = vmatprep.subr.mxu0 %v468
    %752 = vmatpush1.msra.mxu0 %v467
    %753 = vmatprep.subr.mxu0 %v472
    %754 = vmatpush1.msra.mxu0 %v471
    %755 = vmatprep.subr.mxu0 0.0
    %756 = vmatpush1.msra.mxu0 0.0
    %757 = vmatprep.subr.mxu0 0.0
    %758 = vmatpush1.msra.mxu0 0.0
    %759 = vmatprep.subr.mxu0 0.0
    %760 = vmatpush1.msra.mxu0 0.0
    %761 = vmatprep.subr.mxu0 0.0
    %762 = vmatpush1.msra.mxu0 0.0
    %763 = vmatprep.subr.mxu0 0.0
    %764 = vmatpush1.msra.mxu0 0.0
    %765 = vmatprep.subr.mxu0 0.0
    %766 = vmatpush1.msra.mxu0 0.0
    %767 = vmatprep.subr.mxu0 0.0
    %768 = vmatpush1.msra.mxu0 0.0
    %769 = vmatprep.subr.mxu0 0.0
    %770 = vmatpush1.msra.mxu0 0.0
    %771 = vmatprep.subr.mxu0 0.0
    %772 = vmatpush1.msra.mxu0 0.0
    %773 = vmatprep.subr.mxu0 0.0
    %774 = vmatpush1.msra.mxu0 0.0
    %775 = vmatprep.subr.mxu0 0.0
    %776 = vmatpush1.msra.mxu0 0.0
    %777 = vmatprep.subr.mxu0 0.0
    %778 = vmatpush1.msra.mxu0 0.0
    %779 = vmatprep.subr.mxu0 0.0
    %780 = vmatpush1.msra.mxu0 0.0
    %781 = vmatprep.subr.mxu0 0.0
    %782 = vmatpush1.msra.mxu0 0.0
    %783 = vmatprep.subr.mxu0 0.0
    %784 = vmatpush1.msra.mxu0 0.0
    %785 = vmatprep.subr.mxu0 0.0
    %786 = vmatpush1.msra.mxu0 0.0
    %787 = vmatprep.mubr.f32.mxu0 0.0
    %788 = vmatmul.mubr.f32.gmra.mrb[0].mxu0 %v646
    %v789 = vpop.f32.mrb[0].mxu0
    %v790 = vadd.f32 0.0, %v789
    %v791 = vpop.f32.mrb[0].mxu0
    %v792 = vadd.f32 0.0, %v791
    %793 = vdwg.mxu0
    %v794 = vadd.f32 %v648, %v719
    %v795 = vadd.f32 %v649, %v721
    %v796 = vadd.f32 %v650, %v790
    %v797 = vadd.f32 %v651, %v792
    %v798 = vxor.u32 %v794, 2147483648
    %v799 = vxor.u32 %v795, 2147483648
    %v800 = vxor.u32 %v796, 2147483648
    %v801 = vmul.f32 %v798, 1.442695
    %v802 = vpow.pop %v801
    %v803 = vmul.f32 %v799, 1.442695
    %v804 = vpow.pop %v803
    %v805 = vmul.f32 %v800, 1.442695
    %v806 = vpow.pop %v805
    %v807 = vadd.f32 %v802, 1.0
    %v808 = vadd.f32 %v804, 1.0
    %v809 = vadd.f32 %v806, 1.0
    %v810 = vrcp.pop %v807
    %v811 = vmul.f32 1.0, %v810
    %v812 = vrcp.pop %v808
    %v813 = vmul.f32 1.0, %v812
    %v814 = vrcp.pop %v809
    %v815 = vmul.f32 1.0, %v814
    %v816 = vtanh.pop %v797
    %v817 = vmul.f32 %v813, %v644
    %v818 = vmul.f32 %v811, %v816
    %v819 = vadd.f32 %v817, %v818
    %v820 = vtanh.pop %v819
    %v821 = vmul.f32 %v815, %v820
    %822 = vst [vmem:[#allocation2 + $0x8] sm:$0xff] %v821
    %v823 = vld [vmem:[#allocation3 + $0x40] sm:$0xff]
    %v824 = vld [vmem:[#allocation3 + $0x48] sm:$0xff]
    %v825 = vld [vmem:[#allocation3 + $0x50] sm:$0xff]
    %v826 = vld [vmem:[#allocation3 + $0x58] sm:$0xff]
    %827 = vmatprep.subr.mxu0 %v410
    %828 = vmatpush1.msra.mxu0 %v409
    %829 = vmatprep.subr.mxu0 %v414
    %830 = vmatpush1.msra.mxu0 %v413
    %831 = vmatprep.subr.mxu0 %v418
    %832 = vmatpush1.msra.mxu0 %v417
    %833 = vmatprep.subr.mxu0 %v422
    %834 = vmatpush1.msra.mxu0 %v421
    %835 = vmatprep.subr.mxu0 %v426
    %836 = vmatpush1.msra.mxu0 %v425
    %837 = vmatprep.subr.mxu0 %v430
    %838 = vmatpush1.msra.mxu0 %v429
    %839 = vmatprep.subr.mxu0 %v434
    %840 = vmatpush1.msra.mxu0 %v433
    %841 = vmatprep.subr.mxu0 %v438
    %842 = vmatpush1.msra.mxu0 %v437
    %843 = vmatprep.subr.mxu0 %v442
    %844 = vmatpush1.msra.mxu0 %v441
    %845 = vmatprep.subr.mxu0 %v446
    %846 = vmatpush1.msra.mxu0 %v445
    %847 = vmatprep.subr.mxu0 %v450
    %848 = vmatpush1.msra.mxu0 %v449
    %849 = vmatprep.subr.mxu0 %v454
    %850 = vmatpush1.msra.mxu0 %v453
    %851 = vmatprep.subr.mxu0 %v458
    %852 = vmatpush1.msra.mxu0 %v457
    %853 = vmatprep.subr.mxu0 %v462
    %854 = vmatpush1.msra.mxu0 %v461
    %855 = vmatprep.subr.mxu0 %v466
    %856 = vmatpush1.msra.mxu0 %v465
    %857 = vmatprep.subr.mxu0 %v470
    %858 = vmatpush1.msra.mxu0 %v469
    %859 = vmatprep.subr.mxu0 0.0
    %860 = vmatpush1.msra.mxu0 0.0
    %861 = vmatprep.subr.mxu0 0.0
    %862 = vmatpush1.msra.mxu0 0.0
    %863 = vmatprep.subr.mxu0 0.0
    %864 = vmatpush1.msra.mxu0 0.0
    %865 = vmatprep.subr.mxu0 0.0
    %866 = vmatpush1.msra.mxu0 0.0
    %867 = vmatprep.subr.mxu0 0.0
    %868 = vmatpush1.msra.mxu0 0.0
    %869 = vmatprep.subr.mxu0 0.0
    %870 = vmatpush1.msra.mxu0 0.0
    %871 = vmatprep.subr.mxu0 0.0
    %872 = vmatpush1.msra.mxu0 0.0
    %873 = vmatprep.subr.mxu0 0.0
    %874 = vmatpush1.msra.mxu0 0.0
    %875 = vmatprep.subr.mxu0 0.0
    %876 = vmatpush1.msra.mxu0 0.0
    %877 = vmatprep.subr.mxu0 0.0
    %878 = vmatpush1.msra.mxu0 0.0
    %879 = vmatprep.subr.mxu0 0.0
    %880 = vmatpush1.msra.mxu0 0.0
    %881 = vmatprep.subr.mxu0 0.0
    %882 = vmatpush1.msra.mxu0 0.0
    %883 = vmatprep.subr.mxu0 0.0
    %884 = vmatpush1.msra.mxu0 0.0
    %885 = vmatprep.subr.mxu0 0.0
    %886 = vmatpush1.msra.mxu0 0.0
    %887 = vmatprep.subr.mxu0 0.0
    %888 = vmatpush1.msra.mxu0 0.0
    %889 = vmatprep.subr.mxu0 0.0
    %890 = vmatpush1.msra.mxu0 0.0
    %891 = vmatprep.mubr.f32.mxu0 0.0
    %892 = vmatmul.mubr.f32.gmra.mrb[0].mxu0 %v821
    %v893 = vpop.f32.mrb[0].mxu0
    %v894 = vadd.f32 0.0, %v893
    %v895 = vpop.f32.mrb[0].mxu0
    %v896 = vadd.f32 0.0, %v895
    %897 = vdwg.mxu0
    %898 = vmatprep.subr.mxu0 %v412
    %899 = vmatpush1.msra.mxu0 %v411
    %900 = vmatprep.subr.mxu0 %v416
    %901 = vmatpush1.msra.mxu0 %v415
    %902 = vmatprep.subr.mxu0 %v420
    %903 = vmatpush1.msra.mxu0 %v419
    %904 = vmatprep.subr.mxu0 %v424
    %905 = vmatpush1.msra.mxu0 %v423
    %906 = vmatprep.subr.mxu0 %v428
    %907 = vmatpush1.msra.mxu0 %v427
    %908 = vmatprep.subr.mxu0 %v432
    %909 = vmatpush1.msra.mxu0 %v431
    %910 = vmatprep.subr.mxu0 %v436
    %911 = vmatpush1.msra.mxu0 %v435
    %912 = vmatprep.subr.mxu0 %v440
    %913 = vmatpush1.msra.mxu0 %v439
    %914 = vmatprep.subr.mxu0 %v444
    %915 = vmatpush1.msra.mxu0 %v443
    %916 = vmatprep.subr.mxu0 %v448
    %917 = vmatpush1.msra.mxu0 %v447
    %918 = vmatprep.subr.mxu0 %v452
    %919 = vmatpush1.msra.mxu0 %v451
    %920 = vmatprep.subr.mxu0 %v456
    %921 = vmatpush1.msra.mxu0 %v455
    %922 = vmatprep.subr.mxu0 %v460
    %923 = vmatpush1.msra.mxu0 %v459
    %924 = vmatprep.subr.mxu0 %v464
    %925 = vmatpush1.msra.mxu0 %v463
    %926 = vmatprep.subr.mxu0 %v468
    %927 = vmatpush1.msra.mxu0 %v467
    %928 = vmatprep.subr.mxu0 %v472
    %929 = vmatpush1.msra.mxu0 %v471
    %930 = vmatprep.subr.mxu0 0.0
    %931 = vmatpush1.msra.mxu0 0.0
    %932 = vmatprep.subr.mxu0 0.0
    %933 = vmatpush1.msra.mxu0 0.0
    %934 = vmatprep.subr.mxu0 0.0
    %935 = vmatpush1.msra.mxu0 0.0
    %936 = vmatprep.subr.mxu0 0.0
    %937 = vmatpush1.msra.mxu0 0.0
    %938 = vmatprep.subr.mxu0 0.0
    %939 = vmatpush1.msra.mxu0 0.0
    %940 = vmatprep.subr.mxu0 0.0
    %941 = vmatpush1.msra.mxu0 0.0
    %942 = vmatprep.subr.mxu0 0.0
    %943 = vmatpush1.msra.mxu0 0.0
    %944 = vmatprep.subr.mxu0 0.0
    %945 = vmatpush1.msra.mxu0 0.0
    %946 = vmatprep.subr.mxu0 0.0
    %947 = vmatpush1.msra.mxu0 0.0
    %948 = vmatprep.subr.mxu0 0.0
    %949 = vmatpush1.msra.mxu0 0.0
    %950 = vmatprep.subr.mxu0 0.0
    %951 = vmatpush1.msra.mxu0 0.0
    %952 = vmatprep.subr.mxu0 0.0
    %953 = vmatpush1.msra.mxu0 0.0
    %954 = vmatprep.subr.mxu0 0.0
    %955 = vmatpush1.msra.mxu0 0.0
    %956 = vmatprep.subr.mxu0 0.0
    %957 = vmatpush1.msra.mxu0 0.0
    %958 = vmatprep.subr.mxu0 0.0
    %959 = vmatpush1.msra.mxu0 0.0
    %960 = vmatprep.subr.mxu0 0.0
    %961 = vmatpush1.msra.mxu0 0.0
    %962 = vmatprep.mubr.f32.mxu0 0.0
    %963 = vmatmul.mubr.f32.gmra.mrb[0].mxu0 %v821
    %v964 = vpop.f32.mrb[0].mxu0
    %v965 = vadd.f32 0.0, %v964
    %v966 = vpop.f32.mrb[0].mxu0
    %v967 = vadd.f32 0.0, %v966
    %968 = vdwg.mxu0
    %v969 = vadd.f32 %v823, %v894
    %v970 = vadd.f32 %v824, %v896
    %v971 = vadd.f32 %v825, %v965
    %v972 = vadd.f32 %v826, %v967
    %v973 = vxor.u32 %v969, 2147483648
    %v974 = vxor.u32 %v970, 2147483648
    %v975 = vxor.u32 %v971, 2147483648
    %v976 = vmul.f32 %v973, 1.442695
    %v977 = vpow.pop %v976
    %v978 = vmul.f32 %v974, 1.442695
    %v979 = vpow.pop %v978
    %v980 = vmul.f32 %v975, 1.442695
    %v981 = vpow.pop %v980
    %v982 = vadd.f32 %v977, 1.0
    %v983 = vadd.f32 %v979, 1.0
    %v984 = vadd.f32 %v981, 1.0
    %v985 = vrcp.pop %v982
    %v986 = vmul.f32 1.0, %v985
    %v987 = vrcp.pop %v983
    %v988 = vmul.f32 1.0, %v987
    %v989 = vrcp.pop %v984
    %v990 = vmul.f32 1.0, %v989
    %v991 = vtanh.pop %v972
    %v992 = vmul.f32 %v988, %v819
    %v993 = vmul.f32 %v986, %v991
    %v994 = vadd.f32 %v992, %v993
    %v995 = vtanh.pop %v994
    %v996 = vmul.f32 %v990, %v995
    %997 = vst [vmem:[#allocation2 + $0x10] sm:$0xff] %v996
    %v998 = vld [vmem:[#allocation3 + $0x60] sm:$0xff]
    %v999 = vld [vmem:[#allocation3 + $0x68] sm:$0xff]
    %v1000 = vld [vmem:[#allocation3 + $0x70] sm:$0xff]
    %v1001 = vld [vmem:[#allocation3 + $0x78] sm:$0xff]
    %1002 = vmatprep.subr.mxu0 %v410
    %1003 = vmatpush1.msra.mxu0 %v409
    %1004 = vmatprep.subr.mxu0 %v414
    %1005 = vmatpush1.msra.mxu0 %v413
    %1006 = vmatprep.subr.mxu0 %v418
    %1007 = vmatpush1.msra.mxu0 %v417
    %1008 = vmatprep.subr.mxu0 %v422
    %1009 = vmatpush1.msra.mxu0 %v421
    %1010 = vmatprep.subr.mxu0 %v426
    %1011 = vmatpush1.msra.mxu0 %v425
    %1012 = vmatprep.subr.mxu0 %v430
    %1013 = vmatpush1.msra.mxu0 %v429
    %1014 = vmatprep.subr.mxu0 %v434
    %1015 = vmatpush1.msra.mxu0 %v433
    %1016 = vmatprep.subr.mxu0 %v438
    %1017 = vmatpush1.msra.mxu0 %v437
    %1018 = vmatprep.subr.mxu0 %v442
    %1019 = vmatpush1.msra.mxu0 %v441
    %1020 = vmatprep.subr.mxu0 %v446
    %1021 = vmatpush1.msra.mxu0 %v445
    %1022 = vmatprep.subr.mxu0 %v450
    %1023 = vmatpush1.msra.mxu0 %v449
    %1024 = vmatprep.subr.mxu0 %v454
    %1025 = vmatpush1.msra.mxu0 %v453
    %1026 = vmatprep.subr.mxu0 %v458
    %1027 = vmatpush1.msra.mxu0 %v457
    %1028 = vmatprep.subr.mxu0 %v462
    %1029 = vmatpush1.msra.mxu0 %v461
    %1030 = vmatprep.subr.mxu0 %v466
    %1031 = vmatpush1.msra.mxu0 %v465
    %1032 = vmatprep.subr.mxu0 %v470
    %1033 = vmatpush1.msra.mxu0 %v469
    %1034 = vmatprep.subr.mxu0 0.0
    %1035 = vmatpush1.msra.mxu0 0.0
    %1036 = vmatprep.subr.mxu0 0.0
    %1037 = vmatpush1.msra.mxu0 0.0
    %1038 = vmatprep.subr.mxu0 0.0
    %1039 = vmatpush1.msra.mxu0 0.0
    %1040 = vmatprep.subr.mxu0 0.0
    %1041 = vmatpush1.msra.mxu0 0.0
    %1042 = vmatprep.subr.mxu0 0.0
    %1043 = vmatpush1.msra.mxu0 0.0
    %1044 = vmatprep.subr.mxu0 0.0
    %1045 = vmatpush1.msra.mxu0 0.0
    %1046 = vmatprep.subr.mxu0 0.0
    %1047 = vmatpush1.msra.mxu0 0.0
    %1048 = vmatprep.subr.mxu0 0.0
    %1049 = vmatpush1.msra.mxu0 0.0
    %1050 = vmatprep.subr.mxu0 0.0
    %1051 = vmatpush1.msra.mxu0 0.0
    %1052 = vmatprep.subr.mxu0 0.0
    %1053 = vmatpush1.msra.mxu0 0.0
    %1054 = vmatprep.subr.mxu0 0.0
    %1055 = vmatpush1.msra.mxu0 0.0
    %1056 = vmatprep.subr.mxu0 0.0
    %1057 = vmatpush1.msra.mxu0 0.0
    %1058 = vmatprep.subr.mxu0 0.0
    %1059 = vmatpush1.msra.mxu0 0.0
    %1060 = vmatprep.subr.mxu0 0.0
    %1061 = vmatpush1.msra.mxu0 0.0
    %1062 = vmatprep.subr.mxu0 0.0
    %1063 = vmatpush1.msra.mxu0 0.0
    %1064 = vmatprep.subr.mxu0 0.0
    %1065 = vmatpush1.msra.mxu0 0.0
    %1066 = vmatprep.mubr.f32.mxu0 0.0
    %1067 = vmatmul.mubr.f32.gmra.mrb[0].mxu0 %v996
    %v1068 = vpop.f32.mrb[0].mxu0
    %v1069 = vadd.f32 0.0, %v1068
    %v1070 = vpop.f32.mrb[0].mxu0
    %v1071 = vadd.f32 0.0, %v1070
    %1072 = vdwg.mxu0
    %1073 = vmatprep.subr.mxu0 %v412
    %1074 = vmatpush1.msra.mxu0 %v411
    %1075 = vmatprep.subr.mxu0 %v416
    %1076 = vmatpush1.msra.mxu0 %v415
    %1077 = vmatprep.subr.mxu0 %v420
    %1078 = vmatpush1.msra.mxu0 %v419
    %1079 = vmatprep.subr.mxu0 %v424
    %1080 = vmatpush1.msra.mxu0 %v423
    %1081 = vmatprep.subr.mxu0 %v428
    %1082 = vmatpush1.msra.mxu0 %v427
    %1083 = vmatprep.subr.mxu0 %v432
    %1084 = vmatpush1.msra.mxu0 %v431
    %1085 = vmatprep.subr.mxu0 %v436
    %1086 = vmatpush1.msra.mxu0 %v435
    %1087 = vmatprep.subr.mxu0 %v440
    %1088 = vmatpush1.msra.mxu0 %v439
    %1089 = vmatprep.subr.mxu0 %v444
    %1090 = vmatpush1.msra.mxu0 %v443
    %1091 = vmatprep.subr.mxu0 %v448
    %1092 = vmatpush1.msra.mxu0 %v447
    %1093 = vmatprep.subr.mxu0 %v452
    %1094 = vmatpush1.msra.mxu0 %v451
    %1095 = vmatprep.subr.mxu0 %v456
    %1096 = vmatpush1.msra.mxu0 %v455
    %1097 = vmatprep.subr.mxu0 %v460
    %1098 = vmatpush1.msra.mxu0 %v459
    %1099 = vmatprep.subr.mxu0 %v464
    %1100 = vmatpush1.msra.mxu0 %v463
    %1101 = vmatprep.subr.mxu0 %v468
    %1102 = vmatpush1.msra.mxu0 %v467
    %1103 = vmatprep.subr.mxu0 %v472
    %1104 = vmatpush1.msra.mxu0 %v471
    %1105 = vmatprep.subr.mxu0 0.0
    %1106 = vmatpush1.msra.mxu0 0.0
    %1107 = vmatprep.subr.mxu0 0.0
    %1108 = vmatpush1.msra.mxu0 0.0
    %1109 = vmatprep.subr.mxu0 0.0
    %1110 = vmatpush1.msra.mxu0 0.0
    %1111 = vmatprep.subr.mxu0 0.0
    %1112 = vmatpush1.msra.mxu0 0.0
    %1113 = vmatprep.subr.mxu0 0.0
    %1114 = vmatpush1.msra.mxu0 0.0
    %1115 = vmatprep.subr.mxu0 0.0
    %1116 = vmatpush1.msra.mxu0 0.0
    %1117 = vmatprep.subr.mxu0 0.0
    %1118 = vmatpush1.msra.mxu0 0.0
    %1119 = vmatprep.subr.mxu0 0.0
    %1120 = vmatpush1.msra.mxu0 0.0
    %1121 = vmatprep.subr.mxu0 0.0
    %1122 = vmatpush1.msra.mxu0 0.0
    %1123 = vmatprep.subr.mxu0 0.0
    %1124 = vmatpush1.msra.mxu0 0.0
    %1125 = vmatprep.subr.mxu0 0.0
    %1126 = vmatpush1.msra.mxu0 0.0
    %1127 = vmatprep.subr.mxu0 0.0
    %1128 = vmatpush1.msra.mxu0 0.0
    %1129 = vmatprep.subr.mxu0 0.0
    %1130 = vmatpush1.msra.mxu0 0.0
    %1131 = vmatprep.subr.mxu0 0.0
    %1132 = vmatpush1.msra.mxu0 0.0
    %1133 = vmatprep.subr.mxu0 0.0
    %1134 = vmatpush1.msra.mxu0 0.0
    %1135 = vmatprep.subr.mxu0 0.0
    %1136 = vmatpush1.msra.mxu0 0.0
    %1137 = vmatprep.mubr.f32.mxu0 0.0
    %1138 = vmatmul.mubr.f32.gmra.mrb[0].mxu0 %v996
    %v1139 = vpop.f32.mrb[0].mxu0
    %v1140 = vadd.f32 0.0, %v1139
    %v1141 = vpop.f32.mrb[0].mxu0
    %v1142 = vadd.f32 0.0, %v1141
    %1143 = vdwg.mxu0
    %v1144 = vadd.f32 %v998, %v1069
    %v1145 = vadd.f32 %v999, %v1071
    %v1146 = vadd.f32 %v1000, %v1140
    %v1147 = vadd.f32 %v1001, %v1142
    %v1148 = vxor.u32 %v1144, 2147483648
    %v1149 = vxor.u32 %v1145, 2147483648
    %v1150 = vxor.u32 %v1146, 2147483648
    %v1151 = vmul.f32 %v1148, 1.442695
    %v1152 = vpow.pop %v1151
    %v1153 = vmul.f32 %v1149, 1.442695
    %v1154 = vpow.pop %v1153
    %v1155 = vmul.f32 %v1150, 1.442695
    %v1156 = vpow.pop %v1155
    %v1157 = vadd.f32 %v1152, 1.0
    %v1158 = vadd.f32 %v1154, 1.0
    %v1159 = vadd.f32 %v1156, 1.0
    %v1160 = vrcp.pop %v1157
    %v1161 = vmul.f32 1.0, %v1160
    %v1162 = vrcp.pop %v1158
    %v1163 = vmul.f32 1.0, %v1162
    %v1164 = vrcp.pop %v1159
    %v1165 = vmul.f32 1.0, %v1164
    %v1166 = vtanh.pop %v1147
    %v1167 = vmul.f32 %v1163, %v994
    %v1168 = vmul.f32 %v1161, %v1166
    %v1169 = vadd.f32 %v1167, %v1168
    %v1170 = vtanh.pop %v1169
    %v1171 = vmul.f32 %v1165, %v1170
    %1172 = vst [vmem:[#allocation2 + $0x18] sm:$0xff] %v1171
    %v1173 = vld [vmem:[#allocation3 + $0x80] sm:$0xff]
    %v1174 = vld [vmem:[#allocation3 + $0x88] sm:$0xff]
    %v1175 = vld [vmem:[#allocation3 + $0x90] sm:$0xff]
    %v1176 = vld [vmem:[#allocation3 + $0x98] sm:$0xff]
    %1177 = vmatprep.subr.mxu0 %v410
    %1178 = vmatpush1.msra.mxu0 %v409
    %1179 = vmatprep.subr.mxu0 %v414
    %1180 = vmatpush1.msra.mxu0 %v413
    %1181 = vmatprep.subr.mxu0 %v418
    %1182 = vmatpush1.msra.mxu0 %v417
    %1183 = vmatprep.subr.mxu0 %v422
    %1184 = vmatpush1.msra.mxu0 %v421
    %1185 = vmatprep.subr.mxu0 %v426
    %1186 = vmatpush1.msra.mxu0 %v425
    %1187 = vmatprep.subr.mxu0 %v430
    %1188 = vmatpush1.msra.mxu0 %v429
    %1189 = vmatprep.subr.mxu0 %v434
    %1190 = vmatpush1.msra.mxu0 %v433
    %1191 = vmatprep.subr.mxu0 %v438
    %1192 = vmatpush1.msra.mxu0 %v437
    %1193 = vmatprep.subr.mxu0 %v442
    %1194 = vmatpush1.msra.mxu0 %v441
    %1195 = vmatprep.subr.mxu0 %v446
    %1196 = vmatpush1.msra.mxu0 %v445
    %1197 = vmatprep.subr.mxu0 %v450
    %1198 = vmatpush1.msra.mxu0 %v449
    %1199 = vmatprep.subr.mxu0 %v454
    %1200 = vmatpush1.msra.mxu0 %v453
    %1201 = vmatprep.subr.mxu0 %v458
    %1202 = vmatpush1.msra.mxu0 %v457
    %1203 = vmatprep.subr.mxu0 %v462
    %1204 = vmatpush1.msra.mxu0 %v461
    %1205 = vmatprep.subr.mxu0 %v466
    %1206 = vmatpush1.msra.mxu0 %v465
    %1207 = vmatprep.subr.mxu0 %v470
    %1208 = vmatpush1.msra.mxu0 %v469
    %1209 = vmatprep.subr.mxu0 0.0
    %1210 = vmatpush1.msra.mxu0 0.0
    %1211 = vmatprep.subr.mxu0 0.0
    %1212 = vmatpush1.msra.mxu0 0.0
    %1213 = vmatprep.subr.mxu0 0.0
    %1214 = vmatpush1.msra.mxu0 0.0
    %1215 = vmatprep.subr.mxu0 0.0
    %1216 = vmatpush1.msra.mxu0 0.0
    %1217 = vmatprep.subr.mxu0 0.0
    %1218 = vmatpush1.msra.mxu0 0.0
    %1219 = vmatprep.subr.mxu0 0.0
    %1220 = vmatpush1.msra.mxu0 0.0
    %1221 = vmatprep.subr.mxu0 0.0
    %1222 = vmatpush1.msra.mxu0 0.0
    %1223 = vmatprep.subr.mxu0 0.0
    %1224 = vmatpush1.msra.mxu0 0.0
    %1225 = vmatprep.subr.mxu0 0.0
    %1226 = vmatpush1.msra.mxu0 0.0
    %1227 = vmatprep.subr.mxu0 0.0
    %1228 = vmatpush1.msra.mxu0 0.0
    %1229 = vmatprep.subr.mxu0 0.0
    %1230 = vmatpush1.msra.mxu0 0.0
    %1231 = vmatprep.subr.mxu0 0.0
    %1232 = vmatpush1.msra.mxu0 0.0
    %1233 = vmatprep.subr.mxu0 0.0
    %1234 = vmatpush1.msra.mxu0 0.0
    %1235 = vmatprep.subr.mxu0 0.0
    %1236 = vmatpush1.msra.mxu0 0.0
    %1237 = vmatprep.subr.mxu0 0.0
    %1238 = vmatpush1.msra.mxu0 0.0
    %1239 = vmatprep.subr.mxu0 0.0
    %1240 = vmatpush1.msra.mxu0 0.0
    %1241 = vmatprep.mubr.f32.mxu0 0.0
    %1242 = vmatmul.mubr.f32.gmra.mrb[0].mxu0 %v1171
    %v1243 = vpop.f32.mrb[0].mxu0
    %v1244 = vadd.f32 0.0, %v1243
    %v1245 = vpop.f32.mrb[0].mxu0
    %v1246 = vadd.f32 0.0, %v1245
    %1247 = vdwg.mxu0
    %1248 = vmatprep.subr.mxu0 %v412
    %1249 = vmatpush1.msra.mxu0 %v411
    %1250 = vmatprep.subr.mxu0 %v416
    %1251 = vmatpush1.msra.mxu0 %v415
    %1252 = vmatprep.subr.mxu0 %v420
    %1253 = vmatpush1.msra.mxu0 %v419
    %1254 = vmatprep.subr.mxu0 %v424
    %1255 = vmatpush1.msra.mxu0 %v423
    %1256 = vmatprep.subr.mxu0 %v428
    %1257 = vmatpush1.msra.mxu0 %v427
    %1258 = vmatprep.subr.mxu0 %v432
    %1259 = vmatpush1.msra.mxu0 %v431
    %1260 = vmatprep.subr.mxu0 %v436
    %1261 = vmatpush1.msra.mxu0 %v435
    %1262 = vmatprep.subr.mxu0 %v440
    %1263 = vmatpush1.msra.mxu0 %v439
    %1264 = vmatprep.subr.mxu0 %v444
    %1265 = vmatpush1.msra.mxu0 %v443
    %1266 = vmatprep.subr.mxu0 %v448
    %1267 = vmatpush1.msra.mxu0 %v447
    %1268 = vmatprep.subr.mxu0 %v452
    %1269 = vmatpush1.msra.mxu0 %v451
    %1270 = vmatprep.subr.mxu0 %v456
    %1271 = vmatpush1.msra.mxu0 %v455
    %1272 = vmatprep.subr.mxu0 %v460
    %1273 = vmatpush1.msra.mxu0 %v459
    %1274 = vmatprep.subr.mxu0 %v464
    %1275 = vmatpush1.msra.mxu0 %v463
    %1276 = vmatprep.subr.mxu0 %v468
    %1277 = vmatpush1.msra.mxu0 %v467
    %1278 = vmatprep.subr.mxu0 %v472
    %1279 = vmatpush1.msra.mxu0 %v471
    %1280 = vmatprep.subr.mxu0 0.0
    %1281 = vmatpush1.msra.mxu0 0.0
    %1282 = vmatprep.subr.mxu0 0.0
    %1283 = vmatpush1.msra.mxu0 0.0
    %1284 = vmatprep.subr.mxu0 0.0
    %1285 = vmatpush1.msra.mxu0 0.0
    %1286 = vmatprep.subr.mxu0 0.0
    %1287 = vmatpush1.msra.mxu0 0.0
    %1288 = vmatprep.subr.mxu0 0.0
    %1289 = vmatpush1.msra.mxu0 0.0
    %1290 = vmatprep.subr.mxu0 0.0
    %1291 = vmatpush1.msra.mxu0 0.0
    %1292 = vmatprep.subr.mxu0 0.0
    %1293 = vmatpush1.msra.mxu0 0.0
    %1294 = vmatprep.subr.mxu0 0.0
    %1295 = vmatpush1.msra.mxu0 0.0
    %1296 = vmatprep.subr.mxu0 0.0
    %1297 = vmatpush1.msra.mxu0 0.0
    %1298 = vmatprep.subr.mxu0 0.0
    %1299 = vmatpush1.msra.mxu0 0.0
    %1300 = vmatprep.subr.mxu0 0.0
    %1301 = vmatpush1.msra.mxu0 0.0
    %1302 = vmatprep.subr.mxu0 0.0
    %1303 = vmatpush1.msra.mxu0 0.0
    %1304 = vmatprep.subr.mxu0 0.0
    %1305 = vmatpush1.msra.mxu0 0.0
    %1306 = vmatprep.subr.mxu0 0.0
    %1307 = vmatpush1.msra.mxu0 0.0
    %1308 = vmatprep.subr.mxu0 0.0
    %1309 = vmatpush1.msra.mxu0 0.0
    %1310 = vmatprep.subr.mxu0 0.0
    %1311 = vmatpush1.msra.mxu0 0.0
    %1312 = vmatprep.mubr.f32.mxu0 0.0
    %1313 = vmatmul.mubr.f32.gmra.mrb[0].mxu0 %v1171
    %v1314 = vpop.f32.mrb[0].mxu0
    %v1315 = vadd.f32 0.0, %v1314
    %v1316 = vpop.f32.mrb[0].mxu0
    %v1317 = vadd.f32 0.0, %v1316
    %1318 = vdwg.mxu0
    %v1319 = vadd.f32 %v1173, %v1244
    %v1320 = vadd.f32 %v1174, %v1246
    %v1321 = vadd.f32 %v1175, %v1315
    %v1322 = vadd.f32 %v1176, %v1317
    %v1323 = vxor.u32 %v1319, 2147483648
    %v1324 = vxor.u32 %v1320, 2147483648
    %v1325 = vxor.u32 %v1321, 2147483648
    %v1326 = vmul.f32 %v1323, 1.442695
    %v1327 = vpow.pop %v1326
    %v1328 = vmul.f32 %v1324, 1.442695
    %v1329 = vpow.pop %v1328
    %v1330 = vmul.f32 %v1325, 1.442695
    %v1331 = vpow.pop %v1330
    %v1332 = vadd.f32 %v1327, 1.0
    %v1333 = vadd.f32 %v1329, 1.0
    %v1334 = vadd.f32 %v1331, 1.0
    %v1335 = vrcp.pop %v1332
    %v1336 = vmul.f32 1.0, %v1335
    %v1337 = vrcp.pop %v1333
    %v1338 = vmul.f32 1.0, %v1337
    %v1339 = vrcp.pop %v1334
    %v1340 = vmul.f32 1.0, %v1339
    %v1341 = vtanh.pop %v1322
    %v1342 = vmul.f32 %v1338, %v1169
    %v1343 = vmul.f32 %v1336, %v1341
    %v1344 = vadd.f32 %v1342, %v1343
    %v1345 = vtanh.pop %v1344
    %v1346 = vmul.f32 %v1340, %v1345
    %1347 = vst [vmem:[#allocation2 + $0x20] sm:$0xff] %v1346
    %v1348 = vld [vmem:[#allocation3 + $0xa0] sm:$0xff]
    %v1349 = vld [vmem:[#allocation3 + $0xa8] sm:$0xff]
    %v1350 = vld [vmem:[#allocation3 + $0xb0] sm:$0xff]
    %v1351 = vld [vmem:[#allocation3 + $0xb8] sm:$0xff]
    %1352 = vmatprep.subr.mxu0 %v410
    %1353 = vmatpush1.msra.mxu0 %v409
    %1354 = vmatprep.subr.mxu0 %v414
    %1355 = vmatpush1.msra.mxu0 %v413
    %1356 = vmatprep.subr.mxu0 %v418
    %1357 = vmatpush1.msra.mxu0 %v417
    %1358 = vmatprep.subr.mxu0 %v422
    %1359 = vmatpush1.msra.mxu0 %v421
    %1360 = vmatprep.subr.mxu0 %v426
    %1361 = vmatpush1.msra.mxu0 %v425
    %1362 = vmatprep.subr.mxu0 %v430
    %1363 = vmatpush1.msra.mxu0 %v429
    %1364 = vmatprep.subr.mxu0 %v434
    %1365 = vmatpush1.msra.mxu0 %v433
    %1366 = vmatprep.subr.mxu0 %v438
    %1367 = vmatpush1.msra.mxu0 %v437
    %1368 = vmatprep.subr.mxu0 %v442
    %1369 = vmatpush1.msra.mxu0 %v441
    %1370 = vmatprep.subr.mxu0 %v446
    %1371 = vmatpush1.msra.mxu0 %v445
    %1372 = vmatprep.subr.mxu0 %v450
    %1373 = vmatpush1.msra.mxu0 %v449
    %1374 = vmatprep.subr.mxu0 %v454
    %1375 = vmatpush1.msra.mxu0 %v453
    %1376 = vmatprep.subr.mxu0 %v458
    %1377 = vmatpush1.msra.mxu0 %v457
    %1378 = vmatprep.subr.mxu0 %v462
    %1379 = vmatpush1.msra.mxu0 %v461
    %1380 = vmatprep.subr.mxu0 %v466
    %1381 = vmatpush1.msra.mxu0 %v465
    %1382 = vmatprep.subr.mxu0 %v470
    %1383 = vmatpush1.msra.mxu0 %v469
    %1384 = vmatprep.subr.mxu0 0.0
    %1385 = vmatpush1.msra.mxu0 0.0
    %1386 = vmatprep.subr.mxu0 0.0
    %1387 = vmatpush1.msra.mxu0 0.0
    %1388 = vmatprep.subr.mxu0 0.0
    %1389 = vmatpush1.msra.mxu0 0.0
    %1390 = vmatprep.subr.mxu0 0.0
    %1391 = vmatpush1.msra.mxu0 0.0
    %1392 = vmatprep.subr.mxu0 0.0
    %1393 = vmatpush1.msra.mxu0 0.0
    %1394 = vmatprep.subr.mxu0 0.0
    %1395 = vmatpush1.msra.mxu0 0.0
    %1396 = vmatprep.subr.mxu0 0.0
    %1397 = vmatpush1.msra.mxu0 0.0
    %1398 = vmatprep.subr.mxu0 0.0
    %1399 = vmatpush1.msra.mxu0 0.0
    %1400 = vmatprep.subr.mxu0 0.0
    %1401 = vmatpush1.msra.mxu0 0.0
    %1402 = vmatprep.subr.mxu0 0.0
    %1403 = vmatpush1.msra.mxu0 0.0
    %1404 = vmatprep.subr.mxu0 0.0
    %1405 = vmatpush1.msra.mxu0 0.0
    %1406 = vmatprep.subr.mxu0 0.0
    %1407 = vmatpush1.msra.mxu0 0.0
    %1408 = vmatprep.subr.mxu0 0.0
    %1409 = vmatpush1.msra.mxu0 0.0
    %1410 = vmatprep.subr.mxu0 0.0
    %1411 = vmatpush1.msra.mxu0 0.0
    %1412 = vmatprep.subr.mxu0 0.0
    %1413 = vmatpush1.msra.mxu0 0.0
    %1414 = vmatprep.subr.mxu0 0.0
    %1415 = vmatpush1.msra.mxu0 0.0
    %1416 = vmatprep.mubr.f32.mxu0 0.0
    %1417 = vmatmul.mubr.f32.gmra.mrb[0].mxu0 %v1346
    %v1418 = vpop.f32.mrb[0].mxu0
    %v1419 = vadd.f32 0.0, %v1418
    %v1420 = vpop.f32.mrb[0].mxu0
    %v1421 = vadd.f32 0.0, %v1420
    %1422 = vdwg.mxu0
    %1423 = vmatprep.subr.mxu0 %v412
    %1424 = vmatpush1.msra.mxu0 %v411
    %1425 = vmatprep.subr.mxu0 %v416
    %1426 = vmatpush1.msra.mxu0 %v415
    %1427 = vmatprep.subr.mxu0 %v420
    %1428 = vmatpush1.msra.mxu0 %v419
    %1429 = vmatprep.subr.mxu0 %v424
    %1430 = vmatpush1.msra.mxu0 %v423
    %1431 = vmatprep.subr.mxu0 %v428
    %1432 = vmatpush1.msra.mxu0 %v427
    %1433 = vmatprep.subr.mxu0 %v432
    %1434 = vmatpush1.msra.mxu0 %v431
    %1435 = vmatprep.subr.mxu0 %v436
    %1436 = vmatpush1.msra.mxu0 %v435
    %1437 = vmatprep.subr.mxu0 %v440
    %1438 = vmatpush1.msra.mxu0 %v439
    %1439 = vmatprep.subr.mxu0 %v444
    %1440 = vmatpush1.msra.mxu0 %v443
    %1441 = vmatprep.subr.mxu0 %v448
    %1442 = vmatpush1.msra.mxu0 %v447
    %1443 = vmatprep.subr.mxu0 %v452
    %1444 = vmatpush1.msra.mxu0 %v451
    %1445 = vmatprep.subr.mxu0 %v456
    %1446 = vmatpush1.msra.mxu0 %v455
    %1447 = vmatprep.subr.mxu0 %v460
    %1448 = vmatpush1.msra.mxu0 %v459
    %1449 = vmatprep.subr.mxu0 %v464
    %1450 = vmatpush1.msra.mxu0 %v463
    %1451 = vmatprep.subr.mxu0 %v468
    %1452 = vmatpush1.msra.mxu0 %v467
    %1453 = vmatprep.subr.mxu0 %v472
    %1454 = vmatpush1.msra.mxu0 %v471
    %1455 = vmatprep.subr.mxu0 0.0
    %1456 = vmatpush1.msra.mxu0 0.0
    %1457 = vmatprep.subr.mxu0 0.0
    %1458 = vmatpush1.msra.mxu0 0.0
    %1459 = vmatprep.subr.mxu0 0.0
    %1460 = vmatpush1.msra.mxu0 0.0
    %1461 = vmatprep.subr.mxu0 0.0
    %1462 = vmatpush1.msra.mxu0 0.0
    %1463 = vmatprep.subr.mxu0 0.0
    %1464 = vmatpush1.msra.mxu0 0.0
    %1465 = vmatprep.subr.mxu0 0.0
    %1466 = vmatpush1.msra.mxu0 0.0
    %1467 = vmatprep.subr.mxu0 0.0
    %1468 = vmatpush1.msra.mxu0 0.0
    %1469 = vmatprep.subr.mxu0 0.0
    %1470 = vmatpush1.msra.mxu0 0.0
    %1471 = vmatprep.subr.mxu0 0.0
    %1472 = vmatpush1.msra.mxu0 0.0
    %1473 = vmatprep.subr.mxu0 0.0
    %1474 = vmatpush1.msra.mxu0 0.0
    %1475 = vmatprep.subr.mxu0 0.0
    %1476 = vmatpush1.msra.mxu0 0.0
    %1477 = vmatprep.subr.mxu0 0.0
    %1478 = vmatpush1.msra.mxu0 0.0
    %1479 = vmatprep.subr.mxu0 0.0
    %1480 = vmatpush1.msra.mxu0 0.0
    %1481 = vmatprep.subr.mxu0 0.0
    %1482 = vmatpush1.msra.mxu0 0.0
    %1483 = vmatprep.subr.mxu0 0.0
    %1484 = vmatpush1.msra.mxu0 0.0
    %1485 = vmatprep.subr.mxu0 0.0
    %1486 = vmatpush1.msra.mxu0 0.0
    %1487 = vmatprep.mubr.f32.mxu0 0.0
    %1488 = vmatmul.mubr.f32.gmra.mrb[0].mxu0 %v1346
    %v1489 = vpop.f32.mrb[0].mxu0
    %v1490 = vadd.f32 0.0, %v1489
    %v1491 = vpop.f32.mrb[0].mxu0
    %v1492 = vadd.f32 0.0, %v1491
    %1493 = vdwg.mxu0
    %v1494 = vadd.f32 %v1348, %v1419
    %v1495 = vadd.f32 %v1349, %v1421
    %v1496 = vadd.f32 %v1350, %v1490
    %v1497 = vadd.f32 %v1351, %v1492
    %v1498 = vxor.u32 %v1494, 2147483648
    %v1499 = vxor.u32 %v1495, 2147483648
    %v1500 = vxor.u32 %v1496, 2147483648
    %v1501 = vmul.f32 %v1498, 1.442695
    %v1502 = vpow.pop %v1501
    %v1503 = vmul.f32 %v1499, 1.442695
    %v1504 = vpow.pop %v1503
    %v1505 = vmul.f32 %v1500, 1.442695
    %v1506 = vpow.pop %v1505
    %v1507 = vadd.f32 %v1502, 1.0
    %v1508 = vadd.f32 %v1504, 1.0
    %v1509 = vadd.f32 %v1506, 1.0
    %v1510 = vrcp.pop %v1507
    %v1511 = vmul.f32 1.0, %v1510
    %v1512 = vrcp.pop %v1508
    %v1513 = vmul.f32 1.0, %v1512
    %v1514 = vrcp.pop %v1509
    %v1515 = vmul.f32 1.0, %v1514
    %v1516 = vtanh.pop %v1497
    %v1517 = vmul.f32 %v1513, %v1344
    %v1518 = vmul.f32 %v1511, %v1516
    %v1519 = vadd.f32 %v1517, %v1518
    %v1520 = vtanh.pop %v1519
    %v1521 = vmul.f32 %v1515, %v1520
    %1522 = vst [vmem:[#allocation2 + $0x28] sm:$0xff] %v1521
    %v1523 = vld [vmem:[#allocation3 + $0xc0] sm:$0xff]
    %v1524 = vld [vmem:[#allocation3 + $0xc8] sm:$0xff]
    %v1525 = vld [vmem:[#allocation3 + $0xd0] sm:$0xff]
    %v1526 = vld [vmem:[#allocation3 + $0xd8] sm:$0xff]
    %1527 = vmatprep.subr.mxu0 %v410
    %1528 = vmatpush1.msra.mxu0 %v409
    %1529 = vmatprep.subr.mxu0 %v414
    %1530 = vmatpush1.msra.mxu0 %v413
    %1531 = vmatprep.subr.mxu0 %v418
    %1532 = vmatpush1.msra.mxu0 %v417
    %1533 = vmatprep.subr.mxu0 %v422
    %1534 = vmatpush1.msra.mxu0 %v421
    %1535 = vmatprep.subr.mxu0 %v426
    %1536 = vmatpush1.msra.mxu0 %v425
    %1537 = vmatprep.subr.mxu0 %v430
    %1538 = vmatpush1.msra.mxu0 %v429
    %1539 = vmatprep.subr.mxu0 %v434
    %1540 = vmatpush1.msra.mxu0 %v433
    %1541 = vmatprep.subr.mxu0 %v438
    %1542 = vmatpush1.msra.mxu0 %v437
    %1543 = vmatprep.subr.mxu0 %v442
    %1544 = vmatpush1.msra.mxu0 %v441
    %1545 = vmatprep.subr.mxu0 %v446
    %1546 = vmatpush1.msra.mxu0 %v445
    %1547 = vmatprep.subr.mxu0 %v450
    %1548 = vmatpush1.msra.mxu0 %v449
    %1549 = vmatprep.subr.mxu0 %v454
    %1550 = vmatpush1.msra.mxu0 %v453
    %1551 = vmatprep.subr.mxu0 %v458
    %1552 = vmatpush1.msra.mxu0 %v457
    %1553 = vmatprep.subr.mxu0 %v462
    %1554 = vmatpush1.msra.mxu0 %v461
    %1555 = vmatprep.subr.mxu0 %v466
    %1556 = vmatpush1.msra.mxu0 %v465
    %1557 = vmatprep.subr.mxu0 %v470
    %1558 = vmatpush1.msra.mxu0 %v469
    %1559 = vmatprep.subr.mxu0 0.0
    %1560 = vmatpush1.msra.mxu0 0.0
    %1561 = vmatprep.subr.mxu0 0.0
    %1562 = vmatpush1.msra.mxu0 0.0
    %1563 = vmatprep.subr.mxu0 0.0
    %1564 = vmatpush1.msra.mxu0 0.0
    %1565 = vmatprep.subr.mxu0 0.0
    %1566 = vmatpush1.msra.mxu0 0.0
    %1567 = vmatprep.subr.mxu0 0.0
    %1568 = vmatpush1.msra.mxu0 0.0
    %1569 = vmatprep.subr.mxu0 0.0
    %1570 = vmatpush1.msra.mxu0 0.0
    %1571 = vmatprep.subr.mxu0 0.0
    %1572 = vmatpush1.msra.mxu0 0.0
    %1573 = vmatprep.subr.mxu0 0.0
    %1574 = vmatpush1.msra.mxu0 0.0
    %1575 = vmatprep.subr.mxu0 0.0
    %1576 = vmatpush1.msra.mxu0 0.0
    %1577 = vmatprep.subr.mxu0 0.0
    %1578 = vmatpush1.msra.mxu0 0.0
    %1579 = vmatprep.subr.mxu0 0.0
    %1580 = vmatpush1.msra.mxu0 0.0
    %1581 = vmatprep.subr.mxu0 0.0
    %1582 = vmatpush1.msra.mxu0 0.0
    %1583 = vmatprep.subr.mxu0 0.0
    %1584 = vmatpush1.msra.mxu0 0.0
    %1585 = vmatprep.subr.mxu0 0.0
    %1586 = vmatpush1.msra.mxu0 0.0
    %1587 = vmatprep.subr.mxu0 0.0
    %1588 = vmatpush1.msra.mxu0 0.0
    %1589 = vmatprep.subr.mxu0 0.0
    %1590 = vmatpush1.msra.mxu0 0.0
    %1591 = vmatprep.mubr.f32.mxu0 0.0
    %1592 = vmatmul.mubr.f32.gmra.mrb[0].mxu0 %v1521
    %v1593 = vpop.f32.mrb[0].mxu0
    %v1594 = vadd.f32 0.0, %v1593
    %v1595 = vpop.f32.mrb[0].mxu0
    %v1596 = vadd.f32 0.0, %v1595
    %1597 = vdwg.mxu0
    %1598 = vmatprep.subr.mxu0 %v412
    %1599 = vmatpush1.msra.mxu0 %v411
    %1600 = vmatprep.subr.mxu0 %v416
    %1601 = vmatpush1.msra.mxu0 %v415
    %1602 = vmatprep.subr.mxu0 %v420
    %1603 = vmatpush1.msra.mxu0 %v419
    %1604 = vmatprep.subr.mxu0 %v424
    %1605 = vmatpush1.msra.mxu0 %v423
    %1606 = vmatprep.subr.mxu0 %v428
    %1607 = vmatpush1.msra.mxu0 %v427
    %1608 = vmatprep.subr.mxu0 %v432
    %1609 = vmatpush1.msra.mxu0 %v431
    %1610 = vmatprep.subr.mxu0 %v436
    %1611 = vmatpush1.msra.mxu0 %v435
    %1612 = vmatprep.subr.mxu0 %v440
    %1613 = vmatpush1.msra.mxu0 %v439
    %1614 = vmatprep.subr.mxu0 %v444
    %1615 = vmatpush1.msra.mxu0 %v443
    %1616 = vmatprep.subr.mxu0 %v448
    %1617 = vmatpush1.msra.mxu0 %v447
    %1618 = vmatprep.subr.mxu0 %v452
    %1619 = vmatpush1.msra.mxu0 %v451
    %1620 = vmatprep.subr.mxu0 %v456
    %1621 = vmatpush1.msra.mxu0 %v455
    %1622 = vmatprep.subr.mxu0 %v460
    %1623 = vmatpush1.msra.mxu0 %v459
    %1624 = vmatprep.subr.mxu0 %v464
    %1625 = vmatpush1.msra.mxu0 %v463
    %1626 = vmatprep.subr.mxu0 %v468
    %1627 = vmatpush1.msra.mxu0 %v467
    %1628 = vmatprep.subr.mxu0 %v472
    %1629 = vmatpush1.msra.mxu0 %v471
    %1630 = vmatprep.subr.mxu0 0.0
    %1631 = vmatpush1.msra.mxu0 0.0
    %1632 = vmatprep.subr.mxu0 0.0
    %1633 = vmatpush1.msra.mxu0 0.0
    %1634 = vmatprep.subr.mxu0 0.0
    %1635 = vmatpush1.msra.mxu0 0.0
    %1636 = vmatprep.subr.mxu0 0.0
    %1637 = vmatpush1.msra.mxu0 0.0
    %1638 = vmatprep.subr.mxu0 0.0
    %1639 = vmatpush1.msra.mxu0 0.0
    %1640 = vmatprep.subr.mxu0 0.0
    %1641 = vmatpush1.msra.mxu0 0.0
    %1642 = vmatprep.subr.mxu0 0.0
    %1643 = vmatpush1.msra.mxu0 0.0
    %1644 = vmatprep.subr.mxu0 0.0
    %1645 = vmatpush1.msra.mxu0 0.0
    %1646 = vmatprep.subr.mxu0 0.0
    %1647 = vmatpush1.msra.mxu0 0.0
    %1648 = vmatprep.subr.mxu0 0.0
    %1649 = vmatpush1.msra.mxu0 0.0
    %1650 = vmatprep.subr.mxu0 0.0
    %1651 = vmatpush1.msra.mxu0 0.0
    %1652 = vmatprep.subr.mxu0 0.0
    %1653 = vmatpush1.msra.mxu0 0.0
    %1654 = vmatprep.subr.mxu0 0.0
    %1655 = vmatpush1.msra.mxu0 0.0
    %1656 = vmatprep.subr.mxu0 0.0
    %1657 = vmatpush1.msra.mxu0 0.0
    %1658 = vmatprep.subr.mxu0 0.0
    %1659 = vmatpush1.msra.mxu0 0.0
    %1660 = vmatprep.subr.mxu0 0.0
    %1661 = vmatpush1.msra.mxu0 0.0
    %1662 = vmatprep.mubr.f32.mxu0 0.0
    %1663 = vmatmul.mubr.f32.gmra.mrb[0].mxu0 %v1521
    %v1664 = vpop.f32.mrb[0].mxu0
    %v1665 = vadd.f32 0.0, %v1664
    %v1666 = vpop.f32.mrb[0].mxu0
    %v1667 = vadd.f32 0.0, %v1666
    %1668 = vdwg.mxu0
    %v1669 = vadd.f32 %v1523, %v1594
    %v1670 = vadd.f32 %v1524, %v1596
    %v1671 = vadd.f32 %v1525, %v1665
    %v1672 = vadd.f32 %v1526, %v1667
    %v1673 = vxor.u32 %v1669, 2147483648
    %v1674 = vxor.u32 %v1670, 2147483648
    %v1675 = vxor.u32 %v1671, 2147483648
    %v1676 = vmul.f32 %v1673, 1.442695
    %v1677 = vpow.pop %v1676
    %v1678 = vmul.f32 %v1674, 1.442695
    %v1679 = vpow.pop %v1678
    %v1680 = vmul.f32 %v1675, 1.442695
    %v1681 = vpow.pop %v1680
    %v1682 = vadd.f32 %v1677, 1.0
    %v1683 = vadd.f32 %v1679, 1.0
    %v1684 = vadd.f32 %v1681, 1.0
    %v1685 = vrcp.pop %v1682
    %v1686 = vmul.f32 1.0, %v1685
    %v1687 = vrcp.pop %v1683
    %v1688 = vmul.f32 1.0, %v1687
    %v1689 = vrcp.pop %v1684
    %v1690 = vmul.f32 1.0, %v1689
    %v1691 = vtanh.pop %v1672
    %v1692 = vmul.f32 %v1688, %v1519
    %v1693 = vmul.f32 %v1686, %v1691
    %v1694 = vadd.f32 %v1692, %v1693
    %v1695 = vtanh.pop %v1694
    %v1696 = vmul.f32 %v1690, %v1695
    %1697 = vst [vmem:[#allocation2 + $0x30] sm:$0xff] %v1696
    %v1698 = vld [vmem:[#allocation3 + $0xe0] sm:$0xff]
    %v1699 = vld [vmem:[#allocation3 + $0xe8] sm:$0xff]
    %v1700 = vld [vmem:[#allocation3 + $0xf0] sm:$0xff]
    %v1701 = vld [vmem:[#allocation3 + $0xf8] sm:$0xff]
    %1702 = vmatprep.subr.mxu0 %v410
    %1703 = vmatpush1.msra.mxu0 %v409
    %1704 = vmatprep.subr.mxu0 %v414
    %1705 = vmatpush1.msra.mxu0 %v413
    %1706 = vmatprep.subr.mxu0 %v418
    %1707 = vmatpush1.msra.mxu0 %v417
    %1708 = vmatprep.subr.mxu0 %v422
    %1709 = vmatpush1.msra.mxu0 %v421
    %1710 = vmatprep.subr.mxu0 %v426
    %1711 = vmatpush1.msra.mxu0 %v425
    %1712 = vmatprep.subr.mxu0 %v430
    %1713 = vmatpush1.msra.mxu0 %v429
    %1714 = vmatprep.subr.mxu0 %v434
    %1715 = vmatpush1.msra.mxu0 %v433
    %1716 = vmatprep.subr.mxu0 %v438
    %1717 = vmatpush1.msra.mxu0 %v437
    %1718 = vmatprep.subr.mxu0 %v442
    %1719 = vmatpush1.msra.mxu0 %v441
    %1720 = vmatprep.subr.mxu0 %v446
    %1721 = vmatpush1.msra.mxu0 %v445
    %1722 = vmatprep.subr.mxu0 %v450
    %1723 = vmatpush1.msra.mxu0 %v449
    %1724 = vmatprep.subr.mxu0 %v454
    %1725 = vmatpush1.msra.mxu0 %v453
    %1726 = vmatprep.subr.mxu0 %v458
    %1727 = vmatpush1.msra.mxu0 %v457
    %1728 = vmatprep.subr.mxu0 %v462
    %1729 = vmatpush1.msra.mxu0 %v461
    %1730 = vmatprep.subr.mxu0 %v466
    %1731 = vmatpush1.msra.mxu0 %v465
    %1732 = vmatprep.subr.mxu0 %v470
    %1733 = vmatpush1.msra.mxu0 %v469
    %1734 = vmatprep.subr.mxu0 0.0
    %1735 = vmatpush1.msra.mxu0 0.0
    %1736 = vmatprep.subr.mxu0 0.0
    %1737 = vmatpush1.msra.mxu0 0.0
    %1738 = vmatprep.subr.mxu0 0.0
    %1739 = vmatpush1.msra.mxu0 0.0
    %1740 = vmatprep.subr.mxu0 0.0
    %1741 = vmatpush1.msra.mxu0 0.0
    %1742 = vmatprep.subr.mxu0 0.0
    %1743 = vmatpush1.msra.mxu0 0.0
    %1744 = vmatprep.subr.mxu0 0.0
    %1745 = vmatpush1.msra.mxu0 0.0
    %1746 = vmatprep.subr.mxu0 0.0
    %1747 = vmatpush1.msra.mxu0 0.0
    %1748 = vmatprep.subr.mxu0 0.0
    %1749 = vmatpush1.msra.mxu0 0.0
    %1750 = vmatprep.subr.mxu0 0.0
    %1751 = vmatpush1.msra.mxu0 0.0
    %1752 = vmatprep.subr.mxu0 0.0
    %1753 = vmatpush1.msra.mxu0 0.0
    %1754 = vmatprep.subr.mxu0 0.0
    %1755 = vmatpush1.msra.mxu0 0.0
    %1756 = vmatprep.subr.mxu0 0.0
    %1757 = vmatpush1.msra.mxu0 0.0
    %1758 = vmatprep.subr.mxu0 0.0
    %1759 = vmatpush1.msra.mxu0 0.0
    %1760 = vmatprep.subr.mxu0 0.0
    %1761 = vmatpush1.msra.mxu0 0.0
    %1762 = vmatprep.subr.mxu0 0.0
    %1763 = vmatpush1.msra.mxu0 0.0
    %1764 = vmatprep.subr.mxu0 0.0
    %1765 = vmatpush1.msra.mxu0 0.0
    %1766 = vmatprep.mubr.f32.mxu0 0.0
    %1767 = vmatmul.mubr.f32.gmra.mrb[0].mxu0 %v1696
    %v1768 = vpop.f32.mrb[0].mxu0
    %v1769 = vadd.f32 0.0, %v1768
    %v1770 = vpop.f32.mrb[0].mxu0
    %v1771 = vadd.f32 0.0, %v1770
    %1772 = vdwg.mxu0
    %1773 = vmatprep.subr.mxu0 %v412
    %1774 = vmatpush1.msra.mxu0 %v411
    %1775 = vmatprep.subr.mxu0 %v416
    %1776 = vmatpush1.msra.mxu0 %v415
    %1777 = vmatprep.subr.mxu0 %v420
    %1778 = vmatpush1.msra.mxu0 %v419
    %1779 = vmatprep.subr.mxu0 %v424
    %1780 = vmatpush1.msra.mxu0 %v423
    %1781 = vmatprep.subr.mxu0 %v428
    %1782 = vmatpush1.msra.mxu0 %v427
    %1783 = vmatprep.subr.mxu0 %v432
    %1784 = vmatpush1.msra.mxu0 %v431
    %1785 = vmatprep.subr.mxu0 %v436
    %1786 = vmatpush1.msra.mxu0 %v435
    %1787 = vmatprep.subr.mxu0 %v440
    %1788 = vmatpush1.msra.mxu0 %v439
    %1789 = vmatprep.subr.mxu0 %v444
    %1790 = vmatpush1.msra.mxu0 %v443
    %1791 = vmatprep.subr.mxu0 %v448
    %1792 = vmatpush1.msra.mxu0 %v447
    %1793 = vmatprep.subr.mxu0 %v452
    %1794 = vmatpush1.msra.mxu0 %v451
    %1795 = vmatprep.subr.mxu0 %v456
    %1796 = vmatpush1.msra.mxu0 %v455
    %1797 = vmatprep.subr.mxu0 %v460
    %1798 = vmatpush1.msra.mxu0 %v459
    %1799 = vmatprep.subr.mxu0 %v464
    %1800 = vmatpush1.msra.mxu0 %v463
    %1801 = vmatprep.subr.mxu0 %v468
    %1802 = vmatpush1.msra.mxu0 %v467
    %1803 = vmatprep.subr.mxu0 %v472
    %1804 = vmatpush1.msra.mxu0 %v471
    %1805 = vmatprep.subr.mxu0 0.0
    %1806 = vmatpush1.msra.mxu0 0.0
    %1807 = vmatprep.subr.mxu0 0.0
    %1808 = vmatpush1.msra.mxu0 0.0
    %1809 = vmatprep.subr.mxu0 0.0
    %1810 = vmatpush1.msra.mxu0 0.0
    %1811 = vmatprep.subr.mxu0 0.0
    %1812 = vmatpush1.msra.mxu0 0.0
    %1813 = vmatprep.subr.mxu0 0.0
    %1814 = vmatpush1.msra.mxu0 0.0
    %1815 = vmatprep.subr.mxu0 0.0
    %1816 = vmatpush1.msra.mxu0 0.0
    %1817 = vmatprep.subr.mxu0 0.0
    %1818 = vmatpush1.msra.mxu0 0.0
    %1819 = vmatprep.subr.mxu0 0.0
    %1820 = vmatpush1.msra.mxu0 0.0
    %1821 = vmatprep.subr.mxu0 0.0
    %1822 = vmatpush1.msra.mxu0 0.0
    %1823 = vmatprep.subr.mxu0 0.0
    %1824 = vmatpush1.msra.mxu0 0.0
    %1825 = vmatprep.subr.mxu0 0.0
    %1826 = vmatpush1.msra.mxu0 0.0
    %1827 = vmatprep.subr.mxu0 0.0
    %1828 = vmatpush1.msra.mxu0 0.0
    %1829 = vmatprep.subr.mxu0 0.0
    %1830 = vmatpush1.msra.mxu0 0.0
    %1831 = vmatprep.subr.mxu0 0.0
    %1832 = vmatpush1.msra.mxu0 0.0
    %1833 = vmatprep.subr.mxu0 0.0
    %1834 = vmatpush1.msra.mxu0 0.0
    %1835 = vmatprep.subr.mxu0 0.0
    %1836 = vmatpush1.msra.mxu0 0.0
    %1837 = vmatprep.mubr.f32.mxu0 0.0
    %1838 = vmatmul.mubr.f32.gmra.mrb[0].mxu0 %v1696
    %v1839 = vpop.f32.mrb[0].mxu0
    %v1840 = vadd.f32 0.0, %v1839
    %v1841 = vpop.f32.mrb[0].mxu0
    %v1842 = vadd.f32 0.0, %v1841
    %1843 = vdwg.mxu0
    %v1844 = vadd.f32 %v1698, %v1769
    %v1845 = vadd.f32 %v1699, %v1771
    %v1846 = vadd.f32 %v1700, %v1840
    %v1847 = vadd.f32 %v1701, %v1842
    %v1848 = vxor.u32 %v1844, 2147483648
    %v1849 = vxor.u32 %v1845, 2147483648
    %v1850 = vxor.u32 %v1846, 2147483648
    %v1851 = vmul.f32 %v1848, 1.442695
    %v1852 = vpow.pop %v1851
    %v1853 = vmul.f32 %v1849, 1.442695
    %v1854 = vpow.pop %v1853
    %v1855 = vmul.f32 %v1850, 1.442695
    %v1856 = vpow.pop %v1855
    %v1857 = vadd.f32 %v1852, 1.0
    %v1858 = vadd.f32 %v1854, 1.0
    %v1859 = vadd.f32 %v1856, 1.0
    %v1860 = vrcp.pop %v1857
    %v1861 = vmul.f32 1.0, %v1860
    %v1862 = vrcp.pop %v1858
    %v1863 = vmul.f32 1.0, %v1862
    %v1864 = vrcp.pop %v1859
    %v1865 = vmul.f32 1.0, %v1864
    %v1866 = vtanh.pop %v1847
    %v1867 = vmul.f32 %v1863, %v1694
    %v1868 = vmul.f32 %v1861, %v1866
    %v1869 = vadd.f32 %v1867, %v1868
    %v1870 = vtanh.pop %v1869
    %v1871 = vmul.f32 %v1865, %v1870
    %1872 = vst [vmem:[#allocation2 + $0x38] sm:$0xff] %v1871
    %v1873 = vld [vmem:[#allocation2] sm:$0xff]
    %v1874 = vld [vmem:[#allocation2 + $0x8] sm:$0xff]
    %v1875 = vld [vmem:[#allocation2 + $0x10] sm:$0xff]
    %v1876 = vld [vmem:[#allocation2 + $0x18] sm:$0xff]
    %v1877 = vld [vmem:[#allocation2 + $0x20] sm:$0xff]
    %v1878 = vld [vmem:[#allocation2 + $0x28] sm:$0xff]
    %v1879 = vld [vmem:[#allocation2 + $0x30] sm:$0xff]
    %v1880 = vld [vmem:[#allocation2 + $0x38] sm:$0xff]
    %v1881 = vld [vmem:[#allocation7] sm:$0xff]
    %v1882 = vld [vmem:[#allocation7 + $0x8] sm:$0xff]
    %v1883 = vld [vmem:[#allocation7 + $0x10] sm:$0xff]
    %v1884 = vld [vmem:[#allocation7 + $0x18] sm:$0xff]
    %v1885 = vld [vmem:[#allocation7 + $0x20] sm:$0xff]
    %v1886 = vld [vmem:[#allocation7 + $0x28] sm:$0xff]
    %v1887 = vld [vmem:[#allocation7 + $0x30] sm:$0xff]
    %v1888 = vld [vmem:[#allocation7 + $0x38] sm:$0xff]
    %v1889 = vld [vmem:[#allocation7 + $0x40] sm:$0xff]
    %v1890 = vld [vmem:[#allocation7 + $0x48] sm:$0xff]
    %v1891 = vld [vmem:[#allocation7 + $0x50] sm:$0xff]
    %v1892 = vld [vmem:[#allocation7 + $0x58] sm:$0xff]
    %v1893 = vld [vmem:[#allocation7 + $0x60] sm:$0xff]
    %v1894 = vld [vmem:[#allocation7 + $0x68] sm:$0xff]
    %v1895 = vld [vmem:[#allocation7 + $0x70] sm:$0xff]
    %v1896 = vld [vmem:[#allocation7 + $0x78] sm:$0xff]
    %v1897 = vld [vmem:[#allocation7 + $0x80] sm:$0xff]
    %v1898 = vld [vmem:[#allocation7 + $0x88] sm:$0xff]
    %v1899 = vld [vmem:[#allocation7 + $0x90] sm:$0xff]
    %v1900 = vld [vmem:[#allocation7 + $0x98] sm:$0xff]
    %v1901 = vld [vmem:[#allocation7 + $0xa0] sm:$0xff]
    %v1902 = vld [vmem:[#allocation7 + $0xa8] sm:$0xff]
    %v1903 = vld [vmem:[#allocation7 + $0xb0] sm:$0xff]
    %v1904 = vld [vmem:[#allocation7 + $0xb8] sm:$0xff]
    %v1905 = vld [vmem:[#allocation7 + $0xc0] sm:$0xff]
    %v1906 = vld [vmem:[#allocation7 + $0xc8] sm:$0xff]
    %v1907 = vld [vmem:[#allocation7 + $0xd0] sm:$0xff]
    %v1908 = vld [vmem:[#allocation7 + $0xd8] sm:$0xff]
    %v1909 = vld [vmem:[#allocation7 + $0xe0] sm:$0xff]
    %v1910 = vld [vmem:[#allocation7 + $0xe8] sm:$0xff]
    %v1911 = vld [vmem:[#allocation7 + $0xf0] sm:$0xff]
    %v1912 = vld [vmem:[#allocation7 + $0xf8] sm:$0xff]
    %v1913 = vld [vmem:[#allocation7 + $0x100] sm:$0xff]
    %v1914 = vld [vmem:[#allocation7 + $0x108] sm:$0xff]
    %v1915 = vld [vmem:[#allocation7 + $0x110] sm:$0xff]
    %v1916 = vld [vmem:[#allocation7 + $0x118] sm:$0xff]
    %v1917 = vld [vmem:[#allocation7 + $0x120] sm:$0xff]
    %v1918 = vld [vmem:[#allocation7 + $0x128] sm:$0xff]
    %v1919 = vld [vmem:[#allocation7 + $0x130] sm:$0xff]
    %v1920 = vld [vmem:[#allocation7 + $0x138] sm:$0xff]
    %v1921 = vld [vmem:[#allocation7 + $0x140] sm:$0xff]
    %v1922 = vld [vmem:[#allocation7 + $0x148] sm:$0xff]
    %v1923 = vld [vmem:[#allocation7 + $0x150] sm:$0xff]
    %v1924 = vld [vmem:[#allocation7 + $0x158] sm:$0xff]
    %v1925 = vld [vmem:[#allocation7 + $0x160] sm:$0xff]
    %v1926 = vld [vmem:[#allocation7 + $0x168] sm:$0xff]
    %v1927 = vld [vmem:[#allocation7 + $0x170] sm:$0xff]
    %v1928 = vld [vmem:[#allocation7 + $0x178] sm:$0xff]
    %v1929 = vld [vmem:[#allocation7 + $0x180] sm:$0xff]
    %v1930 = vld [vmem:[#allocation7 + $0x188] sm:$0xff]
    %v1931 = vld [vmem:[#allocation7 + $0x190] sm:$0xff]
    %v1932 = vld [vmem:[#allocation7 + $0x198] sm:$0xff]
    %v1933 = vld [vmem:[#allocation7 + $0x1a0] sm:$0xff]
    %v1934 = vld [vmem:[#allocation7 + $0x1a8] sm:$0xff]
    %v1935 = vld [vmem:[#allocation7 + $0x1b0] sm:$0xff]
    %v1936 = vld [vmem:[#allocation7 + $0x1b8] sm:$0xff]
    %v1937 = vld [vmem:[#allocation7 + $0x1c0] sm:$0xff]
    %v1938 = vld [vmem:[#allocation7 + $0x1c8] sm:$0xff]
    %v1939 = vld [vmem:[#allocation7 + $0x1d0] sm:$0xff]
    %v1940 = vld [vmem:[#allocation7 + $0x1d8] sm:$0xff]
    %v1941 = vld [vmem:[#allocation7 + $0x1e0] sm:$0xff]
    %v1942 = vld [vmem:[#allocation7 + $0x1e8] sm:$0xff]
    %v1943 = vld [vmem:[#allocation7 + $0x1f0] sm:$0xff]
    %v1944 = vld [vmem:[#allocation7 + $0x1f8] sm:$0xff]
    %v1945 = vld [vmem:[%s6] sm:$0xf]
    %v1947 = vlaneseq
    %v1948 = vshrl.u32 %v1947, 7
    %v1949 = vsub.s32 0, %v1948
    %v1950 = vrot.slane %v1945, %v1949
    %v1951 = vlaneseq
    %v1952 = vshrl.u32 %v1951, 7
    %v1953 = vsub.s32 1, %v1952
    %v1954 = vrot.slane %v1945, %v1953
    %v1955 = vlaneseq
    %v1956 = vshrl.u32 %v1955, 7
    %v1957 = vsub.s32 2, %v1956
    %v1958 = vrot.slane %v1945, %v1957
    %v1959 = vlaneseq
    %v1960 = vshrl.u32 %v1959, 7
    %v1961 = vsub.s32 3, %v1960
    %v1962 = vrot.slane %v1945, %v1961
    %1967 = vmatprep.subr.mxu0 %v1882
    %1968 = vmatpush1.msra.mxu0 %v1881
    %1969 = vmatprep.subr.mxu0 %v1886
    %1970 = vmatpush1.msra.mxu0 %v1885
    %1971 = vmatprep.subr.mxu0 %v1890
    %1972 = vmatpush1.msra.mxu0 %v1889
    %1973 = vmatprep.subr.mxu0 %v1894
    %1974 = vmatpush1.msra.mxu0 %v1893
    %1975 = vmatprep.subr.mxu0 %v1898
    %1976 = vmatpush1.msra.mxu0 %v1897
    %1977 = vmatprep.subr.mxu0 %v1902
    %1978 = vmatpush1.msra.mxu0 %v1901
    %1979 = vmatprep.subr.mxu0 %v1906
    %1980 = vmatpush1.msra.mxu0 %v1905
    %1981 = vmatprep.subr.mxu0 %v1910
    %1982 = vmatpush1.msra.mxu0 %v1909
    %1983 = vmatprep.subr.mxu0 %v1914
    %1984 = vmatpush1.msra.mxu0 %v1913
    %1985 = vmatprep.subr.mxu0 %v1918
    %1986 = vmatpush1.msra.mxu0 %v1917
    %1987 = vmatprep.subr.mxu0 %v1922
    %1988 = vmatpush1.msra.mxu0 %v1921
    %1989 = vmatprep.subr.mxu0 %v1926
    %1990 = vmatpush1.msra.mxu0 %v1925
    %1991 = vmatprep.subr.mxu0 %v1930
    %1992 = vmatpush1.msra.mxu0 %v1929
    %1993 = vmatprep.subr.mxu0 %v1934
    %1994 = vmatpush1.msra.mxu0 %v1933
    %1995 = vmatprep.subr.mxu0 %v1938
    %1996 = vmatpush1.msra.mxu0 %v1937
    %1997 = vmatprep.subr.mxu0 %v1942
    %1998 = vmatpush1.msra.mxu0 %v1941
    %1999 = vmatprep.subr.mxu0 0.0
    %2000 = vmatpush1.msra.mxu0 0.0
    %2001 = vmatprep.subr.mxu0 0.0
    %2002 = vmatpush1.msra.mxu0 0.0
    %2003 = vmatprep.subr.mxu0 0.0
    %2004 = vmatpush1.msra.mxu0 0.0
    %2005 = vmatprep.subr.mxu0 0.0
    %2006 = vmatpush1.msra.mxu0 0.0
    %2007 = vmatprep.subr.mxu0 0.0
    %2008 = vmatpush1.msra.mxu0 0.0
    %2009 = vmatprep.subr.mxu0 0.0
    %2010 = vmatpush1.msra.mxu0 0.0
    %2011 = vmatprep.subr.mxu0 0.0
    %2012 = vmatpush1.msra.mxu0 0.0
    %2013 = vmatprep.subr.mxu0 0.0
    %2014 = vmatpush1.msra.mxu0 0.0
    %2015 = vmatprep.subr.mxu0 0.0
    %2016 = vmatpush1.msra.mxu0 0.0
    %2017 = vmatprep.subr.mxu0 0.0
    %2018 = vmatpush1.msra.mxu0 0.0
    %2019 = vmatprep.subr.mxu0 0.0
    %2020 = vmatpush1.msra.mxu0 0.0
    %2021 = vmatprep.subr.mxu0 0.0
    %2022 = vmatpush1.msra.mxu0 0.0
    %2023 = vmatprep.subr.mxu0 0.0
    %2024 = vmatpush1.msra.mxu0 0.0
    %2025 = vmatprep.subr.mxu0 0.0
    %2026 = vmatpush1.msra.mxu0 0.0
    %2027 = vmatprep.subr.mxu0 0.0
    %2028 = vmatpush1.msra.mxu0 0.0
    %2029 = vmatprep.subr.mxu0 0.0
    %2030 = vmatpush1.msra.mxu0 0.0
    %2031 = vmatprep.mubr.f32.mxu0 0.0
    %2032 = vmatmul.mubr.f32.gmra.mrb[0].mxu0 %v1873
    %v2033 = vpop.f32.mrb[0].mxu0
    %v2034 = vadd.f32 %v1950, %v2033
    %v2035 = vpop.f32.mrb[0].mxu0
    %v2036 = vadd.f32 %v1954, %v2035
    %2037 = vmatprep.mubr.f32.mxu0 0.0
    %2038 = vmatmul.mubr.f32.gmra.mrb[0].mxu0 %v1874
    %v2039 = vpop.f32.mrb[0].mxu0
    %v2040 = vadd.f32 %v1950, %v2039
    %v2041 = vpop.f32.mrb[0].mxu0
    %v2042 = vadd.f32 %v1954, %v2041
    %2043 = vmatprep.mubr.f32.mxu0 0.0
    %2044 = vmatmul.mubr.f32.gmra.mrb[0].mxu0 %v1875
    %v2045 = vpop.f32.mrb[0].mxu0
    %v2046 = vadd.f32 %v1950, %v2045
    %v2047 = vpop.f32.mrb[0].mxu0
    %v2048 = vadd.f32 %v1954, %v2047
    %2049 = vmatprep.mubr.f32.mxu0 0.0
    %2050 = vmatmul.mubr.f32.gmra.mrb[0].mxu0 %v1876
    %v2051 = vpop.f32.mrb[0].mxu0
    %v2052 = vadd.f32 %v1950, %v2051
    %v2053 = vpop.f32.mrb[0].mxu0
    %v2054 = vadd.f32 %v1954, %v2053
    %2055 = vmatprep.mubr.f32.mxu0 0.0
    %2056 = vmatmul.mubr.f32.gmra.mrb[0].mxu0 %v1877
    %v2057 = vpop.f32.mrb[0].mxu0
    %v2058 = vadd.f32 %v1950, %v2057
    %v2059 = vpop.f32.mrb[0].mxu0
    %v2060 = vadd.f32 %v1954, %v2059
    %2061 = vmatprep.mubr.f32.mxu0 0.0
    %2062 = vmatmul.mubr.f32.gmra.mrb[0].mxu0 %v1878
    %v2063 = vpop.f32.mrb[0].mxu0
    %v2064 = vadd.f32 %v1950, %v2063
    %v2065 = vpop.f32.mrb[0].mxu0
    %v2066 = vadd.f32 %v1954, %v2065
    %2067 = vmatprep.mubr.f32.mxu0 0.0
    %2068 = vmatmul.mubr.f32.gmra.mrb[0].mxu0 %v1879
    %v2069 = vpop.f32.mrb[0].mxu0
    %v2070 = vadd.f32 %v1950, %v2069
    %v2071 = vpop.f32.mrb[0].mxu0
    %v2072 = vadd.f32 %v1954, %v2071
    %2073 = vmatprep.mubr.f32.mxu0 0.0
    %2074 = vmatmul.mubr.f32.gmra.mrb[0].mxu0 %v1880
    %v2075 = vpop.f32.mrb[0].mxu0
    %v2076 = vadd.f32 %v1950, %v2075
    %v2077 = vpop.f32.mrb[0].mxu0
    %v2078 = vadd.f32 %v1954, %v2077
    %2079 = vdwg.mxu0
    %2080 = vmatprep.subr.mxu0 %v1884
    %2081 = vmatpush1.msra.mxu0 %v1883
    %2082 = vmatprep.subr.mxu0 %v1888
    %2083 = vmatpush1.msra.mxu0 %v1887
    %2084 = vmatprep.subr.mxu0 %v1892
    %2085 = vmatpush1.msra.mxu0 %v1891
    %2086 = vmatprep.subr.mxu0 %v1896
    %2087 = vmatpush1.msra.mxu0 %v1895
    %2088 = vmatprep.subr.mxu0 %v1900
    %2089 = vmatpush1.msra.mxu0 %v1899
    %2090 = vmatprep.subr.mxu0 %v1904
    %2091 = vmatpush1.msra.mxu0 %v1903
    %2092 = vmatprep.subr.mxu0 %v1908
    %2093 = vmatpush1.msra.mxu0 %v1907
    %2094 = vmatprep.subr.mxu0 %v1912
    %2095 = vmatpush1.msra.mxu0 %v1911
    %2096 = vmatprep.subr.mxu0 %v1916
    %2097 = vmatpush1.msra.mxu0 %v1915
    %2098 = vmatprep.subr.mxu0 %v1920
    %2099 = vmatpush1.msra.mxu0 %v1919
    %2100 = vmatprep.subr.mxu0 %v1924
    %2101 = vmatpush1.msra.mxu0 %v1923
    %2102 = vmatprep.subr.mxu0 %v1928
    %2103 = vmatpush1.msra.mxu0 %v1927
    %2104 = vmatprep.subr.mxu0 %v1932
    %2105 = vmatpush1.msra.mxu0 %v1931
    %2106 = vmatprep.subr.mxu0 %v1936
    %2107 = vmatpush1.msra.mxu0 %v1935
    %2108 = vmatprep.subr.mxu0 %v1940
    %2109 = vmatpush1.msra.mxu0 %v1939
    %2110 = vmatprep.subr.mxu0 %v1944
    %2111 = vmatpush1.msra.mxu0 %v1943
    %2112 = vmatprep.subr.mxu0 0.0
    %2113 = vmatpush1.msra.mxu0 0.0
    %2114 = vmatprep.subr.mxu0 0.0
    %2115 = vmatpush1.msra.mxu0 0.0
    %2116 = vmatprep.subr.mxu0 0.0
    %2117 = vmatpush1.msra.mxu0 0.0
    %2118 = vmatprep.subr.mxu0 0.0
    %2119 = vmatpush1.msra.mxu0 0.0
    %2120 = vmatprep.subr.mxu0 0.0
    %2121 = vmatpush1.msra.mxu0 0.0
    %2122 = vmatprep.subr.mxu0 0.0
    %2123 = vmatpush1.msra.mxu0 0.0
    %2124 = vmatprep.subr.mxu0 0.0
    %2125 = vmatpush1.msra.mxu0 0.0
    %2126 = vmatprep.subr.mxu0 0.0
    %2127 = vmatpush1.msra.mxu0 0.0
    %2128 = vmatprep.subr.mxu0 0.0
    %2129 = vmatpush1.msra.mxu0 0.0
    %2130 = vmatprep.subr.mxu0 0.0
    %2131 = vmatpush1.msra.mxu0 0.0
    %2132 = vmatprep.subr.mxu0 0.0
    %2133 = vmatpush1.msra.mxu0 0.0
    %2134 = vmatprep.subr.mxu0 0.0
    %2135 = vmatpush1.msra.mxu0 0.0
    %2136 = vmatprep.subr.mxu0 0.0
    %2137 = vmatpush1.msra.mxu0 0.0
    %2138 = vmatprep.subr.mxu0 0.0
    %2139 = vmatpush1.msra.mxu0 0.0
    %2140 = vmatprep.subr.mxu0 0.0
    %2141 = vmatpush1.msra.mxu0 0.0
    %2142 = vmatprep.subr.mxu0 0.0
    %2143 = vmatpush1.msra.mxu0 0.0
    %2144 = vmatprep.mubr.f32.mxu0 0.0
    %2145 = vmatmul.mubr.f32.gmra.mrb[0].mxu0 %v1873
    %v2146 = vpop.f32.mrb[0].mxu0
    %v2147 = vadd.f32 %v1958, %v2146
    %v2148 = vpop.f32.mrb[0].mxu0
    %v2149 = vadd.f32 %v1962, %v2148
    %2150 = vmatprep.mubr.f32.mxu0 0.0
    %2151 = vmatmul.mubr.f32.gmra.mrb[0].mxu0 %v1874
    %v2152 = vpop.f32.mrb[0].mxu0
    %v2153 = vadd.f32 %v1958, %v2152
    %v2154 = vpop.f32.mrb[0].mxu0
    %v2155 = vadd.f32 %v1962, %v2154
    %2156 = vmatprep.mubr.f32.mxu0 0.0
    %2157 = vmatmul.mubr.f32.gmra.mrb[0].mxu0 %v1875
    %v2158 = vpop.f32.mrb[0].mxu0
    %v2159 = vadd.f32 %v1958, %v2158
    %v2160 = vpop.f32.mrb[0].mxu0
    %v2161 = vadd.f32 %v1962, %v2160
    %2162 = vmatprep.mubr.f32.mxu0 0.0
    %2163 = vmatmul.mubr.f32.gmra.mrb[0].mxu0 %v1876
    %v2164 = vpop.f32.mrb[0].mxu0
    %v2165 = vadd.f32 %v1958, %v2164
    %v2166 = vpop.f32.mrb[0].mxu0
    %v2167 = vadd.f32 %v1962, %v2166
    %2168 = vmatprep.mubr.f32.mxu0 0.0
    %2169 = vmatmul.mubr.f32.gmra.mrb[0].mxu0 %v1877
    %v2170 = vpop.f32.mrb[0].mxu0
    %v2171 = vadd.f32 %v1958, %v2170
    %v2172 = vpop.f32.mrb[0].mxu0
    %v2173 = vadd.f32 %v1962, %v2172
    %2174 = vmatprep.mubr.f32.mxu0 0.0
    %2175 = vmatmul.mubr.f32.gmra.mrb[0].mxu0 %v1878
    %v2176 = vpop.f32.mrb[0].mxu0
    %v2177 = vadd.f32 %v1958, %v2176
    %v2178 = vpop.f32.mrb[0].mxu0
    %v2179 = vadd.f32 %v1962, %v2178
    %2180 = vmatprep.mubr.f32.mxu0 0.0
    %2181 = vmatmul.mubr.f32.gmra.mrb[0].mxu0 %v1879
    %v2182 = vpop.f32.mrb[0].mxu0
    %v2183 = vadd.f32 %v1958, %v2182
    %v2184 = vpop.f32.mrb[0].mxu0
    %v2185 = vadd.f32 %v1962, %v2184
    %2186 = vmatprep.mubr.f32.mxu0 0.0
    %2187 = vmatmul.mubr.f32.gmra.mrb[0].mxu0 %v1880
    %v2188 = vpop.f32.mrb[0].mxu0
    %v2189 = vadd.f32 %v1958, %v2188
    %v2190 = vpop.f32.mrb[0].mxu0
    %v2191 = vadd.f32 %v1962, %v2190
    %2192 = vdwg.mxu0
    %2193 = vst [vmem:[#allocation3] sm:$0xff] %v2034
    %2194 = vst [vmem:[#allocation3 + $0x8] sm:$0xff] %v2036
    %2195 = vst [vmem:[#allocation3 + $0x10] sm:$0xff] %v2147
    %2196 = vst [vmem:[#allocation3 + $0x18] sm:$0xff] %v2149
    %2197 = vst [vmem:[#allocation3 + $0x20] sm:$0xff] %v2040
    %2198 = vst [vmem:[#allocation3 + $0x28] sm:$0xff] %v2042
    %2199 = vst [vmem:[#allocation3 + $0x30] sm:$0xff] %v2153
    %2200 = vst [vmem:[#allocation3 + $0x38] sm:$0xff] %v2155
    %2201 = vst [vmem:[#allocation3 + $0x40] sm:$0xff] %v2046
    %2202 = vst [vmem:[#allocation3 + $0x48] sm:$0xff] %v2048
    %2203 = vst [vmem:[#allocation3 + $0x50] sm:$0xff] %v2159
    %2204 = vst [vmem:[#allocation3 + $0x58] sm:$0xff] %v2161
    %2205 = vst [vmem:[#allocation3 + $0x60] sm:$0xff] %v2052
    %2206 = vst [vmem:[#allocation3 + $0x68] sm:$0xff] %v2054
    %2207 = vst [vmem:[#allocation3 + $0x70] sm:$0xff] %v2165
    %2208 = vst [vmem:[#allocation3 + $0x78] sm:$0xff] %v2167
    %2209 = vst [vmem:[#allocation3 + $0x80] sm:$0xff] %v2058
    %2210 = vst [vmem:[#allocation3 + $0x88] sm:$0xff] %v2060
    %2211 = vst [vmem:[#allocation3 + $0x90] sm:$0xff] %v2171
    %2212 = vst [vmem:[#allocation3 + $0x98] sm:$0xff] %v2173
    %2213 = vst [vmem:[#allocation3 + $0xa0] sm:$0xff] %v2064
    %2214 = vst [vmem:[#allocation3 + $0xa8] sm:$0xff] %v2066
    %2215 = vst [vmem:[#allocation3 + $0xb0] sm:$0xff] %v2177
    %2216 = vst [vmem:[#allocation3 + $0xb8] sm:$0xff] %v2179
    %2217 = vst [vmem:[#allocation3 + $0xc0] sm:$0xff] %v2070
    %2218 = vst [vmem:[#allocation3 + $0xc8] sm:$0xff] %v2072
    %2219 = vst [vmem:[#allocation3 + $0xd0] sm:$0xff] %v2183
    %2220 = vst [vmem:[#allocation3 + $0xd8] sm:$0xff] %v2185
    %2221 = vst [vmem:[#allocation3 + $0xe0] sm:$0xff] %v2076
    %2222 = vst [vmem:[#allocation3 + $0xe8] sm:$0xff] %v2078
    %2223 = vst [vmem:[#allocation3 + $0xf0] sm:$0xff] %v2189
    %2224 = vst [vmem:[#allocation3 + $0xf8] sm:$0xff] %v2191
    %v2225 = vld [vmem:[#allocation9] sm:$0xff]
    %v2226 = vld [vmem:[#allocation9 + $0x8] sm:$0xff]
    %v2227 = vld [vmem:[#allocation9 + $0x10] sm:$0xff]
    %v2228 = vld [vmem:[#allocation9 + $0x18] sm:$0xff]
    %v2229 = vld [vmem:[#allocation9 + $0x20] sm:$0xff]
    %v2230 = vld [vmem:[#allocation9 + $0x28] sm:$0xff]
    %v2231 = vld [vmem:[#allocation9 + $0x30] sm:$0xff]
    %v2232 = vld [vmem:[#allocation9 + $0x38] sm:$0xff]
    %v2233 = vld [vmem:[#allocation9 + $0x40] sm:$0xff]
    %v2234 = vld [vmem:[#allocation9 + $0x48] sm:$0xff]
    %v2235 = vld [vmem:[#allocation9 + $0x50] sm:$0xff]
    %v2236 = vld [vmem:[#allocation9 + $0x58] sm:$0xff]
    %v2237 = vld [vmem:[#allocation9 + $0x60] sm:$0xff]
    %v2238 = vld [vmem:[#allocation9 + $0x68] sm:$0xff]
    %v2239 = vld [vmem:[#allocation9 + $0x70] sm:$0xff]
    %v2240 = vld [vmem:[#allocation9 + $0x78] sm:$0xff]
    %v2241 = vld [vmem:[#allocation9 + $0x80] sm:$0xff]
    %v2242 = vld [vmem:[#allocation9 + $0x88] sm:$0xff]
    %v2243 = vld [vmem:[#allocation9 + $0x90] sm:$0xff]
    %v2244 = vld [vmem:[#allocation9 + $0x98] sm:$0xff]
    %v2245 = vld [vmem:[#allocation9 + $0xa0] sm:$0xff]
    %v2246 = vld [vmem:[#allocation9 + $0xa8] sm:$0xff]
    %v2247 = vld [vmem:[#allocation9 + $0xb0] sm:$0xff]
    %v2248 = vld [vmem:[#allocation9 + $0xb8] sm:$0xff]
    %v2249 = vld [vmem:[#allocation9 + $0xc0] sm:$0xff]
    %v2250 = vld [vmem:[#allocation9 + $0xc8] sm:$0xff]
    %v2251 = vld [vmem:[#allocation9 + $0xd0] sm:$0xff]
    %v2252 = vld [vmem:[#allocation9 + $0xd8] sm:$0xff]
    %v2253 = vld [vmem:[#allocation9 + $0xe0] sm:$0xff]
    %v2254 = vld [vmem:[#allocation9 + $0xe8] sm:$0xff]
    %v2255 = vld [vmem:[#allocation9 + $0xf0] sm:$0xff]
    %v2256 = vld [vmem:[#allocation9 + $0xf8] sm:$0xff]
    %v2257 = vld [vmem:[#allocation9 + $0x100] sm:$0xff]
    %v2258 = vld [vmem:[#allocation9 + $0x108] sm:$0xff]
    %v2259 = vld [vmem:[#allocation9 + $0x110] sm:$0xff]
    %v2260 = vld [vmem:[#allocation9 + $0x118] sm:$0xff]
    %v2261 = vld [vmem:[#allocation9 + $0x120] sm:$0xff]
    %v2262 = vld [vmem:[#allocation9 + $0x128] sm:$0xff]
    %v2263 = vld [vmem:[#allocation9 + $0x130] sm:$0xff]
    %v2264 = vld [vmem:[#allocation9 + $0x138] sm:$0xff]
    %v2265 = vld [vmem:[#allocation9 + $0x140] sm:$0xff]
    %v2266 = vld [vmem:[#allocation9 + $0x148] sm:$0xff]
    %v2267 = vld [vmem:[#allocation9 + $0x150] sm:$0xff]
    %v2268 = vld [vmem:[#allocation9 + $0x158] sm:$0xff]
    %v2269 = vld [vmem:[#allocation9 + $0x160] sm:$0xff]
    %v2270 = vld [vmem:[#allocation9 + $0x168] sm:$0xff]
    %v2271 = vld [vmem:[#allocation9 + $0x170] sm:$0xff]
    %v2272 = vld [vmem:[#allocation9 + $0x178] sm:$0xff]
    %v2273 = vld [vmem:[#allocation9 + $0x180] sm:$0xff]
    %v2274 = vld [vmem:[#allocation9 + $0x188] sm:$0xff]
    %v2275 = vld [vmem:[#allocation9 + $0x190] sm:$0xff]
    %v2276 = vld [vmem:[#allocation9 + $0x198] sm:$0xff]
    %v2277 = vld [vmem:[#allocation9 + $0x1a0] sm:$0xff]
    %v2278 = vld [vmem:[#allocation9 + $0x1a8] sm:$0xff]
    %v2279 = vld [vmem:[#allocation9 + $0x1b0] sm:$0xff]
    %v2280 = vld [vmem:[#allocation9 + $0x1b8] sm:$0xff]
    %v2281 = vld [vmem:[#allocation9 + $0x1c0] sm:$0xff]
    %v2282 = vld [vmem:[#allocation9 + $0x1c8] sm:$0xff]
    %v2283 = vld [vmem:[#allocation9 + $0x1d0] sm:$0xff]
    %v2284 = vld [vmem:[#allocation9 + $0x1d8] sm:$0xff]
    %v2285 = vld [vmem:[#allocation9 + $0x1e0] sm:$0xff]
    %v2286 = vld [vmem:[#allocation9 + $0x1e8] sm:$0xff]
    %v2287 = vld [vmem:[#allocation9 + $0x1f0] sm:$0xff]
    %v2288 = vld [vmem:[#allocation9 + $0x1f8] sm:$0xff]
    %v2289 = vld [vmem:[#allocation3] sm:$0xff]
    %v2290 = vld [vmem:[#allocation3 + $0x8] sm:$0xff]
    %v2291 = vld [vmem:[#allocation3 + $0x10] sm:$0xff]
    %v2292 = vld [vmem:[#allocation3 + $0x18] sm:$0xff]
    %2293 = vmatprep.subr.mxu0 %v2226
    %2294 = vmatpush1.msra.mxu0 %v2225
    %2295 = vmatprep.subr.mxu0 %v2230
    %2296 = vmatpush1.msra.mxu0 %v2229
    %2297 = vmatprep.subr.mxu0 %v2234
    %2298 = vmatpush1.msra.mxu0 %v2233
    %2299 = vmatprep.subr.mxu0 %v2238
    %2300 = vmatpush1.msra.mxu0 %v2237
    %2301 = vmatprep.subr.mxu0 %v2242
    %2302 = vmatpush1.msra.mxu0 %v2241
    %2303 = vmatprep.subr.mxu0 %v2246
    %2304 = vmatpush1.msra.mxu0 %v2245
    %2305 = vmatprep.subr.mxu0 %v2250
    %2306 = vmatpush1.msra.mxu0 %v2249
    %2307 = vmatprep.subr.mxu0 %v2254
    %2308 = vmatpush1.msra.mxu0 %v2253
    %2309 = vmatprep.subr.mxu0 %v2258
    %2310 = vmatpush1.msra.mxu0 %v2257
    %2311 = vmatprep.subr.mxu0 %v2262
    %2312 = vmatpush1.msra.mxu0 %v2261
    %2313 = vmatprep.subr.mxu0 %v2266
    %2314 = vmatpush1.msra.mxu0 %v2265
    %2315 = vmatprep.subr.mxu0 %v2270
    %2316 = vmatpush1.msra.mxu0 %v2269
    %2317 = vmatprep.subr.mxu0 %v2274
    %2318 = vmatpush1.msra.mxu0 %v2273
    %2319 = vmatprep.subr.mxu0 %v2278
    %2320 = vmatpush1.msra.mxu0 %v2277
    %2321 = vmatprep.subr.mxu0 %v2282
    %2322 = vmatpush1.msra.mxu0 %v2281
    %2323 = vmatprep.subr.mxu0 %v2286
    %2324 = vmatpush1.msra.mxu0 %v2285
    %2325 = vmatprep.subr.mxu0 0.0
    %2326 = vmatpush1.msra.mxu0 0.0
    %2327 = vmatprep.subr.mxu0 0.0
    %2328 = vmatpush1.msra.mxu0 0.0
    %2329 = vmatprep.subr.mxu0 0.0
    %2330 = vmatpush1.msra.mxu0 0.0
    %2331 = vmatprep.subr.mxu0 0.0
    %2332 = vmatpush1.msra.mxu0 0.0
    %2333 = vmatprep.subr.mxu0 0.0
    %2334 = vmatpush1.msra.mxu0 0.0
    %2335 = vmatprep.subr.mxu0 0.0
    %2336 = vmatpush1.msra.mxu0 0.0
    %2337 = vmatprep.subr.mxu0 0.0
    %2338 = vmatpush1.msra.mxu0 0.0
    %2339 = vmatprep.subr.mxu0 0.0
    %2340 = vmatpush1.msra.mxu0 0.0
    %2341 = vmatprep.subr.mxu0 0.0
    %2342 = vmatpush1.msra.mxu0 0.0
    %2343 = vmatprep.subr.mxu0 0.0
    %2344 = vmatpush1.msra.mxu0 0.0
    %2345 = vmatprep.subr.mxu0 0.0
    %2346 = vmatpush1.msra.mxu0 0.0
    %2347 = vmatprep.subr.mxu0 0.0
    %2348 = vmatpush1.msra.mxu0 0.0
    %2349 = vmatprep.subr.mxu0 0.0
    %2350 = vmatpush1.msra.mxu0 0.0
    %2351 = vmatprep.subr.mxu0 0.0
    %2352 = vmatpush1.msra.mxu0 0.0
    %2353 = vmatprep.subr.mxu0 0.0
    %2354 = vmatpush1.msra.mxu0 0.0
    %2355 = vmatprep.subr.mxu0 0.0
    %2356 = vmatpush1.msra.mxu0 0.0
    %2357 = vmatprep.mubr.f32.mxu0 0.0
    %2358 = vmatmul.mubr.f32.gmra.mrb[0].mxu0 0.0
    %v2359 = vpop.f32.mrb[0].mxu0
    %v2360 = vadd.f32 0.0, %v2359
    %v2361 = vpop.f32.mrb[0].mxu0
    %v2362 = vadd.f32 0.0, %v2361
    %2363 = vdwg.mxu0
    %2364 = vmatprep.subr.mxu0 %v2228
    %2365 = vmatpush1.msra.mxu0 %v2227
    %2366 = vmatprep.subr.mxu0 %v2232
    %2367 = vmatpush1.msra.mxu0 %v2231
    %2368 = vmatprep.subr.mxu0 %v2236
    %2369 = vmatpush1.msra.mxu0 %v2235
    %2370 = vmatprep.subr.mxu0 %v2240
    %2371 = vmatpush1.msra.mxu0 %v2239
    %2372 = vmatprep.subr.mxu0 %v2244
    %2373 = vmatpush1.msra.mxu0 %v2243
    %2374 = vmatprep.subr.mxu0 %v2248
    %2375 = vmatpush1.msra.mxu0 %v2247
    %2376 = vmatprep.subr.mxu0 %v2252
    %2377 = vmatpush1.msra.mxu0 %v2251
    %2378 = vmatprep.subr.mxu0 %v2256
    %2379 = vmatpush1.msra.mxu0 %v2255
    %2380 = vmatprep.subr.mxu0 %v2260
    %2381 = vmatpush1.msra.mxu0 %v2259
    %2382 = vmatprep.subr.mxu0 %v2264
    %2383 = vmatpush1.msra.mxu0 %v2263
    %2384 = vmatprep.subr.mxu0 %v2268
    %2385 = vmatpush1.msra.mxu0 %v2267
    %2386 = vmatprep.subr.mxu0 %v2272
    %2387 = vmatpush1.msra.mxu0 %v2271
    %2388 = vmatprep.subr.mxu0 %v2276
    %2389 = vmatpush1.msra.mxu0 %v2275
    %2390 = vmatprep.subr.mxu0 %v2280
    %2391 = vmatpush1.msra.mxu0 %v2279
    %2392 = vmatprep.subr.mxu0 %v2284
    %2393 = vmatpush1.msra.mxu0 %v2283
    %2394 = vmatprep.subr.mxu0 %v2288
    %2395 = vmatpush1.msra.mxu0 %v2287
    %2396 = vmatprep.subr.mxu0 0.0
    %2397 = vmatpush1.msra.mxu0 0.0
    %2398 = vmatprep.subr.mxu0 0.0
    %2399 = vmatpush1.msra.mxu0 0.0
    %2400 = vmatprep.subr.mxu0 0.0
    %2401 = vmatpush1.msra.mxu0 0.0
    %2402 = vmatprep.subr.mxu0 0.0
    %2403 = vmatpush1.msra.mxu0 0.0
    %2404 = vmatprep.subr.mxu0 0.0
    %2405 = vmatpush1.msra.mxu0 0.0
    %2406 = vmatprep.subr.mxu0 0.0
    %2407 = vmatpush1.msra.mxu0 0.0
    %2408 = vmatprep.subr.mxu0 0.0
    %2409 = vmatpush1.msra.mxu0 0.0
    %2410 = vmatprep.subr.mxu0 0.0
    %2411 = vmatpush1.msra.mxu0 0.0
    %2412 = vmatprep.subr.mxu0 0.0
    %2413 = vmatpush1.msra.mxu0 0.0
    %2414 = vmatprep.subr.mxu0 0.0
    %2415 = vmatpush1.msra.mxu0 0.0
    %2416 = vmatprep.subr.mxu0 0.0
    %2417 = vmatpush1.msra.mxu0 0.0
    %2418 = vmatprep.subr.mxu0 0.0
    %2419 = vmatpush1.msra.mxu0 0.0
    %2420 = vmatprep.subr.mxu0 0.0
    %2421 = vmatpush1.msra.mxu0 0.0
    %2422 = vmatprep.subr.mxu0 0.0
    %2423 = vmatpush1.msra.mxu0 0.0
    %2424 = vmatprep.subr.mxu0 0.0
    %2425 = vmatpush1.msra.mxu0 0.0
    %2426 = vmatprep.subr.mxu0 0.0
    %2427 = vmatpush1.msra.mxu0 0.0
    %2428 = vmatprep.mubr.f32.mxu0 0.0
    %2429 = vmatmul.mubr.f32.gmra.mrb[0].mxu0 0.0
    %v2430 = vpop.f32.mrb[0].mxu0
    %v2431 = vadd.f32 0.0, %v2430
    %v2432 = vpop.f32.mrb[0].mxu0
    %v2433 = vadd.f32 0.0, %v2432
    %2434 = vdwg.mxu0
    %v2435 = vadd.f32 %v2289, %v2360
    %v2436 = vadd.f32 %v2290, %v2362
    %v2437 = vadd.f32 %v2291, %v2431
    %v2438 = vadd.f32 %v2292, %v2433
    %v2439 = vxor.u32 %v2435, 2147483648
    %v2440 = vxor.u32 %v2436, 2147483648
    %v2441 = vxor.u32 %v2437, 2147483648
    %v2442 = vmul.f32 %v2439, 1.442695
    %v2443 = vpow.pop %v2442
    %v2444 = vmul.f32 %v2440, 1.442695
    %v2445 = vpow.pop %v2444
    %v2446 = vmul.f32 %v2441, 1.442695
    %v2447 = vpow.pop %v2446
    %v2448 = vadd.f32 %v2443, 1.0
    %v2449 = vadd.f32 %v2445, 1.0
    %v2450 = vadd.f32 %v2447, 1.0
    %v2451 = vrcp.pop %v2448
    %v2452 = vmul.f32 1.0, %v2451
    %v2453 = vrcp.pop %v2449
    %v2454 = vmul.f32 1.0, %v2453
    %v2455 = vrcp.pop %v2450
    %v2456 = vmul.f32 1.0, %v2455
    %v2457 = vtanh.pop %v2438
    %v2458 = vmul.f32 %v2454, 0.0
    %v2459 = vmul.f32 %v2452, %v2457
    %v2460 = vadd.f32 %v2458, %v2459
    %v2461 = vtanh.pop %v2460
    %v2462 = vmul.f32 %v2456, %v2461
    %2463 = vst [vmem:[#allocation2] sm:$0xff] %v2462
    %v2464 = vld [vmem:[#allocation3 + $0x20] sm:$0xff]
    %v2465 = vld [vmem:[#allocation3 + $0x28] sm:$0xff]
    %v2466 = vld [vmem:[#allocation3 + $0x30] sm:$0xff]
    %v2467 = vld [vmem:[#allocation3 + $0x38] sm:$0xff]
    %2468 = vmatprep.subr.mxu0 %v2226
    %2469 = vmatpush1.msra.mxu0 %v2225
    %2470 = vmatprep.subr.mxu0 %v2230
    %2471 = vmatpush1.msra.mxu0 %v2229
    %2472 = vmatprep.subr.mxu0 %v2234
    %2473 = vmatpush1.msra.mxu0 %v2233
    %2474 = vmatprep.subr.mxu0 %v2238
    %2475 = vmatpush1.msra.mxu0 %v2237
    %2476 = vmatprep.subr.mxu0 %v2242
    %2477 = vmatpush1.msra.mxu0 %v2241
    %2478 = vmatprep.subr.mxu0 %v2246
    %2479 = vmatpush1.msra.mxu0 %v2245
    %2480 = vmatprep.subr.mxu0 %v2250
    %2481 = vmatpush1.msra.mxu0 %v2249
    %2482 = vmatprep.subr.mxu0 %v2254
    %2483 = vmatpush1.msra.mxu0 %v2253
    %2484 = vmatprep.subr.mxu0 %v2258
    %2485 = vmatpush1.msra.mxu0 %v2257
    %2486 = vmatprep.subr.mxu0 %v2262
    %2487 = vmatpush1.msra.mxu0 %v2261
    %2488 = vmatprep.subr.mxu0 %v2266
    %2489 = vmatpush1.msra.mxu0 %v2265
    %2490 = vmatprep.subr.mxu0 %v2270
    %2491 = vmatpush1.msra.mxu0 %v2269
    %2492 = vmatprep.subr.mxu0 %v2274
    %2493 = vmatpush1.msra.mxu0 %v2273
    %2494 = vmatprep.subr.mxu0 %v2278
    %2495 = vmatpush1.msra.mxu0 %v2277
    %2496 = vmatprep.subr.mxu0 %v2282
    %2497 = vmatpush1.msra.mxu0 %v2281
    %2498 = vmatprep.subr.mxu0 %v2286
    %2499 = vmatpush1.msra.mxu0 %v2285
    %2500 = vmatprep.subr.mxu0 0.0
    %2501 = vmatpush1.msra.mxu0 0.0
    %2502 = vmatprep.subr.mxu0 0.0
    %2503 = vmatpush1.msra.mxu0 0.0
    %2504 = vmatprep.subr.mxu0 0.0
    %2505 = vmatpush1.msra.mxu0 0.0
    %2506 = vmatprep.subr.mxu0 0.0
    %2507 = vmatpush1.msra.mxu0 0.0
    %2508 = vmatprep.subr.mxu0 0.0
    %2509 = vmatpush1.msra.mxu0 0.0
    %2510 = vmatprep.subr.mxu0 0.0
    %2511 = vmatpush1.msra.mxu0 0.0
    %2512 = vmatprep.subr.mxu0 0.0
    %2513 = vmatpush1.msra.mxu0 0.0
    %2514 = vmatprep.subr.mxu0 0.0
    %2515 = vmatpush1.msra.mxu0 0.0
    %2516 = vmatprep.subr.mxu0 0.0
    %2517 = vmatpush1.msra.mxu0 0.0
    %2518 = vmatprep.subr.mxu0 0.0
    %2519 = vmatpush1.msra.mxu0 0.0
    %2520 = vmatprep.subr.mxu0 0.0
    %2521 = vmatpush1.msra.mxu0 0.0
    %2522 = vmatprep.subr.mxu0 0.0
    %2523 = vmatpush1.msra.mxu0 0.0
    %2524 = vmatprep.subr.mxu0 0.0
    %2525 = vmatpush1.msra.mxu0 0.0
    %2526 = vmatprep.subr.mxu0 0.0
    %2527 = vmatpush1.msra.mxu0 0.0
    %2528 = vmatprep.subr.mxu0 0.0
    %2529 = vmatpush1.msra.mxu0 0.0
    %2530 = vmatprep.subr.mxu0 0.0
    %2531 = vmatpush1.msra.mxu0 0.0
    %2532 = vmatprep.mubr.f32.mxu0 0.0
    %2533 = vmatmul.mubr.f32.gmra.mrb[0].mxu0 %v2462
    %v2534 = vpop.f32.mrb[0].mxu0
    %v2535 = vadd.f32 0.0, %v2534
    %v2536 = vpop.f32.mrb[0].mxu0
    %v2537 = vadd.f32 0.0, %v2536
    %2538 = vdwg.mxu0
    %2539 = vmatprep.subr.mxu0 %v2228
    %2540 = vmatpush1.msra.mxu0 %v2227
    %2541 = vmatprep.subr.mxu0 %v2232
    %2542 = vmatpush1.msra.mxu0 %v2231
    %2543 = vmatprep.subr.mxu0 %v2236
    %2544 = vmatpush1.msra.mxu0 %v2235
    %2545 = vmatprep.subr.mxu0 %v2240
    %2546 = vmatpush1.msra.mxu0 %v2239
    %2547 = vmatprep.subr.mxu0 %v2244
    %2548 = vmatpush1.msra.mxu0 %v2243
    %2549 = vmatprep.subr.mxu0 %v2248
    %2550 = vmatpush1.msra.mxu0 %v2247
    %2551 = vmatprep.subr.mxu0 %v2252
    %2552 = vmatpush1.msra.mxu0 %v2251
    %2553 = vmatprep.subr.mxu0 %v2256
    %2554 = vmatpush1.msra.mxu0 %v2255
    %2555 = vmatprep.subr.mxu0 %v2260
    %2556 = vmatpush1.msra.mxu0 %v2259
    %2557 = vmatprep.subr.mxu0 %v2264
    %2558 = vmatpush1.msra.mxu0 %v2263
    %2559 = vmatprep.subr.mxu0 %v2268
    %2560 = vmatpush1.msra.mxu0 %v2267
    %2561 = vmatprep.subr.mxu0 %v2272
    %2562 = vmatpush1.msra.mxu0 %v2271
    %2563 = vmatprep.subr.mxu0 %v2276
    %2564 = vmatpush1.msra.mxu0 %v2275
    %2565 = vmatprep.subr.mxu0 %v2280
    %2566 = vmatpush1.msra.mxu0 %v2279
    %2567 = vmatprep.subr.mxu0 %v2284
    %2568 = vmatpush1.msra.mxu0 %v2283
    %2569 = vmatprep.subr.mxu0 %v2288
    %2570 = vmatpush1.msra.mxu0 %v2287
    %2571 = vmatprep.subr.mxu0 0.0
    %2572 = vmatpush1.msra.mxu0 0.0
    %2573 = vmatprep.subr.mxu0 0.0
    %2574 = vmatpush1.msra.mxu0 0.0
    %2575 = vmatprep.subr.mxu0 0.0
    %2576 = vmatpush1.msra.mxu0 0.0
    %2577 = vmatprep.subr.mxu0 0.0
    %2578 = vmatpush1.msra.mxu0 0.0
    %2579 = vmatprep.subr.mxu0 0.0
    %2580 = vmatpush1.msra.mxu0 0.0
    %2581 = vmatprep.subr.mxu0 0.0
    %2582 = vmatpush1.msra.mxu0 0.0
    %2583 = vmatprep.subr.mxu0 0.0
    %2584 = vmatpush1.msra.mxu0 0.0
    %2585 = vmatprep.subr.mxu0 0.0
    %2586 = vmatpush1.msra.mxu0 0.0
    %2587 = vmatprep.subr.mxu0 0.0
    %2588 = vmatpush1.msra.mxu0 0.0
    %2589 = vmatprep.subr.mxu0 0.0
    %2590 = vmatpush1.msra.mxu0 0.0
    %2591 = vmatprep.subr.mxu0 0.0
    %2592 = vmatpush1.msra.mxu0 0.0
    %2593 = vmatprep.subr.mxu0 0.0
    %2594 = vmatpush1.msra.mxu0 0.0
    %2595 = vmatprep.subr.mxu0 0.0
    %2596 = vmatpush1.msra.mxu0 0.0
    %2597 = vmatprep.subr.mxu0 0.0
    %2598 = vmatpush1.msra.mxu0 0.0
    %2599 = vmatprep.subr.mxu0 0.0
    %2600 = vmatpush1.msra.mxu0 0.0
    %2601 = vmatprep.subr.mxu0 0.0
    %2602 = vmatpush1.msra.mxu0 0.0
    %2603 = vmatprep.mubr.f32.mxu0 0.0
    %2604 = vmatmul.mubr.f32.gmra.mrb[0].mxu0 %v2462
    %v2605 = vpop.f32.mrb[0].mxu0
    %v2606 = vadd.f32 0.0, %v2605
    %v2607 = vpop.f32.mrb[0].mxu0
    %v2608 = vadd.f32 0.0, %v2607
    %2609 = vdwg.mxu0
    %v2610 = vadd.f32 %v2464, %v2535
    %v2611 = vadd.f32 %v2465, %v2537
    %v2612 = vadd.f32 %v2466, %v2606
    %v2613 = vadd.f32 %v2467, %v2608
    %v2614 = vxor.u32 %v2610, 2147483648
    %v2615 = vxor.u32 %v2611, 2147483648
    %v2616 = vxor.u32 %v2612, 2147483648
    %v2617 = vmul.f32 %v2614, 1.442695
    %v2618 = vpow.pop %v2617
    %v2619 = vmul.f32 %v2615, 1.442695
    %v2620 = vpow.pop %v2619
    %v2621 = vmul.f32 %v2616, 1.442695
    %v2622 = vpow.pop %v2621
    %v2623 = vadd.f32 %v2618, 1.0
    %v2624 = vadd.f32 %v2620, 1.0
    %v2625 = vadd.f32 %v2622, 1.0
    %v2626 = vrcp.pop %v2623
    %v2627 = vmul.f32 1.0, %v2626
    %v2628 = vrcp.pop %v2624
    %v2629 = vmul.f32 1.0, %v2628
    %v2630 = vrcp.pop %v2625
    %v2631 = vmul.f32 1.0, %v2630
    %v2632 = vtanh.pop %v2613
    %v2633 = vmul.f32 %v2629, %v2460
    %v2634 = vmul.f32 %v2627, %v2632
    %v2635 = vadd.f32 %v2633, %v2634
    %v2636 = vtanh.pop %v2635
    %v2637 = vmul.f32 %v2631, %v2636
    %2638 = vst [vmem:[#allocation2 + $0x8] sm:$0xff] %v2637
    %v2639 = vld [vmem:[#allocation3 + $0x40] sm:$0xff]
    %v2640 = vld [vmem:[#allocation3 + $0x48] sm:$0xff]
    %v2641 = vld [vmem:[#allocation3 + $0x50] sm:$0xff]
    %v2642 = vld [vmem:[#allocation3 + $0x58] sm:$0xff]
    %2643 = vmatprep.subr.mxu0 %v2226
    %2644 = vmatpush1.msra.mxu0 %v2225
    %2645 = vmatprep.subr.mxu0 %v2230
    %2646 = vmatpush1.msra.mxu0 %v2229
    %2647 = vmatprep.subr.mxu0 %v2234
    %2648 = vmatpush1.msra.mxu0 %v2233
    %2649 = vmatprep.subr.mxu0 %v2238
    %2650 = vmatpush1.msra.mxu0 %v2237
    %2651 = vmatprep.subr.mxu0 %v2242
    %2652 = vmatpush1.msra.mxu0 %v2241
    %2653 = vmatprep.subr.mxu0 %v2246
    %2654 = vmatpush1.msra.mxu0 %v2245
    %2655 = vmatprep.subr.mxu0 %v2250
    %2656 = vmatpush1.msra.mxu0 %v2249
    %2657 = vmatprep.subr.mxu0 %v2254
    %2658 = vmatpush1.msra.mxu0 %v2253
    %2659 = vmatprep.subr.mxu0 %v2258
    %2660 = vmatpush1.msra.mxu0 %v2257
    %2661 = vmatprep.subr.mxu0 %v2262
    %2662 = vmatpush1.msra.mxu0 %v2261
    %2663 = vmatprep.subr.mxu0 %v2266
    %2664 = vmatpush1.msra.mxu0 %v2265
    %2665 = vmatprep.subr.mxu0 %v2270
    %2666 = vmatpush1.msra.mxu0 %v2269
    %2667 = vmatprep.subr.mxu0 %v2274
    %2668 = vmatpush1.msra.mxu0 %v2273
    %2669 = vmatprep.subr.mxu0 %v2278
    %2670 = vmatpush1.msra.mxu0 %v2277
    %2671 = vmatprep.subr.mxu0 %v2282
    %2672 = vmatpush1.msra.mxu0 %v2281
    %2673 = vmatprep.subr.mxu0 %v2286
    %2674 = vmatpush1.msra.mxu0 %v2285
    %2675 = vmatprep.subr.mxu0 0.0
    %2676 = vmatpush1.msra.mxu0 0.0
    %2677 = vmatprep.subr.mxu0 0.0
    %2678 = vmatpush1.msra.mxu0 0.0
    %2679 = vmatprep.subr.mxu0 0.0
    %2680 = vmatpush1.msra.mxu0 0.0
    %2681 = vmatprep.subr.mxu0 0.0
    %2682 = vmatpush1.msra.mxu0 0.0
    %2683 = vmatprep.subr.mxu0 0.0
    %2684 = vmatpush1.msra.mxu0 0.0
    %2685 = vmatprep.subr.mxu0 0.0
    %2686 = vmatpush1.msra.mxu0 0.0
    %2687 = vmatprep.subr.mxu0 0.0
    %2688 = vmatpush1.msra.mxu0 0.0
    %2689 = vmatprep.subr.mxu0 0.0
    %2690 = vmatpush1.msra.mxu0 0.0
    %2691 = vmatprep.subr.mxu0 0.0
    %2692 = vmatpush1.msra.mxu0 0.0
    %2693 = vmatprep.subr.mxu0 0.0
    %2694 = vmatpush1.msra.mxu0 0.0
    %2695 = vmatprep.subr.mxu0 0.0
    %2696 = vmatpush1.msra.mxu0 0.0
    %2697 = vmatprep.subr.mxu0 0.0
    %2698 = vmatpush1.msra.mxu0 0.0
    %2699 = vmatprep.subr.mxu0 0.0
    %2700 = vmatpush1.msra.mxu0 0.0
    %2701 = vmatprep.subr.mxu0 0.0
    %2702 = vmatpush1.msra.mxu0 0.0
    %2703 = vmatprep.subr.mxu0 0.0
    %2704 = vmatpush1.msra.mxu0 0.0
    %2705 = vmatprep.subr.mxu0 0.0
    %2706 = vmatpush1.msra.mxu0 0.0
    %2707 = vmatprep.mubr.f32.mxu0 0.0
    %2708 = vmatmul.mubr.f32.gmra.mrb[0].mxu0 %v2637
    %v2709 = vpop.f32.mrb[0].mxu0
    %v2710 = vadd.f32 0.0, %v2709
    %v2711 = vpop.f32.mrb[0].mxu0
    %v2712 = vadd.f32 0.0, %v2711
    %2713 = vdwg.mxu0
    %2714 = vmatprep.subr.mxu0 %v2228
    %2715 = vmatpush1.msra.mxu0 %v2227
    %2716 = vmatprep.subr.mxu0 %v2232
    %2717 = vmatpush1.msra.mxu0 %v2231
    %2718 = vmatprep.subr.mxu0 %v2236
    %2719 = vmatpush1.msra.mxu0 %v2235
    %2720 = vmatprep.subr.mxu0 %v2240
    %2721 = vmatpush1.msra.mxu0 %v2239
    %2722 = vmatprep.subr.mxu0 %v2244
    %2723 = vmatpush1.msra.mxu0 %v2243
    %2724 = vmatprep.subr.mxu0 %v2248
    %2725 = vmatpush1.msra.mxu0 %v2247
    %2726 = vmatprep.subr.mxu0 %v2252
    %2727 = vmatpush1.msra.mxu0 %v2251
    %2728 = vmatprep.subr.mxu0 %v2256
    %2729 = vmatpush1.msra.mxu0 %v2255
    %2730 = vmatprep.subr.mxu0 %v2260
    %2731 = vmatpush1.msra.mxu0 %v2259
    %2732 = vmatprep.subr.mxu0 %v2264
    %2733 = vmatpush1.msra.mxu0 %v2263
    %2734 = vmatprep.subr.mxu0 %v2268
    %2735 = vmatpush1.msra.mxu0 %v2267
    %2736 = vmatprep.subr.mxu0 %v2272
    %2737 = vmatpush1.msra.mxu0 %v2271
    %2738 = vmatprep.subr.mxu0 %v2276
    %2739 = vmatpush1.msra.mxu0 %v2275
    %2740 = vmatprep.subr.mxu0 %v2280
    %2741 = vmatpush1.msra.mxu0 %v2279
    %2742 = vmatprep.subr.mxu0 %v2284
    %2743 = vmatpush1.msra.mxu0 %v2283
    %2744 = vmatprep.subr.mxu0 %v2288
    %2745 = vmatpush1.msra.mxu0 %v2287
    %2746 = vmatprep.subr.mxu0 0.0
    %2747 = vmatpush1.msra.mxu0 0.0
    %2748 = vmatprep.subr.mxu0 0.0
    %2749 = vmatpush1.msra.mxu0 0.0
    %2750 = vmatprep.subr.mxu0 0.0
    %2751 = vmatpush1.msra.mxu0 0.0
    %2752 = vmatprep.subr.mxu0 0.0
    %2753 = vmatpush1.msra.mxu0 0.0
    %2754 = vmatprep.subr.mxu0 0.0
    %2755 = vmatpush1.msra.mxu0 0.0
    %2756 = vmatprep.subr.mxu0 0.0
    %2757 = vmatpush1.msra.mxu0 0.0
    %2758 = vmatprep.subr.mxu0 0.0
    %2759 = vmatpush1.msra.mxu0 0.0
    %2760 = vmatprep.subr.mxu0 0.0
    %2761 = vmatpush1.msra.mxu0 0.0
    %2762 = vmatprep.subr.mxu0 0.0
    %2763 = vmatpush1.msra.mxu0 0.0
    %2764 = vmatprep.subr.mxu0 0.0
    %2765 = vmatpush1.msra.mxu0 0.0
    %2766 = vmatprep.subr.mxu0 0.0
    %2767 = vmatpush1.msra.mxu0 0.0
    %2768 = vmatprep.subr.mxu0 0.0
    %2769 = vmatpush1.msra.mxu0 0.0
    %2770 = vmatprep.subr.mxu0 0.0
    %2771 = vmatpush1.msra.mxu0 0.0
    %2772 = vmatprep.subr.mxu0 0.0
    %2773 = vmatpush1.msra.mxu0 0.0
    %2774 = vmatprep.subr.mxu0 0.0
    %2775 = vmatpush1.msra.mxu0 0.0
    %2776 = vmatprep.subr.mxu0 0.0
    %2777 = vmatpush1.msra.mxu0 0.0
    %2778 = vmatprep.mubr.f32.mxu0 0.0
    %2779 = vmatmul.mubr.f32.gmra.mrb[0].mxu0 %v2637
    %v2780 = vpop.f32.mrb[0].mxu0
    %v2781 = vadd.f32 0.0, %v2780
    %v2782 = vpop.f32.mrb[0].mxu0
    %v2783 = vadd.f32 0.0, %v2782
    %2784 = vdwg.mxu0
    %v2785 = vadd.f32 %v2639, %v2710
    %v2786 = vadd.f32 %v2640, %v2712
    %v2787 = vadd.f32 %v2641, %v2781
    %v2788 = vadd.f32 %v2642, %v2783
    %v2789 = vxor.u32 %v2785, 2147483648
    %v2790 = vxor.u32 %v2786, 2147483648
    %v2791 = vxor.u32 %v2787, 2147483648
    %v2792 = vmul.f32 %v2789, 1.442695
    %v2793 = vpow.pop %v2792
    %v2794 = vmul.f32 %v2790, 1.442695
    %v2795 = vpow.pop %v2794
    %v2796 = vmul.f32 %v2791, 1.442695
    %v2797 = vpow.pop %v2796
    %v2798 = vadd.f32 %v2793, 1.0
    %v2799 = vadd.f32 %v2795, 1.0
    %v2800 = vadd.f32 %v2797, 1.0
    %v2801 = vrcp.pop %v2798
    %v2802 = vmul.f32 1.0, %v2801
    %v2803 = vrcp.pop %v2799
    %v2804 = vmul.f32 1.0, %v2803
    %v2805 = vrcp.pop %v2800
    %v2806 = vmul.f32 1.0, %v2805
    %v2807 = vtanh.pop %v2788
    %v2808 = vmul.f32 %v2804, %v2635
    %v2809 = vmul.f32 %v2802, %v2807
    %v2810 = vadd.f32 %v2808, %v2809
    %v2811 = vtanh.pop %v2810
    %v2812 = vmul.f32 %v2806, %v2811
    %2813 = vst [vmem:[#allocation2 + $0x10] sm:$0xff] %v2812
    %v2814 = vld [vmem:[#allocation3 + $0x60] sm:$0xff]
    %v2815 = vld [vmem:[#allocation3 + $0x68] sm:$0xff]
    %v2816 = vld [vmem:[#allocation3 + $0x70] sm:$0xff]
    %v2817 = vld [vmem:[#allocation3 + $0x78] sm:$0xff]
    %2818 = vmatprep.subr.mxu0 %v2226
    %2819 = vmatpush1.msra.mxu0 %v2225
    %2820 = vmatprep.subr.mxu0 %v2230
    %2821 = vmatpush1.msra.mxu0 %v2229
    %2822 = vmatprep.subr.mxu0 %v2234
    %2823 = vmatpush1.msra.mxu0 %v2233
    %2824 = vmatprep.subr.mxu0 %v2238
    %2825 = vmatpush1.msra.mxu0 %v2237
    %2826 = vmatprep.subr.mxu0 %v2242
    %2827 = vmatpush1.msra.mxu0 %v2241
    %2828 = vmatprep.subr.mxu0 %v2246
    %2829 = vmatpush1.msra.mxu0 %v2245
    %2830 = vmatprep.subr.mxu0 %v2250
    %2831 = vmatpush1.msra.mxu0 %v2249
    %2832 = vmatprep.subr.mxu0 %v2254
    %2833 = vmatpush1.msra.mxu0 %v2253
    %2834 = vmatprep.subr.mxu0 %v2258
    %2835 = vmatpush1.msra.mxu0 %v2257
    %2836 = vmatprep.subr.mxu0 %v2262
    %2837 = vmatpush1.msra.mxu0 %v2261
    %2838 = vmatprep.subr.mxu0 %v2266
    %2839 = vmatpush1.msra.mxu0 %v2265
    %2840 = vmatprep.subr.mxu0 %v2270
    %2841 = vmatpush1.msra.mxu0 %v2269
    %2842 = vmatprep.subr.mxu0 %v2274
    %2843 = vmatpush1.msra.mxu0 %v2273
    %2844 = vmatprep.subr.mxu0 %v2278
    %2845 = vmatpush1.msra.mxu0 %v2277
    %2846 = vmatprep.subr.mxu0 %v2282
    %2847 = vmatpush1.msra.mxu0 %v2281
    %2848 = vmatprep.subr.mxu0 %v2286
    %2849 = vmatpush1.msra.mxu0 %v2285
    %2850 = vmatprep.subr.mxu0 0.0
    %2851 = vmatpush1.msra.mxu0 0.0
    %2852 = vmatprep.subr.mxu0 0.0
    %2853 = vmatpush1.msra.mxu0 0.0
    %2854 = vmatprep.subr.mxu0 0.0
    %2855 = vmatpush1.msra.mxu0 0.0
    %2856 = vmatprep.subr.mxu0 0.0
    %2857 = vmatpush1.msra.mxu0 0.0
    %2858 = vmatprep.subr.mxu0 0.0
    %2859 = vmatpush1.msra.mxu0 0.0
    %2860 = vmatprep.subr.mxu0 0.0
    %2861 = vmatpush1.msra.mxu0 0.0
    %2862 = vmatprep.subr.mxu0 0.0
    %2863 = vmatpush1.msra.mxu0 0.0
    %2864 = vmatprep.subr.mxu0 0.0
    %2865 = vmatpush1.msra.mxu0 0.0
    %2866 = vmatprep.subr.mxu0 0.0
    %2867 = vmatpush1.msra.mxu0 0.0
    %2868 = vmatprep.subr.mxu0 0.0
    %2869 = vmatpush1.msra.mxu0 0.0
    %2870 = vmatprep.subr.mxu0 0.0
    %2871 = vmatpush1.msra.mxu0 0.0
    %2872 = vmatprep.subr.mxu0 0.0
    %2873 = vmatpush1.msra.mxu0 0.0
    %2874 = vmatprep.subr.mxu0 0.0
    %2875 = vmatpush1.msra.mxu0 0.0
    %2876 = vmatprep.subr.mxu0 0.0
    %2877 = vmatpush1.msra.mxu0 0.0
    %2878 = vmatprep.subr.mxu0 0.0
    %2879 = vmatpush1.msra.mxu0 0.0
    %2880 = vmatprep.subr.mxu0 0.0
    %2881 = vmatpush1.msra.mxu0 0.0
    %2882 = vmatprep.mubr.f32.mxu0 0.0
    %2883 = vmatmul.mubr.f32.gmra.mrb[0].mxu0 %v2812
    %v2884 = vpop.f32.mrb[0].mxu0
    %v2885 = vadd.f32 0.0, %v2884
    %v2886 = vpop.f32.mrb[0].mxu0
    %v2887 = vadd.f32 0.0, %v2886
    %2888 = vdwg.mxu0
    %2889 = vmatprep.subr.mxu0 %v2228
    %2890 = vmatpush1.msra.mxu0 %v2227
    %2891 = vmatprep.subr.mxu0 %v2232
    %2892 = vmatpush1.msra.mxu0 %v2231
    %2893 = vmatprep.subr.mxu0 %v2236
    %2894 = vmatpush1.msra.mxu0 %v2235
    %2895 = vmatprep.subr.mxu0 %v2240
    %2896 = vmatpush1.msra.mxu0 %v2239
    %2897 = vmatprep.subr.mxu0 %v2244
    %2898 = vmatpush1.msra.mxu0 %v2243
    %2899 = vmatprep.subr.mxu0 %v2248
    %2900 = vmatpush1.msra.mxu0 %v2247
    %2901 = vmatprep.subr.mxu0 %v2252
    %2902 = vmatpush1.msra.mxu0 %v2251
    %2903 = vmatprep.subr.mxu0 %v2256
    %2904 = vmatpush1.msra.mxu0 %v2255
    %2905 = vmatprep.subr.mxu0 %v2260
    %2906 = vmatpush1.msra.mxu0 %v2259
    %2907 = vmatprep.subr.mxu0 %v2264
    %2908 = vmatpush1.msra.mxu0 %v2263
    %2909 = vmatprep.subr.mxu0 %v2268
    %2910 = vmatpush1.msra.mxu0 %v2267
    %2911 = vmatprep.subr.mxu0 %v2272
    %2912 = vmatpush1.msra.mxu0 %v2271
    %2913 = vmatprep.subr.mxu0 %v2276
    %2914 = vmatpush1.msra.mxu0 %v2275
    %2915 = vmatprep.subr.mxu0 %v2280
    %2916 = vmatpush1.msra.mxu0 %v2279
    %2917 = vmatprep.subr.mxu0 %v2284
    %2918 = vmatpush1.msra.mxu0 %v2283
    %2919 = vmatprep.subr.mxu0 %v2288
    %2920 = vmatpush1.msra.mxu0 %v2287
    %2921 = vmatprep.subr.mxu0 0.0
    %2922 = vmatpush1.msra.mxu0 0.0
    %2923 = vmatprep.subr.mxu0 0.0
    %2924 = vmatpush1.msra.mxu0 0.0
    %2925 = vmatprep.subr.mxu0 0.0
    %2926 = vmatpush1.msra.mxu0 0.0
    %2927 = vmatprep.subr.mxu0 0.0
    %2928 = vmatpush1.msra.mxu0 0.0
    %2929 = vmatprep.subr.mxu0 0.0
    %2930 = vmatpush1.msra.mxu0 0.0
    %2931 = vmatprep.subr.mxu0 0.0
    %2932 = vmatpush1.msra.mxu0 0.0
    %2933 = vmatprep.subr.mxu0 0.0
    %2934 = vmatpush1.msra.mxu0 0.0
    %2935 = vmatprep.subr.mxu0 0.0
    %2936 = vmatpush1.msra.mxu0 0.0
    %2937 = vmatprep.subr.mxu0 0.0
    %2938 = vmatpush1.msra.mxu0 0.0
    %2939 = vmatprep.subr.mxu0 0.0
    %2940 = vmatpush1.msra.mxu0 0.0
    %2941 = vmatprep.subr.mxu0 0.0
    %2942 = vmatpush1.msra.mxu0 0.0
    %2943 = vmatprep.subr.mxu0 0.0
    %2944 = vmatpush1.msra.mxu0 0.0
    %2945 = vmatprep.subr.mxu0 0.0
    %2946 = vmatpush1.msra.mxu0 0.0
    %2947 = vmatprep.subr.mxu0 0.0
    %2948 = vmatpush1.msra.mxu0 0.0
    %2949 = vmatprep.subr.mxu0 0.0
    %2950 = vmatpush1.msra.mxu0 0.0
    %2951 = vmatprep.subr.mxu0 0.0
    %2952 = vmatpush1.msra.mxu0 0.0
    %2953 = vmatprep.mubr.f32.mxu0 0.0
    %2954 = vmatmul.mubr.f32.gmra.mrb[0].mxu0 %v2812
    %v2955 = vpop.f32.mrb[0].mxu0
    %v2956 = vadd.f32 0.0, %v2955
    %v2957 = vpop.f32.mrb[0].mxu0
    %v2958 = vadd.f32 0.0, %v2957
    %2959 = vdwg.mxu0
    %v2960 = vadd.f32 %v2814, %v2885
    %v2961 = vadd.f32 %v2815, %v2887
    %v2962 = vadd.f32 %v2816, %v2956
    %v2963 = vadd.f32 %v2817, %v2958
    %v2964 = vxor.u32 %v2960, 2147483648
    %v2965 = vxor.u32 %v2961, 2147483648
    %v2966 = vxor.u32 %v2962, 2147483648
    %v2967 = vmul.f32 %v2964, 1.442695
    %v2968 = vpow.pop %v2967
    %v2969 = vmul.f32 %v2965, 1.442695
    %v2970 = vpow.pop %v2969
    %v2971 = vmul.f32 %v2966, 1.442695
    %v2972 = vpow.pop %v2971
    %v2973 = vadd.f32 %v2968, 1.0
    %v2974 = vadd.f32 %v2970, 1.0
    %v2975 = vadd.f32 %v2972, 1.0
    %v2976 = vrcp.pop %v2973
    %v2977 = vmul.f32 1.0, %v2976
    %v2978 = vrcp.pop %v2974
    %v2979 = vmul.f32 1.0, %v2978
    %v2980 = vrcp.pop %v2975
    %v2981 = vmul.f32 1.0, %v2980
    %v2982 = vtanh.pop %v2963
    %v2983 = vmul.f32 %v2979, %v2810
    %v2984 = vmul.f32 %v2977, %v2982
    %v2985 = vadd.f32 %v2983, %v2984
    %v2986 = vtanh.pop %v2985
    %v2987 = vmul.f32 %v2981, %v2986
    %2988 = vst [vmem:[#allocation2 + $0x18] sm:$0xff] %v2987
    %v2989 = vld [vmem:[#allocation3 + $0x80] sm:$0xff]
    %v2990 = vld [vmem:[#allocation3 + $0x88] sm:$0xff]
    %v2991 = vld [vmem:[#allocation3 + $0x90] sm:$0xff]
    %v2992 = vld [vmem:[#allocation3 + $0x98] sm:$0xff]
    %2993 = vmatprep.subr.mxu0 %v2226
    %2994 = vmatpush1.msra.mxu0 %v2225
    %2995 = vmatprep.subr.mxu0 %v2230
    %2996 = vmatpush1.msra.mxu0 %v2229
    %2997 = vmatprep.subr.mxu0 %v2234
    %2998 = vmatpush1.msra.mxu0 %v2233
    %2999 = vmatprep.subr.mxu0 %v2238
    %3000 = vmatpush1.msra.mxu0 %v2237
    %3001 = vmatprep.subr.mxu0 %v2242
    %3002 = vmatpush1.msra.mxu0 %v2241
    %3003 = vmatprep.subr.mxu0 %v2246
    %3004 = vmatpush1.msra.mxu0 %v2245
    %3005 = vmatprep.subr.mxu0 %v2250
    %3006 = vmatpush1.msra.mxu0 %v2249
    %3007 = vmatprep.subr.mxu0 %v2254
    %3008 = vmatpush1.msra.mxu0 %v2253
    %3009 = vmatprep.subr.mxu0 %v2258
    %3010 = vmatpush1.msra.mxu0 %v2257
    %3011 = vmatprep.subr.mxu0 %v2262
    %3012 = vmatpush1.msra.mxu0 %v2261
    %3013 = vmatprep.subr.mxu0 %v2266
    %3014 = vmatpush1.msra.mxu0 %v2265
    %3015 = vmatprep.subr.mxu0 %v2270
    %3016 = vmatpush1.msra.mxu0 %v2269
    %3017 = vmatprep.subr.mxu0 %v2274
    %3018 = vmatpush1.msra.mxu0 %v2273
    %3019 = vmatprep.subr.mxu0 %v2278
    %3020 = vmatpush1.msra.mxu0 %v2277
    %3021 = vmatprep.subr.mxu0 %v2282
    %3022 = vmatpush1.msra.mxu0 %v2281
    %3023 = vmatprep.subr.mxu0 %v2286
    %3024 = vmatpush1.msra.mxu0 %v2285
    %3025 = vmatprep.subr.mxu0 0.0
    %3026 = vmatpush1.msra.mxu0 0.0
    %3027 = vmatprep.subr.mxu0 0.0
    %3028 = vmatpush1.msra.mxu0 0.0
    %3029 = vmatprep.subr.mxu0 0.0
    %3030 = vmatpush1.msra.mxu0 0.0
    %3031 = vmatprep.subr.mxu0 0.0
    %3032 = vmatpush1.msra.mxu0 0.0
    %3033 = vmatprep.subr.mxu0 0.0
    %3034 = vmatpush1.msra.mxu0 0.0
    %3035 = vmatprep.subr.mxu0 0.0
    %3036 = vmatpush1.msra.mxu0 0.0
    %3037 = vmatprep.subr.mxu0 0.0
    %3038 = vmatpush1.msra.mxu0 0.0
    %3039 = vmatprep.subr.mxu0 0.0
    %3040 = vmatpush1.msra.mxu0 0.0
    %3041 = vmatprep.subr.mxu0 0.0
    %3042 = vmatpush1.msra.mxu0 0.0
    %3043 = vmatprep.subr.mxu0 0.0
    %3044 = vmatpush1.msra.mxu0 0.0
    %3045 = vmatprep.subr.mxu0 0.0
    %3046 = vmatpush1.msra.mxu0 0.0
    %3047 = vmatprep.subr.mxu0 0.0
    %3048 = vmatpush1.msra.mxu0 0.0
    %3049 = vmatprep.subr.mxu0 0.0
    %3050 = vmatpush1.msra.mxu0 0.0
    %3051 = vmatprep.subr.mxu0 0.0
    %3052 = vmatpush1.msra.mxu0 0.0
    %3053 = vmatprep.subr.mxu0 0.0
    %3054 = vmatpush1.msra.mxu0 0.0
    %3055 = vmatprep.subr.mxu0 0.0
    %3056 = vmatpush1.msra.mxu0 0.0
    %3057 = vmatprep.mubr.f32.mxu0 0.0
    %3058 = vmatmul.mubr.f32.gmra.mrb[0].mxu0 %v2987
    %v3059 = vpop.f32.mrb[0].mxu0
    %v3060 = vadd.f32 0.0, %v3059
    %v3061 = vpop.f32.mrb[0].mxu0
    %v3062 = vadd.f32 0.0, %v3061
    %3063 = vdwg.mxu0
    %3064 = vmatprep.subr.mxu0 %v2228
    %3065 = vmatpush1.msra.mxu0 %v2227
    %3066 = vmatprep.subr.mxu0 %v2232
    %3067 = vmatpush1.msra.mxu0 %v2231
    %3068 = vmatprep.subr.mxu0 %v2236
    %3069 = vmatpush1.msra.mxu0 %v2235
    %3070 = vmatprep.subr.mxu0 %v2240
    %3071 = vmatpush1.msra.mxu0 %v2239
    %3072 = vmatprep.subr.mxu0 %v2244
    %3073 = vmatpush1.msra.mxu0 %v2243
    %3074 = vmatprep.subr.mxu0 %v2248
    %3075 = vmatpush1.msra.mxu0 %v2247
    %3076 = vmatprep.subr.mxu0 %v2252
    %3077 = vmatpush1.msra.mxu0 %v2251
    %3078 = vmatprep.subr.mxu0 %v2256
    %3079 = vmatpush1.msra.mxu0 %v2255
    %3080 = vmatprep.subr.mxu0 %v2260
    %3081 = vmatpush1.msra.mxu0 %v2259
    %3082 = vmatprep.subr.mxu0 %v2264
    %3083 = vmatpush1.msra.mxu0 %v2263
    %3084 = vmatprep.subr.mxu0 %v2268
    %3085 = vmatpush1.msra.mxu0 %v2267
    %3086 = vmatprep.subr.mxu0 %v2272
    %3087 = vmatpush1.msra.mxu0 %v2271
    %3088 = vmatprep.subr.mxu0 %v2276
    %3089 = vmatpush1.msra.mxu0 %v2275
    %3090 = vmatprep.subr.mxu0 %v2280
    %3091 = vmatpush1.msra.mxu0 %v2279
    %3092 = vmatprep.subr.mxu0 %v2284
    %3093 = vmatpush1.msra.mxu0 %v2283
    %3094 = vmatprep.subr.mxu0 %v2288
    %3095 = vmatpush1.msra.mxu0 %v2287
    %3096 = vmatprep.subr.mxu0 0.0
    %3097 = vmatpush1.msra.mxu0 0.0
    %3098 = vmatprep.subr.mxu0 0.0
    %3099 = vmatpush1.msra.mxu0 0.0
    %3100 = vmatprep.subr.mxu0 0.0
    %3101 = vmatpush1.msra.mxu0 0.0
    %3102 = vmatprep.subr.mxu0 0.0
    %3103 = vmatpush1.msra.mxu0 0.0
    %3104 = vmatprep.subr.mxu0 0.0
    %3105 = vmatpush1.msra.mxu0 0.0
    %3106 = vmatprep.subr.mxu0 0.0
    %3107 = vmatpush1.msra.mxu0 0.0
    %3108 = vmatprep.subr.mxu0 0.0
    %3109 = vmatpush1.msra.mxu0 0.0
    %3110 = vmatprep.subr.mxu0 0.0
    %3111 = vmatpush1.msra.mxu0 0.0
    %3112 = vmatprep.subr.mxu0 0.0
    %3113 = vmatpush1.msra.mxu0 0.0
    %3114 = vmatprep.subr.mxu0 0.0
    %3115 = vmatpush1.msra.mxu0 0.0
    %3116 = vmatprep.subr.mxu0 0.0
    %3117 = vmatpush1.msra.mxu0 0.0
    %3118 = vmatprep.subr.mxu0 0.0
    %3119 = vmatpush1.msra.mxu0 0.0
    %3120 = vmatprep.subr.mxu0 0.0
    %3121 = vmatpush1.msra.mxu0 0.0
    %3122 = vmatprep.subr.mxu0 0.0
    %3123 = vmatpush1.msra.mxu0 0.0
    %3124 = vmatprep.subr.mxu0 0.0
    %3125 = vmatpush1.msra.mxu0 0.0
    %3126 = vmatprep.subr.mxu0 0.0
    %3127 = vmatpush1.msra.mxu0 0.0
    %3128 = vmatprep.mubr.f32.mxu0 0.0
    %3129 = vmatmul.mubr.f32.gmra.mrb[0].mxu0 %v2987
    %v3130 = vpop.f32.mrb[0].mxu0
    %v3131 = vadd.f32 0.0, %v3130
    %v3132 = vpop.f32.mrb[0].mxu0
    %v3133 = vadd.f32 0.0, %v3132
    %3134 = vdwg.mxu0
    %v3135 = vadd.f32 %v2989, %v3060
    %v3136 = vadd.f32 %v2990, %v3062
    %v3137 = vadd.f32 %v2991, %v3131
    %v3138 = vadd.f32 %v2992, %v3133
    %v3139 = vxor.u32 %v3135, 2147483648
    %v3140 = vxor.u32 %v3136, 2147483648
    %v3141 = vxor.u32 %v3137, 2147483648
    %v3142 = vmul.f32 %v3139, 1.442695
    %v3143 = vpow.pop %v3142
    %v3144 = vmul.f32 %v3140, 1.442695
    %v3145 = vpow.pop %v3144
    %v3146 = vmul.f32 %v3141, 1.442695
    %v3147 = vpow.pop %v3146
    %v3148 = vadd.f32 %v3143, 1.0
    %v3149 = vadd.f32 %v3145, 1.0
    %v3150 = vadd.f32 %v3147, 1.0
    %v3151 = vrcp.pop %v3148
    %v3152 = vmul.f32 1.0, %v3151
    %v3153 = vrcp.pop %v3149
    %v3154 = vmul.f32 1.0, %v3153
    %v3155 = vrcp.pop %v3150
    %v3156 = vmul.f32 1.0, %v3155
    %v3157 = vtanh.pop %v3138
    %v3158 = vmul.f32 %v3154, %v2985
    %v3159 = vmul.f32 %v3152, %v3157
    %v3160 = vadd.f32 %v3158, %v3159
    %v3161 = vtanh.pop %v3160
    %v3162 = vmul.f32 %v3156, %v3161
    %3163 = vst [vmem:[#allocation2 + $0x20] sm:$0xff] %v3162
    %v3164 = vld [vmem:[#allocation3 + $0xa0] sm:$0xff]
    %v3165 = vld [vmem:[#allocation3 + $0xa8] sm:$0xff]
    %v3166 = vld [vmem:[#allocation3 + $0xb0] sm:$0xff]
    %v3167 = vld [vmem:[#allocation3 + $0xb8] sm:$0xff]
    %3168 = vmatprep.subr.mxu0 %v2226
    %3169 = vmatpush1.msra.mxu0 %v2225
    %3170 = vmatprep.subr.mxu0 %v2230
    %3171 = vmatpush1.msra.mxu0 %v2229
    %3172 = vmatprep.subr.mxu0 %v2234
    %3173 = vmatpush1.msra.mxu0 %v2233
    %3174 = vmatprep.subr.mxu0 %v2238
    %3175 = vmatpush1.msra.mxu0 %v2237
    %3176 = vmatprep.subr.mxu0 %v2242
    %3177 = vmatpush1.msra.mxu0 %v2241
    %3178 = vmatprep.subr.mxu0 %v2246
    %3179 = vmatpush1.msra.mxu0 %v2245
    %3180 = vmatprep.subr.mxu0 %v2250
    %3181 = vmatpush1.msra.mxu0 %v2249
    %3182 = vmatprep.subr.mxu0 %v2254
    %3183 = vmatpush1.msra.mxu0 %v2253
    %3184 = vmatprep.subr.mxu0 %v2258
    %3185 = vmatpush1.msra.mxu0 %v2257
    %3186 = vmatprep.subr.mxu0 %v2262
    %3187 = vmatpush1.msra.mxu0 %v2261
    %3188 = vmatprep.subr.mxu0 %v2266
    %3189 = vmatpush1.msra.mxu0 %v2265
    %3190 = vmatprep.subr.mxu0 %v2270
    %3191 = vmatpush1.msra.mxu0 %v2269
    %3192 = vmatprep.subr.mxu0 %v2274
    %3193 = vmatpush1.msra.mxu0 %v2273
    %3194 = vmatprep.subr.mxu0 %v2278
    %3195 = vmatpush1.msra.mxu0 %v2277
    %3196 = vmatprep.subr.mxu0 %v2282
    %3197 = vmatpush1.msra.mxu0 %v2281
    %3198 = vmatprep.subr.mxu0 %v2286
    %3199 = vmatpush1.msra.mxu0 %v2285
    %3200 = vmatprep.subr.mxu0 0.0
    %3201 = vmatpush1.msra.mxu0 0.0
    %3202 = vmatprep.subr.mxu0 0.0
    %3203 = vmatpush1.msra.mxu0 0.0
    %3204 = vmatprep.subr.mxu0 0.0
    %3205 = vmatpush1.msra.mxu0 0.0
    %3206 = vmatprep.subr.mxu0 0.0
    %3207 = vmatpush1.msra.mxu0 0.0
    %3208 = vmatprep.subr.mxu0 0.0
    %3209 = vmatpush1.msra.mxu0 0.0
    %3210 = vmatprep.subr.mxu0 0.0
    %3211 = vmatpush1.msra.mxu0 0.0
    %3212 = vmatprep.subr.mxu0 0.0
    %3213 = vmatpush1.msra.mxu0 0.0
    %3214 = vmatprep.subr.mxu0 0.0
    %3215 = vmatpush1.msra.mxu0 0.0
    %3216 = vmatprep.subr.mxu0 0.0
    %3217 = vmatpush1.msra.mxu0 0.0
    %3218 = vmatprep.subr.mxu0 0.0
    %3219 = vmatpush1.msra.mxu0 0.0
    %3220 = vmatprep.subr.mxu0 0.0
    %3221 = vmatpush1.msra.mxu0 0.0
    %3222 = vmatprep.subr.mxu0 0.0
    %3223 = vmatpush1.msra.mxu0 0.0
    %3224 = vmatprep.subr.mxu0 0.0
    %3225 = vmatpush1.msra.mxu0 0.0
    %3226 = vmatprep.subr.mxu0 0.0
    %3227 = vmatpush1.msra.mxu0 0.0
    %3228 = vmatprep.subr.mxu0 0.0
    %3229 = vmatpush1.msra.mxu0 0.0
    %3230 = vmatprep.subr.mxu0 0.0
    %3231 = vmatpush1.msra.mxu0 0.0
    %3232 = vmatprep.mubr.f32.mxu0 0.0
    %3233 = vmatmul.mubr.f32.gmra.mrb[0].mxu0 %v3162
    %v3234 = vpop.f32.mrb[0].mxu0
    %v3235 = vadd.f32 0.0, %v3234
    %v3236 = vpop.f32.mrb[0].mxu0
    %v3237 = vadd.f32 0.0, %v3236
    %3238 = vdwg.mxu0
    %3239 = vmatprep.subr.mxu0 %v2228
    %3240 = vmatpush1.msra.mxu0 %v2227
    %3241 = vmatprep.subr.mxu0 %v2232
    %3242 = vmatpush1.msra.mxu0 %v2231
    %3243 = vmatprep.subr.mxu0 %v2236
    %3244 = vmatpush1.msra.mxu0 %v2235
    %3245 = vmatprep.subr.mxu0 %v2240
    %3246 = vmatpush1.msra.mxu0 %v2239
    %3247 = vmatprep.subr.mxu0 %v2244
    %3248 = vmatpush1.msra.mxu0 %v2243
    %3249 = vmatprep.subr.mxu0 %v2248
    %3250 = vmatpush1.msra.mxu0 %v2247
    %3251 = vmatprep.subr.mxu0 %v2252
    %3252 = vmatpush1.msra.mxu0 %v2251
    %3253 = vmatprep.subr.mxu0 %v2256
    %3254 = vmatpush1.msra.mxu0 %v2255
    %3255 = vmatprep.subr.mxu0 %v2260
    %3256 = vmatpush1.msra.mxu0 %v2259
    %3257 = vmatprep.subr.mxu0 %v2264
    %3258 = vmatpush1.msra.mxu0 %v2263
    %3259 = vmatprep.subr.mxu0 %v2268
    %3260 = vmatpush1.msra.mxu0 %v2267
    %3261 = vmatprep.subr.mxu0 %v2272
    %3262 = vmatpush1.msra.mxu0 %v2271
    %3263 = vmatprep.subr.mxu0 %v2276
    %3264 = vmatpush1.msra.mxu0 %v2275
    %3265 = vmatprep.subr.mxu0 %v2280
    %3266 = vmatpush1.msra.mxu0 %v2279
    %3267 = vmatprep.subr.mxu0 %v2284
    %3268 = vmatpush1.msra.mxu0 %v2283
    %3269 = vmatprep.subr.mxu0 %v2288
    %3270 = vmatpush1.msra.mxu0 %v2287
    %3271 = vmatprep.subr.mxu0 0.0
    %3272 = vmatpush1.msra.mxu0 0.0
    %3273 = vmatprep.subr.mxu0 0.0
    %3274 = vmatpush1.msra.mxu0 0.0
    %3275 = vmatprep.subr.mxu0 0.0
    %3276 = vmatpush1.msra.mxu0 0.0
    %3277 = vmatprep.subr.mxu0 0.0
    %3278 = vmatpush1.msra.mxu0 0.0
    %3279 = vmatprep.subr.mxu0 0.0
    %3280 = vmatpush1.msra.mxu0 0.0
    %3281 = vmatprep.subr.mxu0 0.0
    %3282 = vmatpush1.msra.mxu0 0.0
    %3283 = vmatprep.subr.mxu0 0.0
    %3284 = vmatpush1.msra.mxu0 0.0
    %3285 = vmatprep.subr.mxu0 0.0
    %3286 = vmatpush1.msra.mxu0 0.0
    %3287 = vmatprep.subr.mxu0 0.0
    %3288 = vmatpush1.msra.mxu0 0.0
    %3289 = vmatprep.subr.mxu0 0.0
    %3290 = vmatpush1.msra.mxu0 0.0
    %3291 = vmatprep.subr.mxu0 0.0
    %3292 = vmatpush1.msra.mxu0 0.0
    %3293 = vmatprep.subr.mxu0 0.0
    %3294 = vmatpush1.msra.mxu0 0.0
    %3295 = vmatprep.subr.mxu0 0.0
    %3296 = vmatpush1.msra.mxu0 0.0
    %3297 = vmatprep.subr.mxu0 0.0
    %3298 = vmatpush1.msra.mxu0 0.0
    %3299 = vmatprep.subr.mxu0 0.0
    %3300 = vmatpush1.msra.mxu0 0.0
    %3301 = vmatprep.subr.mxu0 0.0
    %3302 = vmatpush1.msra.mxu0 0.0
    %3303 = vmatprep.mubr.f32.mxu0 0.0
    %3304 = vmatmul.mubr.f32.gmra.mrb[0].mxu0 %v3162
    %v3305 = vpop.f32.mrb[0].mxu0
    %v3306 = vadd.f32 0.0, %v3305
    %v3307 = vpop.f32.mrb[0].mxu0
    %v3308 = vadd.f32 0.0, %v3307
    %3309 = vdwg.mxu0
    %v3310 = vadd.f32 %v3164, %v3235
    %v3311 = vadd.f32 %v3165, %v3237
    %v3312 = vadd.f32 %v3166, %v3306
    %v3313 = vadd.f32 %v3167, %v3308
    %v3314 = vxor.u32 %v3310, 2147483648
    %v3315 = vxor.u32 %v3311, 2147483648
    %v3316 = vxor.u32 %v3312, 2147483648
    %v3317 = vmul.f32 %v3314, 1.442695
    %v3318 = vpow.pop %v3317
    %v3319 = vmul.f32 %v3315, 1.442695
    %v3320 = vpow.pop %v3319
    %v3321 = vmul.f32 %v3316, 1.442695
    %v3322 = vpow.pop %v3321
    %v3323 = vadd.f32 %v3318, 1.0
    %v3324 = vadd.f32 %v3320, 1.0
    %v3325 = vadd.f32 %v3322, 1.0
    %v3326 = vrcp.pop %v3323
    %v3327 = vmul.f32 1.0, %v3326
    %v3328 = vrcp.pop %v3324
    %v3329 = vmul.f32 1.0, %v3328
    %v3330 = vrcp.pop %v3325
    %v3331 = vmul.f32 1.0, %v3330
    %v3332 = vtanh.pop %v3313
    %v3333 = vmul.f32 %v3329, %v3160
    %v3334 = vmul.f32 %v3327, %v3332
    %v3335 = vadd.f32 %v3333, %v3334
    %v3336 = vtanh.pop %v3335
    %v3337 = vmul.f32 %v3331, %v3336
    %3338 = vst [vmem:[#allocation2 + $0x28] sm:$0xff] %v3337
    %v3339 = vld [vmem:[#allocation3 + $0xc0] sm:$0xff]
    %v3340 = vld [vmem:[#allocation3 + $0xc8] sm:$0xff]
    %v3341 = vld [vmem:[#allocation3 + $0xd0] sm:$0xff]
    %v3342 = vld [vmem:[#allocation3 + $0xd8] sm:$0xff]
    %3343 = vmatprep.subr.mxu0 %v2226
    %3344 = vmatpush1.msra.mxu0 %v2225
    %3345 = vmatprep.subr.mxu0 %v2230
    %3346 = vmatpush1.msra.mxu0 %v2229
    %3347 = vmatprep.subr.mxu0 %v2234
    %3348 = vmatpush1.msra.mxu0 %v2233
    %3349 = vmatprep.subr.mxu0 %v2238
    %3350 = vmatpush1.msra.mxu0 %v2237
    %3351 = vmatprep.subr.mxu0 %v2242
    %3352 = vmatpush1.msra.mxu0 %v2241
    %3353 = vmatprep.subr.mxu0 %v2246
    %3354 = vmatpush1.msra.mxu0 %v2245
    %3355 = vmatprep.subr.mxu0 %v2250
    %3356 = vmatpush1.msra.mxu0 %v2249
    %3357 = vmatprep.subr.mxu0 %v2254
    %3358 = vmatpush1.msra.mxu0 %v2253
    %3359 = vmatprep.subr.mxu0 %v2258
    %3360 = vmatpush1.msra.mxu0 %v2257
    %3361 = vmatprep.subr.mxu0 %v2262
    %3362 = vmatpush1.msra.mxu0 %v2261
    %3363 = vmatprep.subr.mxu0 %v2266
    %3364 = vmatpush1.msra.mxu0 %v2265
    %3365 = vmatprep.subr.mxu0 %v2270
    %3366 = vmatpush1.msra.mxu0 %v2269
    %3367 = vmatprep.subr.mxu0 %v2274
    %3368 = vmatpush1.msra.mxu0 %v2273
    %3369 = vmatprep.subr.mxu0 %v2278
    %3370 = vmatpush1.msra.mxu0 %v2277
    %3371 = vmatprep.subr.mxu0 %v2282
    %3372 = vmatpush1.msra.mxu0 %v2281
    %3373 = vmatprep.subr.mxu0 %v2286
    %3374 = vmatpush1.msra.mxu0 %v2285
    %3375 = vmatprep.subr.mxu0 0.0
    %3376 = vmatpush1.msra.mxu0 0.0
    %3377 = vmatprep.subr.mxu0 0.0
    %3378 = vmatpush1.msra.mxu0 0.0
    %3379 = vmatprep.subr.mxu0 0.0
    %3380 = vmatpush1.msra.mxu0 0.0
    %3381 = vmatprep.subr.mxu0 0.0
    %3382 = vmatpush1.msra.mxu0 0.0
    %3383 = vmatprep.subr.mxu0 0.0
    %3384 = vmatpush1.msra.mxu0 0.0
    %3385 = vmatprep.subr.mxu0 0.0
    %3386 = vmatpush1.msra.mxu0 0.0
    %3387 = vmatprep.subr.mxu0 0.0
    %3388 = vmatpush1.msra.mxu0 0.0
    %3389 = vmatprep.subr.mxu0 0.0
    %3390 = vmatpush1.msra.mxu0 0.0
    %3391 = vmatprep.subr.mxu0 0.0
    %3392 = vmatpush1.msra.mxu0 0.0
    %3393 = vmatprep.subr.mxu0 0.0
    %3394 = vmatpush1.msra.mxu0 0.0
    %3395 = vmatprep.subr.mxu0 0.0
    %3396 = vmatpush1.msra.mxu0 0.0
    %3397 = vmatprep.subr.mxu0 0.0
    %3398 = vmatpush1.msra.mxu0 0.0
    %3399 = vmatprep.subr.mxu0 0.0
    %3400 = vmatpush1.msra.mxu0 0.0
    %3401 = vmatprep.subr.mxu0 0.0
    %3402 = vmatpush1.msra.mxu0 0.0
    %3403 = vmatprep.subr.mxu0 0.0
    %3404 = vmatpush1.msra.mxu0 0.0
    %3405 = vmatprep.subr.mxu0 0.0
    %3406 = vmatpush1.msra.mxu0 0.0
    %3407 = vmatprep.mubr.f32.mxu0 0.0
    %3408 = vmatmul.mubr.f32.gmra.mrb[0].mxu0 %v3337
    %v3409 = vpop.f32.mrb[0].mxu0
    %v3410 = vadd.f32 0.0, %v3409
    %v3411 = vpop.f32.mrb[0].mxu0
    %v3412 = vadd.f32 0.0, %v3411
    %3413 = vdwg.mxu0
    %3414 = vmatprep.subr.mxu0 %v2228
    %3415 = vmatpush1.msra.mxu0 %v2227
    %3416 = vmatprep.subr.mxu0 %v2232
    %3417 = vmatpush1.msra.mxu0 %v2231
    %3418 = vmatprep.subr.mxu0 %v2236
    %3419 = vmatpush1.msra.mxu0 %v2235
    %3420 = vmatprep.subr.mxu0 %v2240
    %3421 = vmatpush1.msra.mxu0 %v2239
    %3422 = vmatprep.subr.mxu0 %v2244
    %3423 = vmatpush1.msra.mxu0 %v2243
    %3424 = vmatprep.subr.mxu0 %v2248
    %3425 = vmatpush1.msra.mxu0 %v2247
    %3426 = vmatprep.subr.mxu0 %v2252
    %3427 = vmatpush1.msra.mxu0 %v2251
    %3428 = vmatprep.subr.mxu0 %v2256
    %3429 = vmatpush1.msra.mxu0 %v2255
    %3430 = vmatprep.subr.mxu0 %v2260
    %3431 = vmatpush1.msra.mxu0 %v2259
    %3432 = vmatprep.subr.mxu0 %v2264
    %3433 = vmatpush1.msra.mxu0 %v2263
    %3434 = vmatprep.subr.mxu0 %v2268
    %3435 = vmatpush1.msra.mxu0 %v2267
    %3436 = vmatprep.subr.mxu0 %v2272
    %3437 = vmatpush1.msra.mxu0 %v2271
    %3438 = vmatprep.subr.mxu0 %v2276
    %3439 = vmatpush1.msra.mxu0 %v2275
    %3440 = vmatprep.subr.mxu0 %v2280
    %3441 = vmatpush1.msra.mxu0 %v2279
    %3442 = vmatprep.subr.mxu0 %v2284
    %3443 = vmatpush1.msra.mxu0 %v2283
    %3444 = vmatprep.subr.mxu0 %v2288
    %3445 = vmatpush1.msra.mxu0 %v2287
    %3446 = vmatprep.subr.mxu0 0.0
    %3447 = vmatpush1.msra.mxu0 0.0
    %3448 = vmatprep.subr.mxu0 0.0
    %3449 = vmatpush1.msra.mxu0 0.0
    %3450 = vmatprep.subr.mxu0 0.0
    %3451 = vmatpush1.msra.mxu0 0.0
    %3452 = vmatprep.subr.mxu0 0.0
    %3453 = vmatpush1.msra.mxu0 0.0
    %3454 = vmatprep.subr.mxu0 0.0
    %3455 = vmatpush1.msra.mxu0 0.0
    %3456 = vmatprep.subr.mxu0 0.0
    %3457 = vmatpush1.msra.mxu0 0.0
    %3458 = vmatprep.subr.mxu0 0.0
    %3459 = vmatpush1.msra.mxu0 0.0
    %3460 = vmatprep.subr.mxu0 0.0
    %3461 = vmatpush1.msra.mxu0 0.0
    %3462 = vmatprep.subr.mxu0 0.0
    %3463 = vmatpush1.msra.mxu0 0.0
    %3464 = vmatprep.subr.mxu0 0.0
    %3465 = vmatpush1.msra.mxu0 0.0
    %3466 = vmatprep.subr.mxu0 0.0
    %3467 = vmatpush1.msra.mxu0 0.0
    %3468 = vmatprep.subr.mxu0 0.0
    %3469 = vmatpush1.msra.mxu0 0.0
    %3470 = vmatprep.subr.mxu0 0.0
    %3471 = vmatpush1.msra.mxu0 0.0
    %3472 = vmatprep.subr.mxu0 0.0
    %3473 = vmatpush1.msra.mxu0 0.0
    %3474 = vmatprep.subr.mxu0 0.0
    %3475 = vmatpush1.msra.mxu0 0.0
    %3476 = vmatprep.subr.mxu0 0.0
    %3477 = vmatpush1.msra.mxu0 0.0
    %3478 = vmatprep.mubr.f32.mxu0 0.0
    %3479 = vmatmul.mubr.f32.gmra.mrb[0].mxu0 %v3337
    %v3480 = vpop.f32.mrb[0].mxu0
    %v3481 = vadd.f32 0.0, %v3480
    %v3482 = vpop.f32.mrb[0].mxu0
    %v3483 = vadd.f32 0.0, %v3482
    %3484 = vdwg.mxu0
    %v3485 = vadd.f32 %v3339, %v3410
    %v3486 = vadd.f32 %v3340, %v3412
    %v3487 = vadd.f32 %v3341, %v3481
    %v3488 = vadd.f32 %v3342, %v3483
    %v3489 = vxor.u32 %v3485, 2147483648
    %v3490 = vxor.u32 %v3486, 2147483648
    %v3491 = vxor.u32 %v3487, 2147483648
    %v3492 = vmul.f32 %v3489, 1.442695
    %v3493 = vpow.pop %v3492
    %v3494 = vmul.f32 %v3490, 1.442695
    %v3495 = vpow.pop %v3494
    %v3496 = vmul.f32 %v3491, 1.442695
    %v3497 = vpow.pop %v3496
    %v3498 = vadd.f32 %v3493, 1.0
    %v3499 = vadd.f32 %v3495, 1.0
    %v3500 = vadd.f32 %v3497, 1.0
    %v3501 = vrcp.pop %v3498
    %v3502 = vmul.f32 1.0, %v3501
    %v3503 = vrcp.pop %v3499
    %v3504 = vmul.f32 1.0, %v3503
    %v3505 = vrcp.pop %v3500
    %v3506 = vmul.f32 1.0, %v3505
    %v3507 = vtanh.pop %v3488
    %v3508 = vmul.f32 %v3504, %v3335
    %v3509 = vmul.f32 %v3502, %v3507
    %v3510 = vadd.f32 %v3508, %v3509
    %v3511 = vtanh.pop %v3510
    %v3512 = vmul.f32 %v3506, %v3511
    %3513 = vst [vmem:[#allocation2 + $0x30] sm:$0xff] %v3512
    %v3514 = vld [vmem:[#allocation3 + $0xe0] sm:$0xff]
    %v3515 = vld [vmem:[#allocation3 + $0xe8] sm:$0xff]
    %v3516 = vld [vmem:[#allocation3 + $0xf0] sm:$0xff]
    %v3517 = vld [vmem:[#allocation3 + $0xf8] sm:$0xff]
    %3518 = vmatprep.subr.mxu0 %v2226
    %3519 = vmatpush1.msra.mxu0 %v2225
    %3520 = vmatprep.subr.mxu0 %v2230
    %3521 = vmatpush1.msra.mxu0 %v2229
    %3522 = vmatprep.subr.mxu0 %v2234
    %3523 = vmatpush1.msra.mxu0 %v2233
    %3524 = vmatprep.subr.mxu0 %v2238
    %3525 = vmatpush1.msra.mxu0 %v2237
    %3526 = vmatprep.subr.mxu0 %v2242
    %3527 = vmatpush1.msra.mxu0 %v2241
    %3528 = vmatprep.subr.mxu0 %v2246
    %3529 = vmatpush1.msra.mxu0 %v2245
    %3530 = vmatprep.subr.mxu0 %v2250
    %3531 = vmatpush1.msra.mxu0 %v2249
    %3532 = vmatprep.subr.mxu0 %v2254
    %3533 = vmatpush1.msra.mxu0 %v2253
    %3534 = vmatprep.subr.mxu0 %v2258
    %3535 = vmatpush1.msra.mxu0 %v2257
    %3536 = vmatprep.subr.mxu0 %v2262
    %3537 = vmatpush1.msra.mxu0 %v2261
    %3538 = vmatprep.subr.mxu0 %v2266
    %3539 = vmatpush1.msra.mxu0 %v2265
    %3540 = vmatprep.subr.mxu0 %v2270
    %3541 = vmatpush1.msra.mxu0 %v2269
    %3542 = vmatprep.subr.mxu0 %v2274
    %3543 = vmatpush1.msra.mxu0 %v2273
    %3544 = vmatprep.subr.mxu0 %v2278
    %3545 = vmatpush1.msra.mxu0 %v2277
    %3546 = vmatprep.subr.mxu0 %v2282
    %3547 = vmatpush1.msra.mxu0 %v2281
    %3548 = vmatprep.subr.mxu0 %v2286
    %3549 = vmatpush1.msra.mxu0 %v2285
    %3550 = vmatprep.subr.mxu0 0.0
    %3551 = vmatpush1.msra.mxu0 0.0
    %3552 = vmatprep.subr.mxu0 0.0
    %3553 = vmatpush1.msra.mxu0 0.0
    %3554 = vmatprep.subr.mxu0 0.0
    %3555 = vmatpush1.msra.mxu0 0.0
    %3556 = vmatprep.subr.mxu0 0.0
    %3557 = vmatpush1.msra.mxu0 0.0
    %3558 = vmatprep.subr.mxu0 0.0
    %3559 = vmatpush1.msra.mxu0 0.0
    %3560 = vmatprep.subr.mxu0 0.0
    %3561 = vmatpush1.msra.mxu0 0.0
    %3562 = vmatprep.subr.mxu0 0.0
    %3563 = vmatpush1.msra.mxu0 0.0
    %3564 = vmatprep.subr.mxu0 0.0
    %3565 = vmatpush1.msra.mxu0 0.0
    %3566 = vmatprep.subr.mxu0 0.0
    %3567 = vmatpush1.msra.mxu0 0.0
    %3568 = vmatprep.subr.mxu0 0.0
    %3569 = vmatpush1.msra.mxu0 0.0
    %3570 = vmatprep.subr.mxu0 0.0
    %3571 = vmatpush1.msra.mxu0 0.0
    %3572 = vmatprep.subr.mxu0 0.0
    %3573 = vmatpush1.msra.mxu0 0.0
    %3574 = vmatprep.subr.mxu0 0.0
    %3575 = vmatpush1.msra.mxu0 0.0
    %3576 = vmatprep.subr.mxu0 0.0
    %3577 = vmatpush1.msra.mxu0 0.0
    %3578 = vmatprep.subr.mxu0 0.0
    %3579 = vmatpush1.msra.mxu0 0.0
    %3580 = vmatprep.subr.mxu0 0.0
    %3581 = vmatpush1.msra.mxu0 0.0
    %3582 = vmatprep.mubr.f32.mxu0 0.0
    %3583 = vmatmul.mubr.f32.gmra.mrb[0].mxu0 %v3512
    %v3584 = vpop.f32.mrb[0].mxu0
    %v3585 = vadd.f32 0.0, %v3584
    %v3586 = vpop.f32.mrb[0].mxu0
    %v3587 = vadd.f32 0.0, %v3586
    %3588 = vdwg.mxu0
    %3589 = vmatprep.subr.mxu0 %v2228
    %3590 = vmatpush1.msra.mxu0 %v2227
    %3591 = vmatprep.subr.mxu0 %v2232
    %3592 = vmatpush1.msra.mxu0 %v2231
    %3593 = vmatprep.subr.mxu0 %v2236
    %3594 = vmatpush1.msra.mxu0 %v2235
    %3595 = vmatprep.subr.mxu0 %v2240
    %3596 = vmatpush1.msra.mxu0 %v2239
    %3597 = vmatprep.subr.mxu0 %v2244
    %3598 = vmatpush1.msra.mxu0 %v2243
    %3599 = vmatprep.subr.mxu0 %v2248
    %3600 = vmatpush1.msra.mxu0 %v2247
    %3601 = vmatprep.subr.mxu0 %v2252
    %3602 = vmatpush1.msra.mxu0 %v2251
    %3603 = vmatprep.subr.mxu0 %v2256
    %3604 = vmatpush1.msra.mxu0 %v2255
    %3605 = vmatprep.subr.mxu0 %v2260
    %3606 = vmatpush1.msra.mxu0 %v2259
    %3607 = vmatprep.subr.mxu0 %v2264
    %3608 = vmatpush1.msra.mxu0 %v2263
    %3609 = vmatprep.subr.mxu0 %v2268
    %3610 = vmatpush1.msra.mxu0 %v2267
    %3611 = vmatprep.subr.mxu0 %v2272
    %3612 = vmatpush1.msra.mxu0 %v2271
    %3613 = vmatprep.subr.mxu0 %v2276
    %3614 = vmatpush1.msra.mxu0 %v2275
    %3615 = vmatprep.subr.mxu0 %v2280
    %3616 = vmatpush1.msra.mxu0 %v2279
    %3617 = vmatprep.subr.mxu0 %v2284
    %3618 = vmatpush1.msra.mxu0 %v2283
    %3619 = vmatprep.subr.mxu0 %v2288
    %3620 = vmatpush1.msra.mxu0 %v2287
    %3621 = vmatprep.subr.mxu0 0.0
    %3622 = vmatpush1.msra.mxu0 0.0
    %3623 = vmatprep.subr.mxu0 0.0
    %3624 = vmatpush1.msra.mxu0 0.0
    %3625 = vmatprep.subr.mxu0 0.0
    %3626 = vmatpush1.msra.mxu0 0.0
    %3627 = vmatprep.subr.mxu0 0.0
    %3628 = vmatpush1.msra.mxu0 0.0
    %3629 = vmatprep.subr.mxu0 0.0
    %3630 = vmatpush1.msra.mxu0 0.0
    %3631 = vmatprep.subr.mxu0 0.0
    %3632 = vmatpush1.msra.mxu0 0.0
    %3633 = vmatprep.subr.mxu0 0.0
    %3634 = vmatpush1.msra.mxu0 0.0
    %3635 = vmatprep.subr.mxu0 0.0
    %3636 = vmatpush1.msra.mxu0 0.0
    %3637 = vmatprep.subr.mxu0 0.0
    %3638 = vmatpush1.msra.mxu0 0.0
    %3639 = vmatprep.subr.mxu0 0.0
    %3640 = vmatpush1.msra.mxu0 0.0
    %3641 = vmatprep.subr.mxu0 0.0
    %3642 = vmatpush1.msra.mxu0 0.0
    %3643 = vmatprep.subr.mxu0 0.0
    %3644 = vmatpush1.msra.mxu0 0.0
    %3645 = vmatprep.subr.mxu0 0.0
    %3646 = vmatpush1.msra.mxu0 0.0
    %3647 = vmatprep.subr.mxu0 0.0
    %3648 = vmatpush1.msra.mxu0 0.0
    %3649 = vmatprep.subr.mxu0 0.0
    %3650 = vmatpush1.msra.mxu0 0.0
    %3651 = vmatprep.subr.mxu0 0.0
    %3652 = vmatpush1.msra.mxu0 0.0
    %3653 = vmatprep.mubr.f32.mxu0 0.0
    %3654 = vmatmul.mubr.f32.gmra.mrb[0].mxu0 %v3512
    %v3655 = vpop.f32.mrb[0].mxu0
    %v3656 = vadd.f32 0.0, %v3655
    %v3657 = vpop.f32.mrb[0].mxu0
    %v3658 = vadd.f32 0.0, %v3657
    %3659 = vdwg.mxu0
    %v3660 = vadd.f32 %v3514, %v3585
    %v3661 = vadd.f32 %v3515, %v3587
    %v3662 = vadd.f32 %v3516, %v3656
    %v3663 = vadd.f32 %v3517, %v3658
    %v3664 = vxor.u32 %v3660, 2147483648
    %v3665 = vxor.u32 %v3661, 2147483648
    %v3666 = vxor.u32 %v3662, 2147483648
    %v3667 = vmul.f32 %v3664, 1.442695
    %v3668 = vpow.pop %v3667
    %v3669 = vmul.f32 %v3665, 1.442695
    %v3670 = vpow.pop %v3669
    %v3671 = vmul.f32 %v3666, 1.442695
    %v3672 = vpow.pop %v3671
    %v3673 = vadd.f32 %v3668, 1.0
    %v3674 = vadd.f32 %v3670, 1.0
    %v3675 = vadd.f32 %v3672, 1.0
    %v3676 = vrcp.pop %v3673
    %v3677 = vmul.f32 1.0, %v3676
    %v3678 = vrcp.pop %v3674
    %v3679 = vmul.f32 1.0, %v3678
    %v3680 = vrcp.pop %v3675
    %v3681 = vmul.f32 1.0, %v3680
    %v3682 = vtanh.pop %v3663
    %v3683 = vmul.f32 %v3679, %v3510
    %v3684 = vmul.f32 %v3677, %v3682
    %v3685 = vadd.f32 %v3683, %v3684
    %v3686 = vtanh.pop %v3685
    %v3687 = vmul.f32 %v3681, %v3686
    %3688 = vst [vmem:[#allocation2 + $0x38] sm:$0xff] %v3687
    %v3689 = vld [vmem:[#allocation2] sm:$0xff]
    %v3690 = vld [vmem:[#allocation2 + $0x8] sm:$0xff]
    %v3691 = vld [vmem:[#allocation2 + $0x10] sm:$0xff]
    %v3692 = vld [vmem:[#allocation2 + $0x18] sm:$0xff]
    %v3693 = vld [vmem:[#allocation2 + $0x20] sm:$0xff]
    %v3694 = vld [vmem:[#allocation2 + $0x28] sm:$0xff]
    %v3695 = vld [vmem:[#allocation2 + $0x30] sm:$0xff]
    %v3696 = vld [vmem:[#allocation2 + $0x38] sm:$0xff]
    %v3697 = vld [vmem:[#allocation10] sm:$0xff]
    %v3698 = vld [vmem:[#allocation10 + $0x8] sm:$0xff]
    %v3699 = vld [vmem:[#allocation10 + $0x10] sm:$0xff]
    %v3700 = vld [vmem:[#allocation10 + $0x18] sm:$0xff]
    %v3701 = vld [vmem:[#allocation10 + $0x20] sm:$0xff]
    %v3702 = vld [vmem:[#allocation10 + $0x28] sm:$0xff]
    %v3703 = vld [vmem:[#allocation10 + $0x30] sm:$0xff]
    %v3704 = vld [vmem:[#allocation10 + $0x38] sm:$0xff]
    %v3705 = vld [vmem:[#allocation10 + $0x40] sm:$0xff]
    %v3706 = vld [vmem:[#allocation10 + $0x48] sm:$0xff]
    %v3707 = vld [vmem:[#allocation10 + $0x50] sm:$0xff]
    %v3708 = vld [vmem:[#allocation10 + $0x58] sm:$0xff]
    %v3709 = vld [vmem:[#allocation10 + $0x60] sm:$0xff]
    %v3710 = vld [vmem:[#allocation10 + $0x68] sm:$0xff]
    %v3711 = vld [vmem:[#allocation10 + $0x70] sm:$0xff]
    %v3712 = vld [vmem:[#allocation10 + $0x78] sm:$0xff]
    %v3713 = vld [vmem:[%s8] sm:$0x1]
    %v3715 = vlaneseq
    %v3716 = vshrl.u32 %v3715, 7
    %v3717 = vsub.s32 0, %v3716
    %v3718 = vrot.slane %v3713, %v3717
    %3720 = vmatprep.subr.mxu0 0.0
    %3721 = vmatpush1.msra.mxu0 %v3697
    %3722 = vmatprep.subr.mxu0 0.0
    %3723 = vmatpush1.msra.mxu0 %v3698
    %3724 = vmatprep.subr.mxu0 0.0
    %3725 = vmatpush1.msra.mxu0 %v3699
    %3726 = vmatprep.subr.mxu0 0.0
    %3727 = vmatpush1.msra.mxu0 %v3700
    %3728 = vmatprep.subr.mxu0 0.0
    %3729 = vmatpush1.msra.mxu0 %v3701
    %3730 = vmatprep.subr.mxu0 0.0
    %3731 = vmatpush1.msra.mxu0 %v3702
    %3732 = vmatprep.subr.mxu0 0.0
    %3733 = vmatpush1.msra.mxu0 %v3703
    %3734 = vmatprep.subr.mxu0 0.0
    %3735 = vmatpush1.msra.mxu0 %v3704
    %3736 = vmatprep.subr.mxu0 0.0
    %3737 = vmatpush1.msra.mxu0 %v3705
    %3738 = vmatprep.subr.mxu0 0.0
    %3739 = vmatpush1.msra.mxu0 %v3706
    %3740 = vmatprep.subr.mxu0 0.0
    %3741 = vmatpush1.msra.mxu0 %v3707
    %3742 = vmatprep.subr.mxu0 0.0
    %3743 = vmatpush1.msra.mxu0 %v3708
    %3744 = vmatprep.subr.mxu0 0.0
    %3745 = vmatpush1.msra.mxu0 %v3709
    %3746 = vmatprep.subr.mxu0 0.0
    %3747 = vmatpush1.msra.mxu0 %v3710
    %3748 = vmatprep.subr.mxu0 0.0
    %3749 = vmatpush1.msra.mxu0 %v3711
    %3750 = vmatprep.subr.mxu0 0.0
    %3751 = vmatpush1.msra.mxu0 %v3712
    %3752 = vmatprep.subr.mxu0 0.0
    %3753 = vmatpush1.msra.mxu0 0.0
    %3754 = vmatprep.subr.mxu0 0.0
    %3755 = vmatpush1.msra.mxu0 0.0
    %3756 = vmatprep.subr.mxu0 0.0
    %3757 = vmatpush1.msra.mxu0 0.0
    %3758 = vmatprep.subr.mxu0 0.0
    %3759 = vmatpush1.msra.mxu0 0.0
    %3760 = vmatprep.subr.mxu0 0.0
    %3761 = vmatpush1.msra.mxu0 0.0
    %3762 = vmatprep.subr.mxu0 0.0
    %3763 = vmatpush1.msra.mxu0 0.0
    %3764 = vmatprep.subr.mxu0 0.0
    %3765 = vmatpush1.msra.mxu0 0.0
    %3766 = vmatprep.subr.mxu0 0.0
    %3767 = vmatpush1.msra.mxu0 0.0
    %3768 = vmatprep.subr.mxu0 0.0
    %3769 = vmatpush1.msra.mxu0 0.0
    %3770 = vmatprep.subr.mxu0 0.0
    %3771 = vmatpush1.msra.mxu0 0.0
    %3772 = vmatprep.subr.mxu0 0.0
    %3773 = vmatpush1.msra.mxu0 0.0
    %3774 = vmatprep.subr.mxu0 0.0
    %3775 = vmatpush1.msra.mxu0 0.0
    %3776 = vmatprep.subr.mxu0 0.0
    %3777 = vmatpush1.msra.mxu0 0.0
    %3778 = vmatprep.subr.mxu0 0.0
    %3779 = vmatpush1.msra.mxu0 0.0
    %3780 = vmatprep.subr.mxu0 0.0
    %3781 = vmatpush1.msra.mxu0 0.0
    %3782 = vmatprep.subr.mxu0 0.0
    %3783 = vmatpush1.msra.mxu0 0.0
    %3784 = vmatprep.mubr.f32.mxu0 0.0
    %3785 = vmatmul.mubr.f32.gmra.mrb[0].mxu0 %v3689
    %v3786 = vpop.f32.mrb[0].mxu0
    %v3787 = vadd.f32 %v3718, %v3786
    %v3788 = vpop.f32.mrb[0].mxu0
    %3789 = vmatprep.mubr.f32.mxu0 0.0
    %3790 = vmatmul.mubr.f32.gmra.mrb[0].mxu0 %v3690
    %v3791 = vpop.f32.mrb[0].mxu0
    %v3792 = vadd.f32 %v3718, %v3791
    %v3793 = vpop.f32.mrb[0].mxu0
    %3794 = vmatprep.mubr.f32.mxu0 0.0
    %3795 = vmatmul.mubr.f32.gmra.mrb[0].mxu0 %v3691
    %v3796 = vpop.f32.mrb[0].mxu0
    %v3797 = vadd.f32 %v3718, %v3796
    %v3798 = vpop.f32.mrb[0].mxu0
    %3799 = vmatprep.mubr.f32.mxu0 0.0
    %3800 = vmatmul.mubr.f32.gmra.mrb[0].mxu0 %v3692
    %v3801 = vpop.f32.mrb[0].mxu0
    %v3802 = vadd.f32 %v3718, %v3801
    %v3803 = vpop.f32.mrb[0].mxu0
    %3804 = vmatprep.mubr.f32.mxu0 0.0
    %3805 = vmatmul.mubr.f32.gmra.mrb[0].mxu0 %v3693
    %v3806 = vpop.f32.mrb[0].mxu0
    %v3807 = vadd.f32 %v3718, %v3806
    %v3808 = vpop.f32.mrb[0].mxu0
    %3809 = vmatprep.mubr.f32.mxu0 0.0
    %3810 = vmatmul.mubr.f32.gmra.mrb[0].mxu0 %v3694
    %v3811 = vpop.f32.mrb[0].mxu0
    %v3812 = vadd.f32 %v3718, %v3811
    %v3813 = vpop.f32.mrb[0].mxu0
    %3814 = vmatprep.mubr.f32.mxu0 0.0
    %3815 = vmatmul.mubr.f32.gmra.mrb[0].mxu0 %v3695
    %v3816 = vpop.f32.mrb[0].mxu0
    %v3817 = vadd.f32 %v3718, %v3816
    %v3818 = vpop.f32.mrb[0].mxu0
    %3819 = vmatprep.mubr.f32.mxu0 0.0
    %3820 = vmatmul.mubr.f32.gmra.mrb[0].mxu0 %v3696
    %v3821 = vpop.f32.mrb[0].mxu0
    %v3822 = vadd.f32 %v3718, %v3821
    %v3823 = vpop.f32.mrb[0].mxu0
    %3824 = vdwg.mxu0
    %v3825 = vmax.f32 %v3787, %v3807
    %v3826 = vmax.f32 %v3792, %v3812
    %v3827 = vmax.f32 %v3797, %v3817
    %v3828 = vmax.f32 %v3802, %v3822
    %v3829 = vmax.f32 %v3825, %v3826
    %v3830 = vmax.f32 %v3827, %v3828
    %v3831 = vmax.f32 %v3829, %v3830
    %v3832 = vsub.f32 %v3787, %v3831
    %v3833 = vsub.f32 %v3792, %v3831
    %v3834 = vsub.f32 %v3797, %v3831
    %v3835 = vsub.f32 %v3802, %v3831
    %v3836 = vsub.f32 %v3807, %v3831
    %v3837 = vsub.f32 %v3812, %v3831
    %v3838 = vsub.f32 %v3817, %v3831
    %v3839 = vsub.f32 %v3822, %v3831
    %v3840 = vmul.f32 %v3832, 1.442695
    %v3841 = vpow.pop %v3840
    %v3842 = vmul.f32 %v3833, 1.442695
    %v3843 = vpow.pop %v3842
    %v3844 = vmul.f32 %v3834, 1.442695
    %v3845 = vpow.pop %v3844
    %v3846 = vmul.f32 %v3835, 1.442695
    %v3847 = vpow.pop %v3846
    %v3848 = vmul.f32 %v3836, 1.442695
    %v3849 = vpow.pop %v3848
    %v3850 = vmul.f32 %v3837, 1.442695
    %v3851 = vpow.pop %v3850
    %v3852 = vmul.f32 %v3838, 1.442695
    %v3853 = vpow.pop %v3852
    %v3854 = vmul.f32 %v3839, 1.442695
    %v3855 = vpow.pop %v3854
    %v3856 = vadd.f32 %v3841, %v3843
    %v3857 = vadd.f32 %v3856, %v3845
    %v3858 = vadd.f32 %v3857, %v3847
    %v3859 = vadd.f32 %v3858, %v3849
    %v3860 = vadd.f32 %v3859, %v3851
    %v3861 = vadd.f32 %v3860, %v3853
    %v3862 = vadd.f32 %v3861, %v3855
    %v3863 = vrcp.pop %v3862
    %v3864 = vmul.f32 %v3841, %v3863
    %v3865 = vmul.f32 %v3843, %v3863
    %v3866 = vmul.f32 %v3845, %v3863
    %v3867 = vmul.f32 %v3847, %v3863
    %v3868 = vmul.f32 %v3849, %v3863
    %v3869 = vmul.f32 %v3851, %v3863
    %v3870 = vmul.f32 %v3853, %v3863
    %v3871 = vmul.f32 %v3855, %v3863
    %3872 = vst [vmem:[#allocation12] sm:$0xff] %v3864
    %3873 = vst [vmem:[#allocation12 + $0x8] sm:$0xff] %v3865
    %3874 = vst [vmem:[#allocation12 + $0x10] sm:$0xff] %v3866
    %3875 = vst [vmem:[#allocation12 + $0x18] sm:$0xff] %v3867
    %3876 = vst [vmem:[#allocation12 + $0x20] sm:$0xff] %v3868
    %3877 = vst [vmem:[#allocation12 + $0x28] sm:$0xff] %v3869
    %3878 = vst [vmem:[#allocation12 + $0x30] sm:$0xff] %v3870
    %3879 = vst [vmem:[#allocation12 + $0x38] sm:$0xff] %v3871
    // Predicated region
    $region54: #{tpu_custom_call.1} parent=1 // pred_check
      _
    $region55: #{tpu_custom_call.1} parent=1 // pred_check_branch
      %3881 = sbr.rel (0) target = $region57
    $region56: #{tpu_custom_call.1} parent=1 // pred_region
      %s3883 = ssub.s32 1024, 1024
      %3884 = vsyncadd [#allocation6], %s3883
      %s3885 = sshll.u32 [#allocation12], 4
      %s3886 = int_to_ptr.vmem [resolvable:$true] %s3885
      %3891 = dma.vmem_to_hbm [thread:$0]  %s3886, 1024, %s9, [#allocation6], 128, 128, 8
    $region57: #{tpu_custom_call.1} parent=1 // pred_fallthru
      _
    // Predicated region
    $region58: #{tpu_custom_call.1} parent=1 // pred_check
      _
    $region59: #{tpu_custom_call.1} parent=1 // pred_check_branch
      %3893 = sbr.rel (0) target = $region61
    $region60: #{tpu_custom_call.1} parent=1 // pred_region
      %3894 = dma.done [#allocation6], 1024
    $region61: #{tpu_custom_call.1} parent=1 // pred_fallthru
      _
    %3895 = vsyncpa [#allocation5], 1
    %3896 = vsyncpa [#allocation8], 1
    %3897 = vsyncpa [#allocation11], 1
    %3898 = vsyncpa [#allocation6], 1

</llo_original>
